<compile_context>
chip_gen: v5e
topology: v5e:2x2
jax: 0.10.0
libtpu: 0.0.40
codegen_flags: <defaults>
</compile_context>

<pallas_src>
import functools
import math

import jax
import jax.numpy as jnp
from jax import lax
from jax.experimental import pallas as pl
from jax.experimental.pallas import tpu as pltpu


# ----------------------------- kernel helpers ------------------------------

def _layer_norm_f32(x, eps=1e-6):
    # LayerNorm32: f32 math, no elementwise affine, biased variance, eps=1e-6.
    mean = jnp.mean(x, axis=-1, keepdims=True)
    var = jnp.mean(jnp.square(x - mean), axis=-1, keepdims=True)
    return (x - mean) * lax.rsqrt(var + eps)


def _gelu_tanh(x):
    # nn.GELU(approximate="tanh")
    c = math.sqrt(2.0 / math.pi)
    return 0.5 * x * (1.0 + jnp.tanh(c * (x + 0.044715 * x * x * x)))


def _vmem_limit_bytes():
    # Leave headroom for Mosaic internal scratch on v7x (64 MiB physical);
    # a 64 MiB cap is fine on v5e/v6e (128 MiB physical).
    try:
        cap = pltpu.get_tpu_info().vmem_capacity_bytes
    except Exception:
        cap = 128 * 1024 * 1024
    return int(min(64 * 1024 * 1024, (cap * 3) // 4))


# ---------------- kernel 1: norm1 + QKV projection + head split -------------

def _qkv_kernel(x_ref, wqkv_ref, bqkv_ref, q_ref, k_ref, v_ref, *,
                num_heads, head_dim):
    C = x_ref.shape[-1]
    x = x_ref[0].astype(jnp.float32)                        # (TL, C)
    h = _layer_norm_f32(x).astype(jnp.bfloat16)             # bf16 MXU operand
    qkv = jnp.dot(h, wqkv_ref[...], preferred_element_type=jnp.float32)
    qkv = (qkv + bqkv_ref[...]).astype(jnp.bfloat16)        # (TL, 3C)
    # Head split while the tile is still in VMEM (static lane slices); the
    # outputs are already (B, H, L, hd) so kernel 2 needs no relayout.
    for hh in range(num_heads):
        lo = hh * head_dim
        q_ref[0, hh] = qkv[:, lo:lo + head_dim]
        k_ref[0, hh] = qkv[:, C + lo:C + lo + head_dim]
        v_ref[0, hh] = qkv[:, 2 * C + lo:2 * C + lo + head_dim]


# ------------ kernel 2: flash attention + out-proj + MLP (fused) ------------

def _attn_mlp_kernel(x_ref, q_ref, k_ref, v_ref,
                     wo_ref, bo_ref, w1_ref, b1_ref, w2_ref, b2_ref,
                     out_ref, *scratch, num_kv_steps):
    num_heads = q_ref.shape[1]

    def epilogue(o):
        # o: (H, tq, hd) f32, already softmax-normalized.
        o_bf = o.astype(jnp.bfloat16)
        # Out projection: accumulate per head into ONE (tq, C) f32 tile
        # (no (H, tq, C) intermediate, no head-sum epilogue).
        o_proj = bo_ref[...] + jnp.dot(o_bf[0], wo_ref[0],
                                       preferred_element_type=jnp.float32)
        for hh in range(1, num_heads):
            o_proj = o_proj + jnp.dot(o_bf[hh], wo_ref[hh],
                                      preferred_element_type=jnp.float32)
        x_new = x_ref[0].astype(jnp.float32) + o_proj                # resid 1
        h = _layer_norm_f32(x_new).astype(jnp.bfloat16)              # norm2
        h = jnp.dot(h, w1_ref[...], preferred_element_type=jnp.float32)
        h = _gelu_tanh(h + b1_ref[...]).astype(jnp.bfloat16)
        h = jnp.dot(h, w2_ref[...], preferred_element_type=jnp.float32)
        h = h + b2_ref[...]
        out_ref[0] = (x_new + h).astype(out_ref.dtype)               # resid 2

    q = q_ref[0]                                             # (H, TQ, hd) bf16
    k = k_ref[0]                                             # (H, TKV, hd)
    v = v_ref[0]                                             # (H, TKV, hd)

    # 1/sqrt(hd) is folded into the Q projection weights — no scale here.
    s = jnp.einsum("hqd,hkd->hqk", q, k,
                   preferred_element_type=jnp.float32)       # (H, TQ, TKV)

    if num_kv_steps == 1:
        # Single KV tile: plain softmax, no scratch / rescale bookkeeping.
        m = jnp.max(s, axis=-1, keepdims=True)
        p = jnp.exp(s - m)
        l = jnp.sum(p, axis=-1, keepdims=True)
        o = jnp.einsum("hqk,hkd->hqd", p.astype(jnp.bfloat16), v,
                       preferred_element_type=jnp.float32)
        epilogue(o * pl.reciprocal(l, approx=True))
    else:
        m_scr, l_scr, acc_scr = scratch
        ki = pl.program_id(2)

        @pl.when(ki == 0)
        def _():
            m_scr[...] = jnp.full_like(m_scr, -jnp.inf)
            l_scr[...] = jnp.zeros_like(l_scr)
            acc_scr[...] = jnp.zeros_like(acc_scr)

        m_prev = m_scr[...]                                  # (H, TQ, 1)
        m_new = jnp.maximum(m_prev, jnp.max(s, axis=-1, keepdims=True))
        alpha = jnp.exp(m_prev - m_new)
        p = jnp.exp(s - m_new)
        l_scr[...] = alpha * l_scr[...] + jnp.sum(p, axis=-1, keepdims=True)
        acc_scr[...] = alpha * acc_scr[...] + jnp.einsum(
            "hqk,hkd->hqd", p.astype(jnp.bfloat16), v,
            preferred_element_type=jnp.float32)
        m_scr[...] = m_new

        @pl.when(ki == num_kv_steps - 1)
        def _():
            epilogue(acc_scr[...] * pl.reciprocal(l_scr[...], approx=True))


# -------------------------------- wrapper -----------------------------------

_WEIGHT_SINGLE_BUFFERING = [True]   # disabled on first lowering failure


def _call_with_weight_buffering(build):
    """Try single-buffered grid-invariant weights; fall back if unsupported."""
    if _WEIGHT_SINGLE_BUFFERING[0]:
        try:
            return build(True)
        except Exception:
            _WEIGHT_SINGLE_BUFFERING[0] = False
    return build(False)


def modulated_posed_transformer_block(x, params, *, num_heads,
                                      tl=128, tq=128, tkv=None,
                                      kv_vmem_budget_bytes=8 * 1024 * 1024):
    """x: (B, L, C) float32. params: dict of f32 weights (see init_params)."""
    B, L, C = x.shape
    Hm = int(params["w1"].shape[1])                  # MLP hidden
    assert C % num_heads == 0
    hd = C // num_heads
    assert C % 128 == 0 and Hm % 128 == 0
    assert hd % 8 == 0                               # hd >= 128 recommended
    tl = min(tl, L)
    tq = min(tq, L)
    if tkv is None:
        # Single KV step when bf16 K+V of one batch (all heads) fit a budget.
        tkv = L if 4 * L * C <= kv_vmem_budget_bytes else min(128, L)
    assert L % tl == 0 and L % tq == 0 and L % tkv == 0
    assert tl % 8 == 0 and tq % 8 == 0 and tkv % 8 == 0
    bf16 = jnp.bfloat16

    # Fold the 1/sqrt(hd) attention scale into the Q columns of the QKV
    # projection (one-time prep op; removes the per-KV-step VPU score scale).
    scale = 1.0 / math.sqrt(hd)
    col_scale = jnp.concatenate(
        [jnp.full((C,), scale, jnp.float32), jnp.ones((2 * C,), jnp.float32)])
    w_qkv = (params["w_qkv"] * col_scale[None, :]).astype(bf16)
    b_qkv = params["b_qkv"] * col_scale[None, :]
    w_o = params["w_o"].astype(bf16).reshape(num_heads, hd, C)   # (H, hd, C)
    b_o = params["b_o"]
    w1 = params["w1"].astype(bf16)
    b1 = params["b1"]
    w2 = params["w2"].astype(bf16)
    b2 = params["b2"]

    vmem_limit = _vmem_limit_bytes()
    n_l, n_q, n_kv = L // tl, L // tq, L // tkv

    # ------------------- pass 1: norm1 + QKV + head split -------------------
    cost1 = pl.CostEstimate(
        flops=int(2 * B * L * C * 3 * C),
        transcendentals=int(B * L),
        bytes_accessed=int(B * L * C * 4 + C * 3 * C * 2 + 3 * C * 4
                           + 3 * B * L * C * 2))
    qkv_shape = jax.ShapeDtypeStruct((B, num_heads, L, hd), bf16)
    head_spec_l = pl.BlockSpec((1, num_heads, tl, hd),
                               lambda b, i: (b, 0, i, 0))

    def qkv_call(single_buffer_weights):
        wkw = ({"pipeline_mode": pl.Buffered(1)}
               if single_buffer_weights else {})
        return pl.pallas_call(
            functools.partial(_qkv_kernel, num_heads=num_heads, head_dim=hd),
            out_shape=(qkv_shape, qkv_shape, qkv_shape),
            grid_spec=pltpu.PrefetchScalarGridSpec(
                num_scalar_prefetch=0,
                grid=(B, n_l),
                in_specs=[
                    pl.BlockSpec((1, tl, C), lambda b, i: (b, i, 0)),        # x
                    pl.BlockSpec((C, 3 * C), lambda b, i: (0, 0), **wkw),    # w
                    pl.BlockSpec((1, 3 * C), lambda b, i: (0, 0), **wkw),    # b
                ],
                out_specs=(head_spec_l, head_spec_l, head_spec_l),
            ),
            compiler_params=pltpu.CompilerParams(
                dimension_semantics=("parallel", "parallel"),
                vmem_limit_bytes=vmem_limit),
            cost_estimate=cost1,
        )(x, w_qkv, b_qkv)

    q, k, v = _call_with_weight_buffering(qkv_call)

    # -------- pass 2: flash attention + out proj + residual + MLP -----------
    cost2 = pl.CostEstimate(
        flops=int(B * (4 * L * L * C + 2 * L * C * C + 4 * L * C * Hm)),
        transcendentals=int(B * (num_heads * L * L + L * Hm + 2 * L)),
        bytes_accessed=int(B * L * C * 4                  # x
                           + B * L * C * 2                # q
                           + 2 * n_q * B * L * C * 2      # k, v re-streams
                           + (C * C + 2 * C * Hm) * 2     # weights (bf16)
                           + (2 * C + Hm) * 4             # biases
                           + B * L * C * 4))              # out

    scratch = [] if n_kv == 1 else [
        pltpu.VMEM((num_heads, tq, 1), jnp.float32),      # running max m
        pltpu.VMEM((num_heads, tq, 1), jnp.float32),      # running sum l
        pltpu.VMEM((num_heads, tq, hd), jnp.float32),     # acc
    ]

    def attn_call(single_buffer_weights):
        wkw = ({"pipeline_mode": pl.Buffered(1)}
               if single_buffer_weights else {})
        return pl.pallas_call(
            functools.partial(_attn_mlp_kernel, num_kv_steps=n_kv),
            out_shape=jax.ShapeDtypeStruct((B, L, C), x.dtype),
            grid_spec=pltpu.PrefetchScalarGridSpec(
                num_scalar_prefetch=0,
                grid=(B, n_q, n_kv),
                in_specs=[
                    pl.BlockSpec((1, tq, C), lambda b, qi, ki: (b, qi, 0)),   # x
                    pl.BlockSpec((1, num_heads, tq, hd),
                                 lambda b, qi, ki: (b, 0, qi, 0)),            # q
                    pl.BlockSpec((1, num_heads, tkv, hd),
                                 lambda b, qi, ki: (b, 0, ki, 0)),            # k
                    pl.BlockSpec((1, num_heads, tkv, hd),
                                 lambda b, qi, ki: (b, 0, ki, 0)),            # v
                    pl.BlockSpec((num_heads, hd, C),
                                 lambda b, qi, ki: (0, 0, 0), **wkw),         # w_o
                    pl.BlockSpec((1, C), lambda b, qi, ki: (0, 0), **wkw),    # b_o
                    pl.BlockSpec((C, Hm), lambda b, qi, ki: (0, 0), **wkw),   # w1
                    pl.BlockSpec((1, Hm), lambda b, qi, ki: (0, 0), **wkw),   # b1
                    pl.BlockSpec((Hm, C), lambda b, qi, ki: (0, 0), **wkw),   # w2
                    pl.BlockSpec((1, C), lambda b, qi, ki: (0, 0), **wkw),    # b2
                ],
                out_specs=pl.BlockSpec((1, tq, C),
                                       lambda b, qi, ki: (b, qi, 0)),
                scratch_shapes=scratch,
            ),
            compiler_params=pltpu.CompilerParams(
                dimension_semantics=("parallel", "parallel", "arbitrary"),
                vmem_limit_bytes=vmem_limit),
            cost_estimate=cost2,
        )(x, q, k, v, w_o, b_o, w1, b1, w2, b2)

    return _call_with_weight_buffering(attn_call)


# ------------------------- pure-JAX reference -------------------------------
# Mirrors the kernel's bf16-operand / f32-accumulate precision policy.

def reference_block(x, params, *, num_heads):
    B, L, C = x.shape
    hd = C // num_heads
    scale = 1.0 / math.sqrt(hd)
    bf16 = jnp.bfloat16

    w_qkv = params["w_qkv"].astype(bf16)
    w_o = params["w_o"].astype(bf16)
    w1 = params["w1"].astype(bf16)
    w2 = params["w2"].astype(bf16)

    h = _layer_norm_f32(x.astype(jnp.float32)).astype(bf16)
    qkv = jnp.einsum("blc,cd->bld", h, w_qkv,
                     preferred_element_type=jnp.float32) + params["b_qkv"][0]
    qkv = qkv.astype(bf16)
    q, k, v = jnp.split(qkv, 3, axis=-1)
    q = q.reshape(B, L, num_heads, hd).transpose(0, 2, 1, 3)
    k = k.reshape(B, L, num_heads, hd).transpose(0, 2, 1, 3)
    v = v.reshape(B, L, num_heads, hd).transpose(0, 2, 1, 3)

    s = jnp.einsum("bhqd,bhkd->bhqk", q, k,
                   preferred_element_type=jnp.float32) * scale
    p = jax.nn.softmax(s, axis=-1)
    o = jnp.einsum("bhqk,bhkd->bhqd", p.astype(bf16), v,
                   preferred_element_type=jnp.float32)
    o = o.transpose(0, 2, 1, 3).reshape(B, L, C)
    o = jnp.einsum("blc,cd->bld", o.astype(bf16), w_o,
                   preferred_element_type=jnp.float32) + params["b_o"][0]
    x = x + o

    h = _layer_norm_f32(x).astype(bf16)
    h = jnp.einsum("blc,ch->blh", h, w1,
                   preferred_element_type=jnp.float32) + params["b1"][0]
    h = _gelu_tanh(h).astype(bf16)
    h = jnp.einsum("blh,hc->blc", h, w2,
                   preferred_element_type=jnp.float32) + params["b2"][0]
    return x + h


# ------------------------- deterministic init -------------------------------

def init_params(key, channels, mlp_ratio=4.0):
    hidden = int(channels * mlp_ratio)
    ks = jax.random.split(key, 8)
    std = 0.02
    return {
        "w_qkv": std * jax.random.normal(ks[0], (channels, 3 * channels), jnp.float32),
        "b_qkv": std * jax.random.normal(ks[1], (1, 3 * channels), jnp.float32),
        "w_o":   std * jax.random.normal(ks[2], (channels, channels), jnp.float32),
        "b_o":   std * jax.random.normal(ks[3], (1, channels), jnp.float32),
        "w1":    std * jax.random.normal(ks[4], (channels, hidden), jnp.float32),
        "b1":    std * jax.random.normal(ks[5], (1, hidden), jnp.float32),
        "w2":    std * jax.random.normal(ks[6], (hidden, channels), jnp.float32),
        "b2":    std * jax.random.normal(ks[7], (1, channels), jnp.float32),
    }


if __name__ == "__main__":
    B, L, C = 2, 256, 256       # lane-dense: C % 128 == 0, head_dim = 128
    NUM_HEADS = 2
    MLP_RATIO = 4.0             # mlp hidden = 1024

    root = jax.random.PRNGKey(0)
    kx, kp = jax.random.split(root)
    x = jax.random.normal(kx, (B, L, C), jnp.float32)
    params = init_params(kp, C, MLP_RATIO)

    ref = reference_block(x, params, num_heads=NUM_HEADS)

    # Path 1: tkv auto-promotes to L -> single KV step (no online softmax).
    out_single = modulated_posed_transformer_block(x, params, num_heads=NUM_HEADS)
    out_single = jax.block_until_ready(out_single)

    # Path 2: forced KV tiling -> online-softmax accumulator path.
    out_tiled = modulated_posed_transformer_block(
        x, params, num_heads=NUM_HEADS, tq=128, tkv=128)
    out_tiled = jax.block_until_ready(out_tiled)

    for out in (out_single, out_tiled):
        assert out.shape == (B, L, C)
        assert bool(jnp.isfinite(out).all()), "non-finite output"
        assert jnp.allclose(out, ref, atol=2e-2, rtol=2e-2), "mismatch vs JAX reference"

    print("KERNEL_OK")
</pallas_src>

<mosaic_0001>
module attributes {stable_mosaic.version = 11 : i64} {
  func.func @_qkv_kernel(%arg0: i32, %arg1: i32, %arg2: memref<1x128x256xf32, #tpu.memory_space<vmem>>, %arg3: memref<256x768xbf16, #tpu.memory_space<vmem>>, %arg4: memref<1x768xf32, #tpu.memory_space<vmem>>, %arg5: memref<1x2x128x128xbf16, #tpu.memory_space<vmem>>, %arg6: memref<1x2x128x128xbf16, #tpu.memory_space<vmem>>, %arg7: memref<1x2x128x128xbf16, #tpu.memory_space<vmem>>) attributes {dimension_semantics = [#tpu.dimension_semantics<parallel>, #tpu.dimension_semantics<parallel>], iteration_bounds = array<i64: 2, 2>, scalar_prefetch = 0 : i64, scratch_operands = 0 : i64, tpu.core_type = #tpu.core_type<tc>, window_params = [{transform_indices = @transform_0, window_bounds = array<i64: 1, 128, 256>}, {pipeline_mode = #tpu.pipeline_mode<synchronous>, transform_indices = @transform_1, window_bounds = array<i64: 256, 768>}, {pipeline_mode = #tpu.pipeline_mode<synchronous>, transform_indices = @transform_2, window_bounds = array<i64: 1, 768>}, {transform_indices = @transform_3, window_bounds = array<i64: 1, 2, 128, 128>}, {transform_indices = @transform_4, window_bounds = array<i64: 1, 2, 128, 128>}, {transform_indices = @transform_5, window_bounds = array<i64: 1, 2, 128, 128>}]} {
    %c0 = arith.constant 0 : index
    %c0_0 = arith.constant 0 : index
    %c0_1 = arith.constant 0 : index
    %0 = vector.load %arg2[%c0, %c0_0, %c0_1] : memref<1x128x256xf32, #tpu.memory_space<vmem>>, vector<1x128x256xf32>
    %1 = vector.shape_cast %0 : vector<1x128x256xf32> to vector<128x256xf32>
    %cst = arith.constant dense<0.000000e+00> : vector<128xf32>
    %2 = vector.multi_reduction <add>, %1, %cst [1] : vector<128x256xf32> to vector<128xf32>
    %3 = vector.shape_cast %2 : vector<128xf32> to vector<128x1xf32>
    %cst_2 = arith.constant 2.560000e+02 : f32
    %4 = vector.broadcast %cst_2 : f32 to vector<128x1xf32>
    %5 = arith.divf %3, %4 : vector<128x1xf32>
    %6 = vector.broadcast %5 : vector<128x1xf32> to vector<128x256xf32>
    %7 = arith.subf %1, %6 : vector<128x256xf32>
    %8 = arith.mulf %7, %7 : vector<128x256xf32>
    %cst_3 = arith.constant dense<0.000000e+00> : vector<128xf32>
    %9 = vector.multi_reduction <add>, %8, %cst_3 [1] : vector<128x256xf32> to vector<128xf32>
    %10 = vector.shape_cast %9 : vector<128xf32> to vector<128x1xf32>
    %cst_4 = arith.constant 2.560000e+02 : f32
    %11 = vector.broadcast %cst_4 : f32 to vector<128x1xf32>
    %12 = arith.divf %10, %11 : vector<128x1xf32>
    %13 = vector.broadcast %5 : vector<128x1xf32> to vector<128x256xf32>
    %14 = arith.subf %1, %13 : vector<128x256xf32>
    %cst_5 = arith.constant 9.99999997E-7 : f32
    %15 = vector.broadcast %cst_5 : f32 to vector<128x1xf32>
    %16 = arith.addf %12, %15 : vector<128x1xf32>
    %17 = math.rsqrt %16 : vector<128x1xf32>
    %18 = vector.broadcast %17 : vector<128x1xf32> to vector<128x256xf32>
    %19 = arith.mulf %14, %18 : vector<128x256xf32>
    %20 = arith.truncf %19 : vector<128x256xf32> to vector<128x256xbf16>
    %c0_6 = arith.constant 0 : index
    %c0_7 = arith.constant 0 : index
    %21 = vector.load %arg3[%c0_6, %c0_7] : memref<256x768xbf16, #tpu.memory_space<vmem>>, vector<256x768xbf16>
    %cst_8 = arith.constant dense<0.000000e+00> : vector<128x768xf32>
    %22 = tpu.matmul %20, %21, %cst_8 {dimension_numbers = #tpu.dot_dimension_numbers<[1], [0], [0], [1], [0, 0, 1, 1], [], []>} : vector<128x256xbf16>, vector<256x768xbf16>, vector<128x768xf32> -> vector<128x768xf32>
    %c0_9 = arith.constant 0 : index
    %c0_10 = arith.constant 0 : index
    %23 = vector.load %arg4[%c0_9, %c0_10] : memref<1x768xf32, #tpu.memory_space<vmem>>, vector<1x768xf32>
    %24 = vector.broadcast %23 : vector<1x768xf32> to vector<128x768xf32>
    %25 = arith.addf %22, %24 : vector<128x768xf32>
    %26 = arith.truncf %25 : vector<128x768xf32> to vector<128x768xbf16>
    %27 = vector.extract_strided_slice %26 {offsets = [0, 0], sizes = [128, 128], strides = [1, 1]} : vector<128x768xbf16> to vector<128x128xbf16>
    %c0_11 = arith.constant 0 : index
    %c0_12 = arith.constant 0 : index
    %c0_13 = arith.constant 0 : index
    %c0_14 = arith.constant 0 : index
    %28 = vector.load %arg5[%c0_11, %c0_12, %c0_13, %c0_14] : memref<1x2x128x128xbf16, #tpu.memory_space<vmem>>, vector<1x1x128x128xbf16>
    %29 = vector.shape_cast %28 : vector<1x1x128x128xbf16> to vector<128x128xbf16>
    %30 = vector.shape_cast %27 : vector<128x128xbf16> to vector<1x1x128x128xbf16>
    tpu.vector_store %arg5[%c0_11, %c0_12, %c0_13, %c0_14], %30 {strides = array<i32>} : memref<1x2x128x128xbf16, #tpu.memory_space<vmem>>, vector<1x1x128x128xbf16>,
    %31 = vector.extract_strided_slice %26 {offsets = [0, 256], sizes = [128, 128], strides = [1, 1]} : vector<128x768xbf16> to vector<128x128xbf16>
    %c0_15 = arith.constant 0 : index
    %c0_16 = arith.constant 0 : index
    %c0_17 = arith.constant 0 : index
    %c0_18 = arith.constant 0 : index
    %32 = vector.load %arg6[%c0_15, %c0_16, %c0_17, %c0_18] : memref<1x2x128x128xbf16, #tpu.memory_space<vmem>>, vector<1x1x128x128xbf16>
    %33 = vector.shape_cast %32 : vector<1x1x128x128xbf16> to vector<128x128xbf16>
    %34 = vector.shape_cast %31 : vector<128x128xbf16> to vector<1x1x128x128xbf16>
    tpu.vector_store %arg6[%c0_15, %c0_16, %c0_17, %c0_18], %34 {strides = array<i32>} : memref<1x2x128x128xbf16, #tpu.memory_space<vmem>>, vector<1x1x128x128xbf16>,
    %35 = vector.extract_strided_slice %26 {offsets = [0, 512], sizes = [128, 128], strides = [1, 1]} : vector<128x768xbf16> to vector<128x128xbf16>
    %c0_19 = arith.constant 0 : index
    %c0_20 = arith.constant 0 : index
    %c0_21 = arith.constant 0 : index
    %c0_22 = arith.constant 0 : index
    %36 = vector.load %arg7[%c0_19, %c0_20, %c0_21, %c0_22] : memref<1x2x128x128xbf16, #tpu.memory_space<vmem>>, vector<1x1x128x128xbf16>
    %37 = vector.shape_cast %36 : vector<1x1x128x128xbf16> to vector<128x128xbf16>
    %38 = vector.shape_cast %35 : vector<128x128xbf16> to vector<1x1x128x128xbf16>
    tpu.vector_store %arg7[%c0_19, %c0_20, %c0_21, %c0_22], %38 {strides = array<i32>} : memref<1x2x128x128xbf16, #tpu.memory_space<vmem>>, vector<1x1x128x128xbf16>,
    %39 = vector.extract_strided_slice %26 {offsets = [0, 128], sizes = [128, 128], strides = [1, 1]} : vector<128x768xbf16> to vector<128x128xbf16>
    %c0_23 = arith.constant 0 : index
    %c1 = arith.constant 1 : index
    %c0_24 = arith.constant 0 : index
    %c0_25 = arith.constant 0 : index
    %40 = vector.load %arg5[%c0_23, %c1, %c0_24, %c0_25] : memref<1x2x128x128xbf16, #tpu.memory_space<vmem>>, vector<1x1x128x128xbf16>
    %41 = vector.shape_cast %40 : vector<1x1x128x128xbf16> to vector<128x128xbf16>
    %42 = vector.shape_cast %39 : vector<128x128xbf16> to vector<1x1x128x128xbf16>
    tpu.vector_store %arg5[%c0_23, %c1, %c0_24, %c0_25], %42 {strides = array<i32>} : memref<1x2x128x128xbf16, #tpu.memory_space<vmem>>, vector<1x1x128x128xbf16>,
    %43 = vector.extract_strided_slice %26 {offsets = [0, 384], sizes = [128, 128], strides = [1, 1]} : vector<128x768xbf16> to vector<128x128xbf16>
    %c0_26 = arith.constant 0 : index
    %c1_27 = arith.constant 1 : index
    %c0_28 = arith.constant 0 : index
    %c0_29 = arith.constant 0 : index
    %44 = vector.load %arg6[%c0_26, %c1_27, %c0_28, %c0_29] : memref<1x2x128x128xbf16, #tpu.memory_space<vmem>>, vector<1x1x128x128xbf16>
    %45 = vector.shape_cast %44 : vector<1x1x128x128xbf16> to vector<128x128xbf16>
    %46 = vector.shape_cast %43 : vector<128x128xbf16> to vector<1x1x128x128xbf16>
    tpu.vector_store %arg6[%c0_26, %c1_27, %c0_28, %c0_29], %46 {strides = array<i32>} : memref<1x2x128x128xbf16, #tpu.memory_space<vmem>>, vector<1x1x128x128xbf16>,
    %47 = vector.extract_strided_slice %26 {offsets = [0, 640], sizes = [128, 128], strides = [1, 1]} : vector<128x768xbf16> to vector<128x128xbf16>
    %c0_30 = arith.constant 0 : index
    %c1_31 = arith.constant 1 : index
    %c0_32 = arith.constant 0 : index
    %c0_33 = arith.constant 0 : index
    %48 = vector.load %arg7[%c0_30, %c1_31, %c0_32, %c0_33] : memref<1x2x128x128xbf16, #tpu.memory_space<vmem>>, vector<1x1x128x128xbf16>
    %49 = vector.shape_cast %48 : vector<1x1x128x128xbf16> to vector<128x128xbf16>
    %50 = vector.shape_cast %47 : vector<128x128xbf16> to vector<1x1x128x128xbf16>
    tpu.vector_store %arg7[%c0_30, %c1_31, %c0_32, %c0_33], %50 {strides = array<i32>} : memref<1x2x128x128xbf16, #tpu.memory_space<vmem>>, vector<1x1x128x128xbf16>,
    return
  }
  func.func @transform_0(%arg0: i32, %arg1: i32) -> (i32, i32, i32) {
    %c0_i32 = arith.constant 0 : i32
    %c0_i32_0 = arith.constant 0 : i32
    return %arg0, %arg1, %c0_i32 : i32, i32, i32
  }
  func.func @transform_1(%arg0: i32, %arg1: i32) -> (i32, i32) {
    %c0_i32 = arith.constant 0 : i32
    %c0_i32_0 = arith.constant 0 : i32
    %c0_i32_1 = arith.constant 0 : i32
    return %c0_i32, %c0_i32_0 : i32, i32
  }
  func.func @transform_2(%arg0: i32, %arg1: i32) -> (i32, i32) {
    %c0_i32 = arith.constant 0 : i32
    %c0_i32_0 = arith.constant 0 : i32
    %c0_i32_1 = arith.constant 0 : i32
    return %c0_i32, %c0_i32_0 : i32, i32
  }
  func.func @transform_3(%arg0: i32, %arg1: i32) -> (i32, i32, i32, i32) {
    %c0_i32 = arith.constant 0 : i32
    %c0_i32_0 = arith.constant 0 : i32
    %c0_i32_1 = arith.constant 0 : i32
    return %arg0, %c0_i32, %arg1, %c0_i32_0 : i32, i32, i32, i32
  }
  func.func @transform_4(%arg0: i32, %arg1: i32) -> (i32, i32, i32, i32) {
    %c0_i32 = arith.constant 0 : i32
    %c0_i32_0 = arith.constant 0 : i32
    %c0_i32_1 = arith.constant 0 : i32
    return %arg0, %c0_i32, %arg1, %c0_i32_0 : i32, i32, i32, i32
  }
  func.func @transform_5(%arg0: i32, %arg1: i32) -> (i32, i32, i32, i32) {
    %c0_i32 = arith.constant 0 : i32
    %c0_i32_0 = arith.constant 0 : i32
    %c0_i32_1 = arith.constant 0 : i32
    return %arg0, %c0_i32, %arg1, %c0_i32_0 : i32, i32, i32, i32
  }
}

module attributes {stable_mosaic.version = 11 : i64} {
  func.func @_qkv_kernel(%arg0: i32, %arg1: i32, %arg2: memref<1x128x256xf32, #tpu.memory_space<vmem>>, %arg3: memref<256x768xbf16, #tpu.memory_space<vmem>>, %arg4: memref<1x768xf32, #tpu.memory_space<vmem>>, %arg5: memref<1x2x128x128xbf16, #tpu.memory_space<vmem>>, %arg6: memref<1x2x128x128xbf16, #tpu.memory_space<vmem>>, %arg7: memref<1x2x128x128xbf16, #tpu.memory_space<vmem>>) attributes {dimension_semantics = [#tpu.dimension_semantics<parallel>, #tpu.dimension_semantics<parallel>], iteration_bounds = array<i64: 2, 2>, scalar_prefetch = 0 : i64, scratch_operands = 0 : i64, tpu.core_type = #tpu.core_type<tc>, window_params = [{transform_indices = @transform_0, window_bounds = array<i64: 1, 128, 256>}, {pipeline_mode = #tpu.pipeline_mode<synchronous>, transform_indices = @transform_1, window_bounds = array<i64: 256, 768>}, {pipeline_mode = #tpu.pipeline_mode<synchronous>, transform_indices = @transform_2, window_bounds = array<i64: 1, 768>}, {transform_indices = @transform_3, window_bounds = array<i64: 1, 2, 128, 128>}, {transform_indices = @transform_4, window_bounds = array<i64: 1, 2, 128, 128>}, {transform_indices = @transform_5, window_bounds = array<i64: 1, 2, 128, 128>}]} {
    %c0 = arith.constant 0 : index
    %c0_0 = arith.constant 0 : index
    %c0_1 = arith.constant 0 : index
    %0 = vector.load %arg2[%c0, %c0_0, %c0_1] : memref<1x128x256xf32, #tpu.memory_space<vmem>>, vector<1x128x256xf32>
    %1 = vector.shape_cast %0 : vector<1x128x256xf32> to vector<128x256xf32>
    %cst = arith.constant dense<0.000000e+00> : vector<128xf32>
    %2 = vector.multi_reduction <add>, %1, %cst [1] : vector<128x256xf32> to vector<128xf32>
    %3 = vector.shape_cast %2 : vector<128xf32> to vector<128x1xf32>
    %cst_2 = arith.constant 2.560000e+02 : f32
    %4 = vector.broadcast %cst_2 : f32 to vector<128x1xf32>
    %5 = arith.divf %3, %4 : vector<128x1xf32>
    %6 = vector.broadcast %5 : vector<128x1xf32> to vector<128x256xf32>
    %7 = arith.subf %1, %6 : vector<128x256xf32>
    %8 = arith.mulf %7, %7 : vector<128x256xf32>
    %cst_3 = arith.constant dense<0.000000e+00> : vector<128xf32>
    %9 = vector.multi_reduction <add>, %8, %cst_3 [1] : vector<128x256xf32> to vector<128xf32>
    %10 = vector.shape_cast %9 : vector<128xf32> to vector<128x1xf32>
    %cst_4 = arith.constant 2.560000e+02 : f32
    %11 = vector.broadcast %cst_4 : f32 to vector<128x1xf32>
    %12 = arith.divf %10, %11 : vector<128x1xf32>
    %13 = vector.broadcast %5 : vector<128x1xf32> to vector<128x256xf32>
    %14 = arith.subf %1, %13 : vector<128x256xf32>
    %cst_5 = arith.constant 9.99999997E-7 : f32
    %15 = vector.broadcast %cst_5 : f32 to vector<128x1xf32>
    %16 = arith.addf %12, %15 : vector<128x1xf32>
    %17 = math.rsqrt %16 : vector<128x1xf32>
    %18 = vector.broadcast %17 : vector<128x1xf32> to vector<128x256xf32>
    %19 = arith.mulf %14, %18 : vector<128x256xf32>
    %20 = arith.truncf %19 : vector<128x256xf32> to vector<128x256xbf16>
    %c0_6 = arith.constant 0 : index
    %c0_7 = arith.constant 0 : index
    %21 = vector.load %arg3[%c0_6, %c0_7] : memref<256x768xbf16, #tpu.memory_space<vmem>>, vector<256x768xbf16>
    %cst_8 = arith.constant dense<0.000000e+00> : vector<128x768xf32>
    %22 = tpu.matmul %20, %21, %cst_8 {dimension_numbers = #tpu.dot_dimension_numbers<[1], [0], [0], [1], [0, 0, 1, 1], [], []>} : vector<128x256xbf16>, vector<256x768xbf16>, vector<128x768xf32> -> vector<128x768xf32>
    %c0_9 = arith.constant 0 : index
    %c0_10 = arith.constant 0 : index
    %23 = vector.load %arg4[%c0_9, %c0_10] : memref<1x768xf32, #tpu.memory_space<vmem>>, vector<1x768xf32>
    %24 = vector.broadcast %23 : vector<1x768xf32> to vector<128x768xf32>
    %25 = arith.addf %22, %24 : vector<128x768xf32>
    %26 = arith.truncf %25 : vector<128x768xf32> to vector<128x768xbf16>
    %27 = vector.extract_strided_slice %26 {offsets = [0, 0], sizes = [128, 128], strides = [1, 1]} : vector<128x768xbf16> to vector<128x128xbf16>
    %c0_11 = arith.constant 0 : index
    %c0_12 = arith.constant 0 : index
    %c0_13 = arith.constant 0 : index
    %c0_14 = arith.constant 0 : index
    %28 = vector.load %arg5[%c0_11, %c0_12, %c0_13, %c0_14] : memref<1x2x128x128xbf16, #tpu.memory_space<vmem>>, vector<1x1x128x128xbf16>
    %29 = vector.shape_cast %28 : vector<1x1x128x128xbf16> to vector<128x128xbf16>
    %30 = vector.shape_cast %27 : vector<128x128xbf16> to vector<1x1x128x128xbf16>
    tpu.vector_store %arg5[%c0_11, %c0_12, %c0_13, %c0_14], %30 {strides = array<i32>} : memref<1x2x128x128xbf16, #tpu.memory_space<vmem>>, vector<1x1x128x128xbf16>,
    %31 = vector.extract_strided_slice %26 {offsets = [0, 256], sizes = [128, 128], strides = [1, 1]} : vector<128x768xbf16> to vector<128x128xbf16>
    %c0_15 = arith.constant 0 : index
    %c0_16 = arith.constant 0 : index
    %c0_17 = arith.constant 0 : index
    %c0_18 = arith.constant 0 : index
    %32 = vector.load %arg6[%c0_15, %c0_16, %c0_17, %c0_18] : memref<1x2x128x128xbf16, #tpu.memory_space<vmem>>, vector<1x1x128x128xbf16>
    %33 = vector.shape_cast %32 : vector<1x1x128x128xbf16> to vector<128x128xbf16>
    %34 = vector.shape_cast %31 : vector<128x128xbf16> to vector<1x1x128x128xbf16>
    tpu.vector_store %arg6[%c0_15, %c0_16, %c0_17, %c0_18], %34 {strides = array<i32>} : memref<1x2x128x128xbf16, #tpu.memory_space<vmem>>, vector<1x1x128x128xbf16>,
    %35 = vector.extract_strided_slice %26 {offsets = [0, 512], sizes = [128, 128], strides = [1, 1]} : vector<128x768xbf16> to vector<128x128xbf16>
    %c0_19 = arith.constant 0 : index
    %c0_20 = arith.constant 0 : index
    %c0_21 = arith.constant 0 : index
    %c0_22 = arith.constant 0 : index
    %36 = vector.load %arg7[%c0_19, %c0_20, %c0_21, %c0_22] : memref<1x2x128x128xbf16, #tpu.memory_space<vmem>>, vector<1x1x128x128xbf16>
    %37 = vector.shape_cast %36 : vector<1x1x128x128xbf16> to vector<128x128xbf16>
    %38 = vector.shape_cast %35 : vector<128x128xbf16> to vector<1x1x128x128xbf16>
    tpu.vector_store %arg7[%c0_19, %c0_20, %c0_21, %c0_22], %38 {strides = array<i32>} : memref<1x2x128x128xbf16, #tpu.memory_space<vmem>>, vector<1x1x128x128xbf16>,
    %39 = vector.extract_strided_slice %26 {offsets = [0, 128], sizes = [128, 128], strides = [1, 1]} : vector<128x768xbf16> to vector<128x128xbf16>
    %c0_23 = arith.constant 0 : index
    %c1 = arith.constant 1 : index
    %c0_24 = arith.constant 0 : index
    %c0_25 = arith.constant 0 : index
    %40 = vector.load %arg5[%c0_23, %c1, %c0_24, %c0_25] : memref<1x2x128x128xbf16, #tpu.memory_space<vmem>>, vector<1x1x128x128xbf16>
    %41 = vector.shape_cast %40 : vector<1x1x128x128xbf16> to vector<128x128xbf16>
    %42 = vector.shape_cast %39 : vector<128x128xbf16> to vector<1x1x128x128xbf16>
    tpu.vector_store %arg5[%c0_23, %c1, %c0_24, %c0_25], %42 {strides = array<i32>} : memref<1x2x128x128xbf16, #tpu.memory_space<vmem>>, vector<1x1x128x128xbf16>,
    %43 = vector.extract_strided_slice %26 {offsets = [0, 384], sizes = [128, 128], strides = [1, 1]} : vector<128x768xbf16> to vector<128x128xbf16>
    %c0_26 = arith.constant 0 : index
    %c1_27 = arith.constant 1 : index
    %c0_28 = arith.constant 0 : index
    %c0_29 = arith.constant 0 : index
    %44 = vector.load %arg6[%c0_26, %c1_27, %c0_28, %c0_29] : memref<1x2x128x128xbf16, #tpu.memory_space<vmem>>, vector<1x1x128x128xbf16>
    %45 = vector.shape_cast %44 : vector<1x1x128x128xbf16> to vector<128x128xbf16>
    %46 = vector.shape_cast %43 : vector<128x128xbf16> to vector<1x1x128x128xbf16>
    tpu.vector_store %arg6[%c0_26, %c1_27, %c0_28, %c0_29], %46 {strides = array<i32>} : memref<1x2x128x128xbf16, #tpu.memory_space<vmem>>, vector<1x1x128x128xbf16>,
    %47 = vector.extract_strided_slice %26 {offsets = [0, 640], sizes = [128, 128], strides = [1, 1]} : vector<128x768xbf16> to vector<128x128xbf16>
    %c0_30 = arith.constant 0 : index
    %c1_31 = arith.constant 1 : index
    %c0_32 = arith.constant 0 : index
    %c0_33 = arith.constant 0 : index
    %48 = vector.load %arg7[%c0_30, %c1_31, %c0_32, %c0_33] : memref<1x2x128x128xbf16, #tpu.memory_space<vmem>>, vector<1x1x128x128xbf16>
    %49 = vector.shape_cast %48 : vector<1x1x128x128xbf16> to vector<128x128xbf16>
    %50 = vector.shape_cast %47 : vector<128x128xbf16> to vector<1x1x128x128xbf16>
    tpu.vector_store %arg7[%c0_30, %c1_31, %c0_32, %c0_33], %50 {strides = array<i32>} : memref<1x2x128x128xbf16, #tpu.memory_space<vmem>>, vector<1x1x128x128xbf16>,
    return
  }
  func.func @transform_0(%arg0: i32, %arg1: i32) -> (i32, i32, i32) {
    %c0_i32 = arith.constant 0 : i32
    %c0_i32_0 = arith.constant 0 : i32
    return %arg0, %arg1, %c0_i32 : i32, i32, i32
  }
  func.func @transform_1(%arg0: i32, %arg1: i32) -> (i32, i32) {
    %c0_i32 = arith.constant 0 : i32
    %c0_i32_0 = arith.constant 0 : i32
    %c0_i32_1 = arith.constant 0 : i32
    return %c0_i32, %c0_i32_0 : i32, i32
  }
  func.func @transform_2(%arg0: i32, %arg1: i32) -> (i32, i32) {
    %c0_i32 = arith.constant 0 : i32
    %c0_i32_0 = arith.constant 0 : i32
    %c0_i32_1 = arith.constant 0 : i32
    return %c0_i32, %c0_i32_0 : i32, i32
  }
  func.func @transform_3(%arg0: i32, %arg1: i32) -> (i32, i32, i32, i32) {
    %c0_i32 = arith.constant 0 : i32
    %c0_i32_0 = arith.constant 0 : i32
    %c0_i32_1 = arith.constant 0 : i32
    return %arg0, %c0_i32, %arg1, %c0_i32_0 : i32, i32, i32, i32
  }
  func.func @transform_4(%arg0: i32, %arg1: i32) -> (i32, i32, i32, i32) {
    %c0_i32 = arith.constant 0 : i32
    %c0_i32_0 = arith.constant 0 : i32
    %c0_i32_1 = arith.constant 0 : i32
    return %arg0, %c0_i32, %arg1, %c0_i32_0 : i32, i32, i32, i32
  }
  func.func @transform_5(%arg0: i32, %arg1: i32) -> (i32, i32, i32, i32) {
    %c0_i32 = arith.constant 0 : i32
    %c0_i32_0 = arith.constant 0 : i32
    %c0_i32_1 = arith.constant 0 : i32
    return %arg0, %c0_i32, %arg1, %c0_i32_0 : i32, i32, i32, i32
  }
}

</mosaic_0001>

<llo_original>
// kernel: tpu_custom_call.1
$region0: #{tpu_custom_call.1}
  #allocation0 [shape = 'u32[]', space=smem, size = 0x4, offset = 0x4, fixed_abs, tag = 'smem constant byte address 0x4 - core index']
  #allocation1 [shape = 'u32[72,128]{1,0:T(1,128)}', space=vmem, size = 0x9000, scoped, tag = 'internal scratch']
  #allocation12 [shape = 's32[]', space=sflag, size = 0x4, offset = 0, fixed_abs, tag = 'sflag constant byte address 0x0 - dummy sync flag']
  #allocation14 [shape = 's32[]', space=sflag, size = 0x4, offset = 0, fixed_abs, tag = 'sflag constant byte address 0x0 - dummy sync flag']
  #allocation16 [shape = 's32[]', space=sflag, size = 0x4, offset = 0, fixed_abs, tag = 'sflag constant byte address 0x0 - dummy sync flag']
  %s0 = inlined_call_operand.hbm [shape: f32[2,256,256], index: 0, kind: input, shape index: {}]
  %s1 = inlined_call_operand.hbm [shape: bf16[256,768], index: 1, kind: input, shape index: {}]
  %s2 = inlined_call_operand.hbm [shape: f32[1,768], index: 2, kind: input, shape index: {}]
  %s3 = inlined_call_operand.hbm [shape: bf16[2,2,256,128], index: 3, kind: output, shape index: {0}]
  %s4 = inlined_call_operand.hbm [shape: bf16[2,2,256,128], index: 4, kind: output, shape index: {1}]
  %s5 = inlined_call_operand.hbm [shape: bf16[2,2,256,128], index: 5, kind: output, shape index: {2}]
  %6 = xla_tuple %s3, %s4, %s5
  %s7 = sld [smem:[#allocation0]]
  $region73: #{tpu_custom_call.1} parent=0
    _
  %s9 = ssub.s32 1, %s7
  %s10 = scalar_select 0, %s9, %s7
  $region1: #{tpu_custom_call.1} parent=0
    #allocation2 [shape = 'u8[262144]{0}', space=vmem, size = 0x40000, scoped, tag = 'input window, operand 0']
    #allocation3 [shape = 's32[2]{0}', space=sflag, size = 0x8, scoped, tag = 'scoped memory for tpu_custom_call.1']
    #allocation4 [shape = 's32[2]{0}', space=sflag, size = 0x8, scoped, tag = 'scoped memory for tpu_custom_call.1']
    #allocation5 [shape = 'u8[393216]{0}', space=vmem, size = 0x60000, scoped, tag = 'input window, operand 1, single buffered']
    #allocation6 [shape = 's32[1]{0}', space=sflag, size = 0x4, scoped, tag = 'scoped memory for tpu_custom_call.1']
    #allocation7 [shape = 'u8[3072]{0}', space=vmem, size = 0xc00, scoped, tag = 'input window, operand 2, single buffered']
    #allocation8 [shape = 'u8[131072]{0}', space=vmem, size = 0x20000, scoped, tag = 'output window, operand 0']
    #allocation9 [shape = 'u8[131072]{0}', space=vmem, size = 0x20000, scoped, tag = 'output window, operand 1']
    #allocation10 [shape = 's32[2]{0}', space=sflag, size = 0x8, scoped, tag = 'scoped memory for tpu_custom_call.1']
    #allocation11 [shape = 'u8[131072]{0}', space=vmem, size = 0x20000, scoped, tag = 'output window, operand 2']
    %11 = vsyncpa [#allocation3], 0
    %s12 = scalar_lea.sflag [#allocation3], 1
    %13 = vsyncpa %s12, 0
    %14 = vsyncpa [#allocation6], 0
    %15 = vsyncpa [#allocation4], 0
    %s16 = scalar_lea.sflag [#allocation4], 1
    %17 = vsyncpa %s16, 0
    %18 = vsyncpa [#allocation10], 0
    %s19 = scalar_lea.sflag [#allocation10], 1
    %20 = vsyncpa %s19, 0
    loop: start=0, step=1, limit=6
    $region2: #{tpu_custom_call.1} parent=1 // loop_pre_header
      _
    $region3: #{tpu_custom_call.1} parent=1 // loop_header
      %s22 = sphi 0, %s26
      %p23 = scmp.ge.s32.totalorder %s22, 6
      %s29 = sphi 0, %s41
      %s30 = sphi 0, %s37
      %s31 = sphi 0, %s29
      %s32 = sphi 0, %s30
      %s33 = sphi 0, %s31
      %s34 = sphi 0, %s32
      %s46 = sphi 0, %s48
      %s49 = sphi 0, %s46
      %s50 = sphi 0, %s49
      %s66 = sphi 0, %s50
      %s70 = sphi 0, %s70
      %s72 = sphi 0, %s70
      %s73 = sphi 0, %s72
      %s87 = sphi 0, %s73
      %s91 = sphi 0, %s91
      %s93 = sphi 0, %s91
      %s94 = sphi 0, %s93
      %s108 = sphi 0, %s94
      %s116 = sphi 0, %s118
      %s119 = sphi 0, %s116
      %s120 = sphi 0, %s119
      %s136 = sphi 0, %s120
      %s144 = sphi 0, %s146
      %s147 = sphi 0, %s144
      %s148 = sphi 0, %s147
      %s164 = sphi 0, %s148
      %s172 = sphi 0, %s174
      %s175 = sphi 0, %s172
      %s176 = sphi 0, %s175
      %s192 = sphi 0, %s176
    $region4: #{tpu_custom_call.1} parent=1 // loop_header_branch
      %25 = sbr.rel (%p23) target = $region8
    $region5: #{tpu_custom_call.1} parent=1 // loop_body
      %s27 = ssub.s32 %s22, 1
      %s28 = ssub.s32 %s22, 2
      %s35 = sadd.s32 1, %s30
      %p36 = scmp.ge.s32.totalorder %s35, 2
      %s37 = scalar_select %p36, 0, %s35
      %s38 = sadd.s32 1, %s29
      %s39 = scalar_select %p36, %s38, %s29
      %p40 = scmp.ge.s32.totalorder %s39, 2
      %s41 = scalar_select %p40, 0, %s39
      %s42 = ssub.s32 %s29, %s41
      %s43 = ssub.s32 %s30, %s37
      %s44 = sor.u32 %s42, %s43
      %p45 = scmp.eq.s32.totalorder %s44, 0
      %s47 = sadd.s32 %s46, 1
      %s48 = scalar_select %p45, %s46, %s47
      %p51 = pneg %p45
      %p52 = scmp.eq.s32.totalorder %s22, 3
      %p53 = por %p51, %p52
      %p54 = scmp.ne.s32.totalorder %s46, %s49
      %p55 = scmp.eq.s32.totalorder %s22, 0
      %p56 = por %p54, %p55
      %p57 = scmp.ne.s32.totalorder %s46, %s49
      %p58 = scmp.eq.s32.totalorder %s27, 3
      %p59 = por %p57, %p58
      %p60 = scmp.ne.s32.totalorder %s49, %s50
      %p61 = scmp.eq.s32.totalorder %s27, 0
      %p62 = por %p60, %p61
      %p63 = scmp.ne.s32.totalorder %s49, %s50
      %p64 = scmp.eq.s32.totalorder %s28, 3
      %p65 = por %p63, %p64
      %p67 = scmp.ne.s32.totalorder %s50, %s66
      %p68 = scmp.eq.s32.totalorder %s28, 0
      %p69 = por %p67, %p68
      %s71 = sadd.s32 %s70, 1
      %p74 = scmp.eq.s32.totalorder %s22, 3
      %p75 = scmp.ne.s32.totalorder %s70, %s72
      %p76 = scmp.eq.s32.totalorder %s22, 0
      %p77 = por %p75, %p76
      %p78 = scmp.ne.s32.totalorder %s70, %s72
      %p79 = scmp.eq.s32.totalorder %s27, 3
      %p80 = por %p78, %p79
      %p81 = scmp.ne.s32.totalorder %s72, %s73
      %p82 = scmp.eq.s32.totalorder %s27, 0
      %p83 = por %p81, %p82
      %p84 = scmp.ne.s32.totalorder %s72, %s73
      %p85 = scmp.eq.s32.totalorder %s28, 3
      %p86 = por %p84, %p85
      %p88 = scmp.ne.s32.totalorder %s73, %s87
      %p89 = scmp.eq.s32.totalorder %s28, 0
      %p90 = por %p88, %p89
      %s92 = sadd.s32 %s91, 1
      %p95 = scmp.eq.s32.totalorder %s22, 3
      %p96 = scmp.ne.s32.totalorder %s91, %s93
      %p97 = scmp.eq.s32.totalorder %s22, 0
      %p98 = por %p96, %p97
      %p99 = scmp.ne.s32.totalorder %s91, %s93
      %p100 = scmp.eq.s32.totalorder %s27, 3
      %p101 = por %p99, %p100
      %p102 = scmp.ne.s32.totalorder %s93, %s94
      %p103 = scmp.eq.s32.totalorder %s27, 0
      %p104 = por %p102, %p103
      %p105 = scmp.ne.s32.totalorder %s93, %s94
      %p106 = scmp.eq.s32.totalorder %s28, 3
      %p107 = por %p105, %p106
      %p109 = scmp.ne.s32.totalorder %s94, %s108
      %p110 = scmp.eq.s32.totalorder %s28, 0
      %p111 = por %p109, %p110
      %s112 = ssub.s32 %s29, %s41
      %s113 = ssub.s32 %s30, %s37
      %s114 = sor.u32 %s112, %s113
      %p115 = scmp.eq.s32.totalorder %s114, 0
      %s117 = sadd.s32 %s116, 1
      %s118 = scalar_select %p115, %s116, %s117
      %p121 = pneg %p115
      %p122 = scmp.eq.s32.totalorder %s22, 3
      %p123 = por %p121, %p122
      %p124 = scmp.ne.s32.totalorder %s116, %s119
      %p125 = scmp.eq.s32.totalorder %s22, 0
      %p126 = por %p124, %p125
      %p127 = scmp.ne.s32.totalorder %s116, %s119
      %p128 = scmp.eq.s32.totalorder %s27, 3
      %p129 = por %p127, %p128
      %p130 = scmp.ne.s32.totalorder %s119, %s120
      %p131 = scmp.eq.s32.totalorder %s27, 0
      %p132 = por %p130, %p131
      %p133 = scmp.ne.s32.totalorder %s119, %s120
      %p134 = scmp.eq.s32.totalorder %s28, 3
      %p135 = por %p133, %p134
      %p137 = scmp.ne.s32.totalorder %s120, %s136
      %p138 = scmp.eq.s32.totalorder %s28, 0
      %p139 = por %p137, %p138
      %s140 = ssub.s32 %s29, %s41
      %s141 = ssub.s32 %s30, %s37
      %s142 = sor.u32 %s140, %s141
      %p143 = scmp.eq.s32.totalorder %s142, 0
      %s145 = sadd.s32 %s144, 1
      %s146 = scalar_select %p143, %s144, %s145
      %p149 = pneg %p143
      %p150 = scmp.eq.s32.totalorder %s22, 3
      %p151 = por %p149, %p150
      %p152 = scmp.ne.s32.totalorder %s144, %s147
      %p153 = scmp.eq.s32.totalorder %s22, 0
      %p154 = por %p152, %p153
      %p155 = scmp.ne.s32.totalorder %s144, %s147
      %p156 = scmp.eq.s32.totalorder %s27, 3
      %p157 = por %p155, %p156
      %p158 = scmp.ne.s32.totalorder %s147, %s148
      %p159 = scmp.eq.s32.totalorder %s27, 0
      %p160 = por %p158, %p159
      %p161 = scmp.ne.s32.totalorder %s147, %s148
      %p162 = scmp.eq.s32.totalorder %s28, 3
      %p163 = por %p161, %p162
      %p165 = scmp.ne.s32.totalorder %s148, %s164
      %p166 = scmp.eq.s32.totalorder %s28, 0
      %p167 = por %p165, %p166
      %s168 = ssub.s32 %s29, %s41
      %s169 = ssub.s32 %s30, %s37
      %s170 = sor.u32 %s168, %s169
      %p171 = scmp.eq.s32.totalorder %s170, 0
      %s173 = sadd.s32 %s172, 1
      %s174 = scalar_select %p171, %s172, %s173
      %p177 = pneg %p171
      %p178 = scmp.eq.s32.totalorder %s22, 3
      %p179 = por %p177, %p178
      %p180 = scmp.ne.s32.totalorder %s172, %s175
      %p181 = scmp.eq.s32.totalorder %s22, 0
      %p182 = por %p180, %p181
      %p183 = scmp.ne.s32.totalorder %s172, %s175
      %p184 = scmp.eq.s32.totalorder %s27, 3
      %p185 = por %p183, %p184
      %p186 = scmp.ne.s32.totalorder %s175, %s176
      %p187 = scmp.eq.s32.totalorder %s27, 0
      %p188 = por %p186, %p187
      %p189 = scmp.ne.s32.totalorder %s175, %s176
      %p190 = scmp.eq.s32.totalorder %s28, 3
      %p191 = por %p189, %p190
      %p193 = scmp.ne.s32.totalorder %s176, %s192
      %p194 = scmp.eq.s32.totalorder %s28, 0
      %p195 = por %p193, %p194
      %p196 = scmp.le.s32.totalorder 1, %s22
      %p197 = scmp.lt.s32.totalorder %s22, 5
      %p198 = pnand %p196, %p197
      %p199 = pneg %p198
      // Predicated region
      $region9: #{tpu_custom_call.1} parent=5 // pred_check
        _
      $region10: #{tpu_custom_call.1} parent=5 // pred_check_branch
        %201 = sbr.rel (%p198) target = $region12
      $region11: #{tpu_custom_call.1} parent=5 // pred_region
        %s202 = ssub.s32 %s22, 1
        // Predicated region
        $region13: #{tpu_custom_call.1} parent=11 // pred_check
          %p203 = pneg %p83
        $region14: #{tpu_custom_call.1} parent=11 // pred_check_branch
          %205 = sbr.rel (%p203) target = $region16
        $region15: #{tpu_custom_call.1} parent=11 // pred_region
          %207 = vsyncadd [#allocation6], 0
          %s208 = sshll.u32 %s1, 4
          %s209 = int_to_ptr.hbm [resolvable:$true] %s208
          %s210 = sshll.u32 [#allocation5], 4
          %s211 = int_to_ptr.vmem [resolvable:$true] %s210
          %216 = dma.hbm_to_vmem [thread:$0]  %s209, 12288, %s211, [#allocation6], 384, 384, 24
        $region16: #{tpu_custom_call.1} parent=11 // pred_fallthru
          _
        // Predicated region
        $region17: #{tpu_custom_call.1} parent=11 // pred_check
          %p217 = pneg %p104
        $region18: #{tpu_custom_call.1} parent=11 // pred_check_branch
          %219 = sbr.rel (%p217) target = $region20
        $region19: #{tpu_custom_call.1} parent=11 // pred_region
          %221 = vsyncadd [#allocation6], 0
          %s223 = sshll.u32 %s2, 4
          %s224 = int_to_ptr.hbm [resolvable:$true] %s223
          %s225 = sshll.u32 [#allocation7], 4
          %s226 = int_to_ptr.vmem [resolvable:$true] %s225
          %228 = dma.hbm_to_vmem [thread:$0]  %s224, 96, %s226, [#allocation6]
        $region20: #{tpu_custom_call.1} parent=11 // pred_fallthru
          _
      $region12: #{tpu_custom_call.1} parent=5 // pred_fallthru
        _
      %p229 = scmp.lt.s32.totalorder %s22, 4
      // Predicated region
      $region21: #{tpu_custom_call.1} parent=5 // pred_check
        %p230 = pneg %p229
      $region22: #{tpu_custom_call.1} parent=5 // pred_check_branch
        %232 = sbr.rel (%p230) target = $region24
      $region23: #{tpu_custom_call.1} parent=5 // pred_region
        // Predicated region
        $region25: #{tpu_custom_call.1} parent=23 // pred_check
          %p233 = pneg %p56
        $region26: #{tpu_custom_call.1} parent=23 // pred_check_branch
          %235 = sbr.rel (%p233) target = $region28
        $region27: #{tpu_custom_call.1} parent=23 // pred_region
          %s236 = sand.u32 %s46, 1
          %s237 = scalar_lea.sflag [#allocation3], %s236
          %s238 = sand.u32 %s46, 1
          %s239 = smul.addr %s238, 256
          %s240 = scalar_lea.vmem [#allocation2], %s239
          %s241 = smul.u32 16, %s30
          %243 = vsyncadd %s237, 0
          %s244 = smul.addr %s241, 2
          %s245 = smul.addr %s29, 64
          %s246 = sadd.s32 %s244, %s245
          %s247 = smul.addr %s246, 8
          %s248 = scalar_lea.hbm %s0, %s247
          %s249 = sshll.u32 %s248, 4
          %s250 = int_to_ptr.hbm [resolvable:$true] %s249
          %s251 = sshll.u32 %s240, 4
          %s252 = int_to_ptr.vmem [resolvable:$true] %s251
          %257 = dma.hbm_to_vmem [thread:$0]  %s250, 4096, %s252, %s237, 256, 256, 16
        $region28: #{tpu_custom_call.1} parent=23 // pred_fallthru
          _
      $region24: #{tpu_custom_call.1} parent=5 // pred_fallthru
        _
      %p258 = scmp.le.s32.totalorder 1, %s22
      %p259 = scmp.lt.s32.totalorder %s22, 5
      %p260 = pnand %p258, %p259
      %p261 = pneg %p260
      // Predicated region
      $region29: #{tpu_custom_call.1} parent=5 // pred_check
        _
      $region30: #{tpu_custom_call.1} parent=5 // pred_check_branch
        %263 = sbr.rel (%p260) target = $region32
      $region31: #{tpu_custom_call.1} parent=5 // pred_region
        %s264 = ssub.s32 %s22, 1
        %s265 = sand.u32 %s49, 1
        %s266 = scalar_lea.sflag [#allocation3], %s265
        %s267 = sand.u32 %s49, 1
        %s268 = smul.addr %s267, 256
        %s269 = scalar_lea.vmem [#allocation2], %s268
        // Predicated region
        $region33: #{tpu_custom_call.1} parent=31 // pred_check
          %p270 = pneg %p62
        $region34: #{tpu_custom_call.1} parent=31 // pred_check_branch
          %272 = sbr.rel (%p270) target = $region36
        $region35: #{tpu_custom_call.1} parent=31 // pred_region
          %274 = dma.done %s266, 4096
        $region36: #{tpu_custom_call.1} parent=31 // pred_fallthru
          _
        // Predicated region
        $region37: #{tpu_custom_call.1} parent=31 // pred_check
          %p275 = pneg %p83
        $region38: #{tpu_custom_call.1} parent=31 // pred_check_branch
          %277 = sbr.rel (%p275) target = $region40
        $region39: #{tpu_custom_call.1} parent=31 // pred_region
          %279 = dma.done [#allocation6], 12288
        $region40: #{tpu_custom_call.1} parent=31 // pred_fallthru
          _
        // Predicated region
        $region41: #{tpu_custom_call.1} parent=31 // pred_check
          %p280 = pneg %p104
        $region42: #{tpu_custom_call.1} parent=31 // pred_check_branch
          %282 = sbr.rel (%p280) target = $region44
        $region43: #{tpu_custom_call.1} parent=31 // pred_region
          %284 = dma.done [#allocation6], 96
        $region44: #{tpu_custom_call.1} parent=31 // pred_fallthru
          _
        %s285 = sand.u32 %s49, 1
        %s286 = scalar_lea.sflag [#allocation3], %s285
        %s287 = sand.u32 %s49, 1
        %s288 = smul.addr %s287, 256
        %s289 = scalar_lea.vmem [#allocation2], %s288
        %p290 = pneg %p62
        %p291 = pneg %p59
        %p292 = pneg %p83
        %p293 = pneg %p80
        %p294 = pneg %p104
        %p295 = pneg %p101
        %p296 = pneg %p132
        %p297 = pneg %p129
        %s298 = sand.u32 %s119, 1
        %s299 = scalar_lea.sflag [#allocation4], %s298
        %s300 = sand.u32 %s119, 1
        %s301 = smul.addr %s300, 128
        %s302 = scalar_lea.vmem [#allocation8], %s301
        %p303 = pneg %p160
        %p304 = pneg %p157
        %s305 = sand.u32 %s27, 1
        %s306 = scalar_lea.sflag [#allocation10], %s305
        %s307 = sand.u32 %s147, 1
        %s308 = smul.addr %s307, 128
        %s309 = scalar_lea.vmem [#allocation9], %s308
        %p310 = pneg %p188
        %p311 = pneg %p185
        %s312 = sand.u32 %s27, 1
        %s313 = scalar_lea.sflag [#allocation10], %s312
        %s314 = sand.u32 %s175, 1
        %s315 = smul.addr %s314, 128
        %s316 = scalar_lea.vmem [#allocation11], %s315
        %s317 = smul.u32 16, %s32
        %s318 = smul.u32 16, %s32
        %s319 = smul.u32 16, %s32
        %s320 = smul.u32 16, %s32
        %v321 = vld [vmem:[%s269] sm:$0xff]
        %v322 = vld [vmem:[%s269 + $0x8] sm:$0xff]
        %v323 = vld [vmem:[%s269 + $0x10] sm:$0xff]
        %v324 = vld [vmem:[%s269 + $0x18] sm:$0xff]
        %v325 = vld [vmem:[%s269 + $0x20] sm:$0xff]
        %v326 = vld [vmem:[%s269 + $0x28] sm:$0xff]
        %v327 = vld [vmem:[%s269 + $0x30] sm:$0xff]
        %v328 = vld [vmem:[%s269 + $0x38] sm:$0xff]
        %v329 = vld [vmem:[%s269 + $0x40] sm:$0xff]
        %v330 = vld [vmem:[%s269 + $0x48] sm:$0xff]
        %v331 = vld [vmem:[%s269 + $0x50] sm:$0xff]
        %v332 = vld [vmem:[%s269 + $0x58] sm:$0xff]
        %v333 = vld [vmem:[%s269 + $0x60] sm:$0xff]
        %v334 = vld [vmem:[%s269 + $0x68] sm:$0xff]
        %v335 = vld [vmem:[%s269 + $0x70] sm:$0xff]
        %v336 = vld [vmem:[%s269 + $0x78] sm:$0xff]
        %v337 = vld [vmem:[%s269 + $0x80] sm:$0xff]
        %v338 = vld [vmem:[%s269 + $0x88] sm:$0xff]
        %v339 = vld [vmem:[%s269 + $0x90] sm:$0xff]
        %v340 = vld [vmem:[%s269 + $0x98] sm:$0xff]
        %v341 = vld [vmem:[%s269 + $0xa0] sm:$0xff]
        %v342 = vld [vmem:[%s269 + $0xa8] sm:$0xff]
        %v343 = vld [vmem:[%s269 + $0xb0] sm:$0xff]
        %v344 = vld [vmem:[%s269 + $0xb8] sm:$0xff]
        %v345 = vld [vmem:[%s269 + $0xc0] sm:$0xff]
        %v346 = vld [vmem:[%s269 + $0xc8] sm:$0xff]
        %v347 = vld [vmem:[%s269 + $0xd0] sm:$0xff]
        %v348 = vld [vmem:[%s269 + $0xd8] sm:$0xff]
        %v349 = vld [vmem:[%s269 + $0xe0] sm:$0xff]
        %v350 = vld [vmem:[%s269 + $0xe8] sm:$0xff]
        %v351 = vld [vmem:[%s269 + $0xf0] sm:$0xff]
        %v352 = vld [vmem:[%s269 + $0xf8] sm:$0xff]
        %v353 = vadd.f32 %v321, %v322
        %354 = vadd.xlane.f32.xlu0 %v353
        %v355 = vpop.xlane.xlu0 %354
        %v356 = vadd.f32 %v323, %v324
        %357 = vadd.xlane.f32.xlu0 %v356
        %v358 = vpop.xlane.xlu0 %357
        %v359 = vadd.f32 %v325, %v326
        %360 = vadd.xlane.f32.xlu0 %v359
        %v361 = vpop.xlane.xlu0 %360
        %v362 = vadd.f32 %v327, %v328
        %363 = vadd.xlane.f32.xlu0 %v362
        %v364 = vpop.xlane.xlu0 %363
        %v365 = vadd.f32 %v329, %v330
        %366 = vadd.xlane.f32.xlu0 %v365
        %v367 = vpop.xlane.xlu0 %366
        %v368 = vadd.f32 %v331, %v332
        %369 = vadd.xlane.f32.xlu0 %v368
        %v370 = vpop.xlane.xlu0 %369
        %v371 = vadd.f32 %v333, %v334
        %372 = vadd.xlane.f32.xlu0 %v371
        %v373 = vpop.xlane.xlu0 %372
        %v374 = vadd.f32 %v335, %v336
        %375 = vadd.xlane.f32.xlu0 %v374
        %v376 = vpop.xlane.xlu0 %375
        %v377 = vadd.f32 %v337, %v338
        %378 = vadd.xlane.f32.xlu0 %v377
        %v379 = vpop.xlane.xlu0 %378
        %v380 = vadd.f32 %v339, %v340
        %381 = vadd.xlane.f32.xlu0 %v380
        %v382 = vpop.xlane.xlu0 %381
        %v383 = vadd.f32 %v341, %v342
        %384 = vadd.xlane.f32.xlu0 %v383
        %v385 = vpop.xlane.xlu0 %384
        %v386 = vadd.f32 %v343, %v344
        %387 = vadd.xlane.f32.xlu0 %v386
        %v388 = vpop.xlane.xlu0 %387
        %v389 = vadd.f32 %v345, %v346
        %390 = vadd.xlane.f32.xlu0 %v389
        %v391 = vpop.xlane.xlu0 %390
        %v392 = vadd.f32 %v347, %v348
        %393 = vadd.xlane.f32.xlu0 %v392
        %v394 = vpop.xlane.xlu0 %393
        %v395 = vadd.f32 %v349, %v350
        %396 = vadd.xlane.f32.xlu0 %v395
        %v397 = vpop.xlane.xlu0 %396
        %v398 = vadd.f32 %v351, %v352
        %399 = vadd.xlane.f32.xlu0 %v398
        %v400 = vpop.xlane.xlu0 %399
        %v401 = vrcp.pop 256.0
        %v402 = vmul.f32 256.0, %v401
        %v403 = vsub.f32 1.0, %v402
        %v404 = vmul.f32 %v401, %v403
        %v405 = vadd.f32 %v401, %v404
        %vm406 = vweird.f32 %v401
        %v407 = vsel %vm406, %v401, %v405
        %v408 = vmul.f32 %v355, %v407
        %v409 = vmul.f32 %v358, %v407
        %v410 = vmul.f32 %v361, %v407
        %v411 = vmul.f32 %v364, %v407
        %v412 = vmul.f32 %v367, %v407
        %v413 = vmul.f32 %v370, %v407
        %v414 = vmul.f32 %v373, %v407
        %v415 = vmul.f32 %v376, %v407
        %v416 = vmul.f32 %v379, %v407
        %v417 = vmul.f32 %v382, %v407
        %v418 = vmul.f32 %v385, %v407
        %v419 = vmul.f32 %v388, %v407
        %v420 = vmul.f32 %v391, %v407
        %v421 = vmul.f32 %v394, %v407
        %v422 = vmul.f32 %v397, %v407
        %v423 = vmul.f32 %v400, %v407
        %v424 = vsub.f32 %v321, %v408
        %v425 = vsub.f32 %v322, %v408
        %v426 = vsub.f32 %v323, %v409
        %v427 = vsub.f32 %v324, %v409
        %v428 = vsub.f32 %v325, %v410
        %v429 = vsub.f32 %v326, %v410
        %v430 = vsub.f32 %v327, %v411
        %v431 = vsub.f32 %v328, %v411
        %v432 = vsub.f32 %v329, %v412
        %v433 = vsub.f32 %v330, %v412
        %v434 = vsub.f32 %v331, %v413
        %v435 = vsub.f32 %v332, %v413
        %v436 = vsub.f32 %v333, %v414
        %v437 = vsub.f32 %v334, %v414
        %v438 = vsub.f32 %v335, %v415
        %v439 = vsub.f32 %v336, %v415
        %v440 = vsub.f32 %v337, %v416
        %v441 = vsub.f32 %v338, %v416
        %v442 = vsub.f32 %v339, %v417
        %v443 = vsub.f32 %v340, %v417
        %v444 = vsub.f32 %v341, %v418
        %v445 = vsub.f32 %v342, %v418
        %v446 = vsub.f32 %v343, %v419
        %v447 = vsub.f32 %v344, %v419
        %v448 = vsub.f32 %v345, %v420
        %v449 = vsub.f32 %v346, %v420
        %v450 = vsub.f32 %v347, %v421
        %v451 = vsub.f32 %v348, %v421
        %v452 = vsub.f32 %v349, %v422
        %v453 = vsub.f32 %v350, %v422
        %v454 = vsub.f32 %v351, %v423
        %v455 = vsub.f32 %v352, %v423
        %v456 = vmul.f32 %v424, %v424
        %v457 = vmul.f32 %v425, %v425
        %v458 = vmul.f32 %v426, %v426
        %v459 = vmul.f32 %v427, %v427
        %v460 = vmul.f32 %v428, %v428
        %v461 = vmul.f32 %v429, %v429
        %v462 = vmul.f32 %v430, %v430
        %v463 = vmul.f32 %v431, %v431
        %v464 = vmul.f32 %v432, %v432
        %v465 = vmul.f32 %v433, %v433
        %v466 = vmul.f32 %v434, %v434
        %v467 = vmul.f32 %v435, %v435
        %v468 = vmul.f32 %v436, %v436
        %v469 = vmul.f32 %v437, %v437
        %v470 = vmul.f32 %v438, %v438
        %v471 = vmul.f32 %v439, %v439
        %v472 = vmul.f32 %v440, %v440
        %v473 = vmul.f32 %v441, %v441
        %v474 = vmul.f32 %v442, %v442
        %v475 = vmul.f32 %v443, %v443
        %v476 = vmul.f32 %v444, %v444
        %v477 = vmul.f32 %v445, %v445
        %v478 = vmul.f32 %v446, %v446
        %v479 = vmul.f32 %v447, %v447
        %v480 = vmul.f32 %v448, %v448
        %v481 = vmul.f32 %v449, %v449
        %v482 = vmul.f32 %v450, %v450
        %v483 = vmul.f32 %v451, %v451
        %v484 = vmul.f32 %v452, %v452
        %v485 = vmul.f32 %v453, %v453
        %v486 = vmul.f32 %v454, %v454
        %v487 = vmul.f32 %v455, %v455
        %v488 = vadd.f32 %v456, %v457
        %489 = vadd.xlane.f32.xlu0 %v488
        %v490 = vpop.xlane.xlu0 %489
        %v491 = vadd.f32 %v458, %v459
        %492 = vadd.xlane.f32.xlu0 %v491
        %v493 = vpop.xlane.xlu0 %492
        %v494 = vadd.f32 %v460, %v461
        %495 = vadd.xlane.f32.xlu0 %v494
        %v496 = vpop.xlane.xlu0 %495
        %v497 = vadd.f32 %v462, %v463
        %498 = vadd.xlane.f32.xlu0 %v497
        %v499 = vpop.xlane.xlu0 %498
        %v500 = vadd.f32 %v464, %v465
        %501 = vadd.xlane.f32.xlu0 %v500
        %v502 = vpop.xlane.xlu0 %501
        %v503 = vadd.f32 %v466, %v467
        %504 = vadd.xlane.f32.xlu0 %v503
        %v505 = vpop.xlane.xlu0 %504
        %v506 = vadd.f32 %v468, %v469
        %507 = vadd.xlane.f32.xlu0 %v506
        %v508 = vpop.xlane.xlu0 %507
        %v509 = vadd.f32 %v470, %v471
        %510 = vadd.xlane.f32.xlu0 %v509
        %v511 = vpop.xlane.xlu0 %510
        %v512 = vadd.f32 %v472, %v473
        %513 = vadd.xlane.f32.xlu0 %v512
        %v514 = vpop.xlane.xlu0 %513
        %v515 = vadd.f32 %v474, %v475
        %516 = vadd.xlane.f32.xlu0 %v515
        %v517 = vpop.xlane.xlu0 %516
        %v518 = vadd.f32 %v476, %v477
        %519 = vadd.xlane.f32.xlu0 %v518
        %v520 = vpop.xlane.xlu0 %519
        %v521 = vadd.f32 %v478, %v479
        %522 = vadd.xlane.f32.xlu0 %v521
        %v523 = vpop.xlane.xlu0 %522
        %v524 = vadd.f32 %v480, %v481
        %525 = vadd.xlane.f32.xlu0 %v524
        %v526 = vpop.xlane.xlu0 %525
        %v527 = vadd.f32 %v482, %v483
        %528 = vadd.xlane.f32.xlu0 %v527
        %v529 = vpop.xlane.xlu0 %528
        %v530 = vadd.f32 %v484, %v485
        %531 = vadd.xlane.f32.xlu0 %v530
        %v532 = vpop.xlane.xlu0 %531
        %v533 = vadd.f32 %v486, %v487
        %534 = vadd.xlane.f32.xlu0 %v533
        %v535 = vpop.xlane.xlu0 %534
        %v536 = vmul.f32 %v490, %v407
        %v537 = vmul.f32 %v493, %v407
        %v538 = vmul.f32 %v496, %v407
        %v539 = vmul.f32 %v499, %v407
        %v540 = vmul.f32 %v502, %v407
        %v541 = vmul.f32 %v505, %v407
        %v542 = vmul.f32 %v508, %v407
        %v543 = vmul.f32 %v511, %v407
        %v544 = vmul.f32 %v514, %v407
        %v545 = vmul.f32 %v517, %v407
        %v546 = vmul.f32 %v520, %v407
        %v547 = vmul.f32 %v523, %v407
        %v548 = vmul.f32 %v526, %v407
        %v549 = vmul.f32 %v529, %v407
        %v550 = vmul.f32 %v532, %v407
        %v551 = vmul.f32 %v535, %v407
        %v552 = vadd.f32 %v536, 1e-06
        %v553 = vadd.f32 %v537, 1e-06
        %v554 = vadd.f32 %v538, 1e-06
        %v555 = vadd.f32 %v539, 1e-06
        %v556 = vadd.f32 %v540, 1e-06
        %v557 = vadd.f32 %v541, 1e-06
        %v558 = vadd.f32 %v542, 1e-06
        %v559 = vadd.f32 %v543, 1e-06
        %v560 = vadd.f32 %v544, 1e-06
        %v561 = vadd.f32 %v545, 1e-06
        %v562 = vadd.f32 %v546, 1e-06
        %v563 = vadd.f32 %v547, 1e-06
        %v564 = vadd.f32 %v548, 1e-06
        %v565 = vadd.f32 %v549, 1e-06
        %v566 = vadd.f32 %v550, 1e-06
        %v567 = vadd.f32 %v551, 1e-06
        %v568 = vrsqrt.pop %v552
        %v569 = vmul.f32 %v568, %v552
        %v570 = vmul.f32 %v569, %v568
        %v571 = vmul.f32 0.5, %v570
        %v572 = vsub.f32 1.5, %v571
        %v573 = vmul.f32 %v568, %v572
        %vm574 = vweird.f32 %v552
        %vm575 = vweird.f32 %v568
        %vm576 = vmor %vm574, %vm575
        %v577 = vsel %vm576, %v568, %v573
        %v578 = vrsqrt.pop %v553
        %v579 = vmul.f32 %v578, %v553
        %v580 = vmul.f32 %v579, %v578
        %v581 = vmul.f32 0.5, %v580
        %v582 = vsub.f32 1.5, %v581
        %v583 = vmul.f32 %v578, %v582
        %vm584 = vweird.f32 %v553
        %vm585 = vweird.f32 %v578
        %vm586 = vmor %vm584, %vm585
        %v587 = vsel %vm586, %v578, %v583
        %v588 = vrsqrt.pop %v554
        %v589 = vmul.f32 %v588, %v554
        %v590 = vmul.f32 %v589, %v588
        %v591 = vmul.f32 0.5, %v590
        %v592 = vsub.f32 1.5, %v591
        %v593 = vmul.f32 %v588, %v592
        %vm594 = vweird.f32 %v554
        %vm595 = vweird.f32 %v588
        %vm596 = vmor %vm594, %vm595
        %v597 = vsel %vm596, %v588, %v593
        %v598 = vrsqrt.pop %v555
        %v599 = vmul.f32 %v598, %v555
        %v600 = vmul.f32 %v599, %v598
        %v601 = vmul.f32 0.5, %v600
        %v602 = vsub.f32 1.5, %v601
        %v603 = vmul.f32 %v598, %v602
        %vm604 = vweird.f32 %v555
        %vm605 = vweird.f32 %v598
        %vm606 = vmor %vm604, %vm605
        %v607 = vsel %vm606, %v598, %v603
        %v608 = vrsqrt.pop %v556
        %v609 = vmul.f32 %v608, %v556
        %v610 = vmul.f32 %v609, %v608
        %v611 = vmul.f32 0.5, %v610
        %v612 = vsub.f32 1.5, %v611
        %v613 = vmul.f32 %v608, %v612
        %vm614 = vweird.f32 %v556
        %vm615 = vweird.f32 %v608
        %vm616 = vmor %vm614, %vm615
        %v617 = vsel %vm616, %v608, %v613
        %v618 = vrsqrt.pop %v557
        %v619 = vmul.f32 %v618, %v557
        %v620 = vmul.f32 %v619, %v618
        %v621 = vmul.f32 0.5, %v620
        %v622 = vsub.f32 1.5, %v621
        %v623 = vmul.f32 %v618, %v622
        %vm624 = vweird.f32 %v557
        %vm625 = vweird.f32 %v618
        %vm626 = vmor %vm624, %vm625
        %v627 = vsel %vm626, %v618, %v623
        %v628 = vrsqrt.pop %v558
        %v629 = vmul.f32 %v628, %v558
        %v630 = vmul.f32 %v629, %v628
        %v631 = vmul.f32 0.5, %v630
        %v632 = vsub.f32 1.5, %v631
        %v633 = vmul.f32 %v628, %v632
        %vm634 = vweird.f32 %v558
        %vm635 = vweird.f32 %v628
        %vm636 = vmor %vm634, %vm635
        %v637 = vsel %vm636, %v628, %v633
        %v638 = vrsqrt.pop %v559
        %v639 = vmul.f32 %v638, %v559
        %v640 = vmul.f32 %v639, %v638
        %v641 = vmul.f32 0.5, %v640
        %v642 = vsub.f32 1.5, %v641
        %v643 = vmul.f32 %v638, %v642
        %vm644 = vweird.f32 %v559
        %vm645 = vweird.f32 %v638
        %vm646 = vmor %vm644, %vm645
        %v647 = vsel %vm646, %v638, %v643
        %v648 = vrsqrt.pop %v560
        %v649 = vmul.f32 %v648, %v560
        %v650 = vmul.f32 %v649, %v648
        %v651 = vmul.f32 0.5, %v650
        %v652 = vsub.f32 1.5, %v651
        %v653 = vmul.f32 %v648, %v652
        %vm654 = vweird.f32 %v560
        %vm655 = vweird.f32 %v648
        %vm656 = vmor %vm654, %vm655
        %v657 = vsel %vm656, %v648, %v653
        %v658 = vrsqrt.pop %v561
        %v659 = vmul.f32 %v658, %v561
        %v660 = vmul.f32 %v659, %v658
        %v661 = vmul.f32 0.5, %v660
        %v662 = vsub.f32 1.5, %v661
        %v663 = vmul.f32 %v658, %v662
        %vm664 = vweird.f32 %v561
        %vm665 = vweird.f32 %v658
        %vm666 = vmor %vm664, %vm665
        %v667 = vsel %vm666, %v658, %v663
        %v668 = vrsqrt.pop %v562
        %v669 = vmul.f32 %v668, %v562
        %v670 = vmul.f32 %v669, %v668
        %v671 = vmul.f32 0.5, %v670
        %v672 = vsub.f32 1.5, %v671
        %v673 = vmul.f32 %v668, %v672
        %vm674 = vweird.f32 %v562
        %vm675 = vweird.f32 %v668
        %vm676 = vmor %vm674, %vm675
        %v677 = vsel %vm676, %v668, %v673
        %v678 = vrsqrt.pop %v563
        %v679 = vmul.f32 %v678, %v563
        %v680 = vmul.f32 %v679, %v678
        %v681 = vmul.f32 0.5, %v680
        %v682 = vsub.f32 1.5, %v681
        %v683 = vmul.f32 %v678, %v682
        %vm684 = vweird.f32 %v563
        %vm685 = vweird.f32 %v678
        %vm686 = vmor %vm684, %vm685
        %v687 = vsel %vm686, %v678, %v683
        %v688 = vrsqrt.pop %v564
        %v689 = vmul.f32 %v688, %v564
        %v690 = vmul.f32 %v689, %v688
        %v691 = vmul.f32 0.5, %v690
        %v692 = vsub.f32 1.5, %v691
        %v693 = vmul.f32 %v688, %v692
        %vm694 = vweird.f32 %v564
        %vm695 = vweird.f32 %v688
        %vm696 = vmor %vm694, %vm695
        %v697 = vsel %vm696, %v688, %v693
        %v698 = vrsqrt.pop %v565
        %v699 = vmul.f32 %v698, %v565
        %v700 = vmul.f32 %v699, %v698
        %v701 = vmul.f32 0.5, %v700
        %v702 = vsub.f32 1.5, %v701
        %v703 = vmul.f32 %v698, %v702
        %vm704 = vweird.f32 %v565
        %vm705 = vweird.f32 %v698
        %vm706 = vmor %vm704, %vm705
        %v707 = vsel %vm706, %v698, %v703
        %v708 = vrsqrt.pop %v566
        %v709 = vmul.f32 %v708, %v566
        %v710 = vmul.f32 %v709, %v708
        %v711 = vmul.f32 0.5, %v710
        %v712 = vsub.f32 1.5, %v711
        %v713 = vmul.f32 %v708, %v712
        %vm714 = vweird.f32 %v566
        %vm715 = vweird.f32 %v708
        %vm716 = vmor %vm714, %vm715
        %v717 = vsel %vm716, %v708, %v713
        %v718 = vrsqrt.pop %v567
        %v719 = vmul.f32 %v718, %v567
        %v720 = vmul.f32 %v719, %v718
        %v721 = vmul.f32 0.5, %v720
        %v722 = vsub.f32 1.5, %v721
        %v723 = vmul.f32 %v718, %v722
        %vm724 = vweird.f32 %v567
        %vm725 = vweird.f32 %v718
        %vm726 = vmor %vm724, %vm725
        %v727 = vsel %vm726, %v718, %v723
        %v728 = vmul.f32 %v424, %v577
        %v729 = vmul.f32 %v425, %v577
        %v730 = vmul.f32 %v426, %v587
        %v731 = vmul.f32 %v427, %v587
        %v732 = vmul.f32 %v428, %v597
        %v733 = vmul.f32 %v429, %v597
        %v734 = vmul.f32 %v430, %v607
        %v735 = vmul.f32 %v431, %v607
        %v736 = vmul.f32 %v432, %v617
        %v737 = vmul.f32 %v433, %v617
        %v738 = vmul.f32 %v434, %v627
        %v739 = vmul.f32 %v435, %v627
        %v740 = vmul.f32 %v436, %v637
        %v741 = vmul.f32 %v437, %v637
        %v742 = vmul.f32 %v438, %v647
        %v743 = vmul.f32 %v439, %v647
        %v744 = vmul.f32 %v440, %v657
        %v745 = vmul.f32 %v441, %v657
        %v746 = vmul.f32 %v442, %v667
        %v747 = vmul.f32 %v443, %v667
        %v748 = vmul.f32 %v444, %v677
        %v749 = vmul.f32 %v445, %v677
        %v750 = vmul.f32 %v446, %v687
        %v751 = vmul.f32 %v447, %v687
        %v752 = vmul.f32 %v448, %v697
        %v753 = vmul.f32 %v449, %v697
        %v754 = vmul.f32 %v450, %v707
        %v755 = vmul.f32 %v451, %v707
        %v756 = vmul.f32 %v452, %v717
        %v757 = vmul.f32 %v453, %v717
        %v758 = vmul.f32 %v454, %v727
        %v759 = vmul.f32 %v455, %v727
        %v760 = vpack.c.bf16 %v730, %v728
        %v761 = vpack.c.bf16 %v731, %v729
        %v762 = vpack.c.bf16 %v734, %v732
        %v763 = vpack.c.bf16 %v735, %v733
        %v764 = vpack.c.bf16 %v738, %v736
        %v765 = vpack.c.bf16 %v739, %v737
        %v766 = vpack.c.bf16 %v742, %v740
        %v767 = vpack.c.bf16 %v743, %v741
        %v768 = vpack.c.bf16 %v746, %v744
        %v769 = vpack.c.bf16 %v747, %v745
        %v770 = vpack.c.bf16 %v750, %v748
        %v771 = vpack.c.bf16 %v751, %v749
        %v772 = vpack.c.bf16 %v754, %v752
        %v773 = vpack.c.bf16 %v755, %v753
        %v774 = vpack.c.bf16 %v758, %v756
        %v775 = vpack.c.bf16 %v759, %v757
        %v776 = vld [vmem:[#allocation5] sm:$0xff]
        %v777 = vld [vmem:[#allocation5 + $0x8] sm:$0xff]
        %v778 = vld [vmem:[#allocation5 + $0x10] sm:$0xff]
        %v779 = vld [vmem:[#allocation5 + $0x18] sm:$0xff]
        %v780 = vld [vmem:[#allocation5 + $0x20] sm:$0xff]
        %v781 = vld [vmem:[#allocation5 + $0x28] sm:$0xff]
        %v782 = vld [vmem:[#allocation5 + $0x30] sm:$0xff]
        %v783 = vld [vmem:[#allocation5 + $0x38] sm:$0xff]
        %v784 = vld [vmem:[#allocation5 + $0x40] sm:$0xff]
        %v785 = vld [vmem:[#allocation5 + $0x48] sm:$0xff]
        %v786 = vld [vmem:[#allocation5 + $0x50] sm:$0xff]
        %v787 = vld [vmem:[#allocation5 + $0x58] sm:$0xff]
        %v788 = vld [vmem:[#allocation5 + $0x60] sm:$0xff]
        %v789 = vld [vmem:[#allocation5 + $0x68] sm:$0xff]
        %v790 = vld [vmem:[#allocation5 + $0x70] sm:$0xff]
        %v791 = vld [vmem:[#allocation5 + $0x78] sm:$0xff]
        %v792 = vld [vmem:[#allocation5 + $0x80] sm:$0xff]
        %v793 = vld [vmem:[#allocation5 + $0x88] sm:$0xff]
        %v794 = vld [vmem:[#allocation5 + $0x90] sm:$0xff]
        %v795 = vld [vmem:[#allocation5 + $0x98] sm:$0xff]
        %v796 = vld [vmem:[#allocation5 + $0xa0] sm:$0xff]
        %v797 = vld [vmem:[#allocation5 + $0xa8] sm:$0xff]
        %v798 = vld [vmem:[#allocation5 + $0xb0] sm:$0xff]
        %v799 = vld [vmem:[#allocation5 + $0xb8] sm:$0xff]
        %v800 = vld [vmem:[#allocation5 + $0xc0] sm:$0xff]
        %v801 = vld [vmem:[#allocation5 + $0xc8] sm:$0xff]
        %v802 = vld [vmem:[#allocation5 + $0xd0] sm:$0xff]
        %v803 = vld [vmem:[#allocation5 + $0xd8] sm:$0xff]
        %v804 = vld [vmem:[#allocation5 + $0xe0] sm:$0xff]
        %v805 = vld [vmem:[#allocation5 + $0xe8] sm:$0xff]
        %v806 = vld [vmem:[#allocation5 + $0xf0] sm:$0xff]
        %v807 = vld [vmem:[#allocation5 + $0xf8] sm:$0xff]
        %v808 = vld [vmem:[#allocation5 + $0x100] sm:$0xff]
        %v809 = vld [vmem:[#allocation5 + $0x108] sm:$0xff]
        %v810 = vld [vmem:[#allocation5 + $0x110] sm:$0xff]
        %v811 = vld [vmem:[#allocation5 + $0x118] sm:$0xff]
        %v812 = vld [vmem:[#allocation5 + $0x120] sm:$0xff]
        %v813 = vld [vmem:[#allocation5 + $0x128] sm:$0xff]
        %v814 = vld [vmem:[#allocation5 + $0x130] sm:$0xff]
        %v815 = vld [vmem:[#allocation5 + $0x138] sm:$0xff]
        %v816 = vld [vmem:[#allocation5 + $0x140] sm:$0xff]
        %v817 = vld [vmem:[#allocation5 + $0x148] sm:$0xff]
        %v818 = vld [vmem:[#allocation5 + $0x150] sm:$0xff]
        %v819 = vld [vmem:[#allocation5 + $0x158] sm:$0xff]
        %v820 = vld [vmem:[#allocation5 + $0x160] sm:$0xff]
        %v821 = vld [vmem:[#allocation5 + $0x168] sm:$0xff]
        %v822 = vld [vmem:[#allocation5 + $0x170] sm:$0xff]
        %v823 = vld [vmem:[#allocation5 + $0x178] sm:$0xff]
        %v824 = vld [vmem:[#allocation5 + $0x180] sm:$0xff]
        %v825 = vld [vmem:[#allocation5 + $0x188] sm:$0xff]
        %v826 = vld [vmem:[#allocation5 + $0x190] sm:$0xff]
        %v827 = vld [vmem:[#allocation5 + $0x198] sm:$0xff]
        %v828 = vld [vmem:[#allocation5 + $0x1a0] sm:$0xff]
        %v829 = vld [vmem:[#allocation5 + $0x1a8] sm:$0xff]
        %v830 = vld [vmem:[#allocation5 + $0x1b0] sm:$0xff]
        %v831 = vld [vmem:[#allocation5 + $0x1b8] sm:$0xff]
        %v832 = vld [vmem:[#allocation5 + $0x1c0] sm:$0xff]
        %v833 = vld [vmem:[#allocation5 + $0x1c8] sm:$0xff]
        %v834 = vld [vmem:[#allocation5 + $0x1d0] sm:$0xff]
        %v835 = vld [vmem:[#allocation5 + $0x1d8] sm:$0xff]
        %v836 = vld [vmem:[#allocation5 + $0x1e0] sm:$0xff]
        %v837 = vld [vmem:[#allocation5 + $0x1e8] sm:$0xff]
        %v838 = vld [vmem:[#allocation5 + $0x1f0] sm:$0xff]
        %v839 = vld [vmem:[#allocation5 + $0x1f8] sm:$0xff]
        %v840 = vld [vmem:[#allocation5 + $0x200] sm:$0xff]
        %v841 = vld [vmem:[#allocation5 + $0x208] sm:$0xff]
        %v842 = vld [vmem:[#allocation5 + $0x210] sm:$0xff]
        %v843 = vld [vmem:[#allocation5 + $0x218] sm:$0xff]
        %v844 = vld [vmem:[#allocation5 + $0x220] sm:$0xff]
        %v845 = vld [vmem:[#allocation5 + $0x228] sm:$0xff]
        %v846 = vld [vmem:[#allocation5 + $0x230] sm:$0xff]
        %v847 = vld [vmem:[#allocation5 + $0x238] sm:$0xff]
        %v848 = vld [vmem:[#allocation5 + $0x240] sm:$0xff]
        %v849 = vld [vmem:[#allocation5 + $0x248] sm:$0xff]
        %v850 = vld [vmem:[#allocation5 + $0x250] sm:$0xff]
        %v851 = vld [vmem:[#allocation5 + $0x258] sm:$0xff]
        %v852 = vld [vmem:[#allocation5 + $0x260] sm:$0xff]
        %v853 = vld [vmem:[#allocation5 + $0x268] sm:$0xff]
        %v854 = vld [vmem:[#allocation5 + $0x270] sm:$0xff]
        %v855 = vld [vmem:[#allocation5 + $0x278] sm:$0xff]
        %v856 = vld [vmem:[#allocation5 + $0x280] sm:$0xff]
        %v857 = vld [vmem:[#allocation5 + $0x288] sm:$0xff]
        %v858 = vld [vmem:[#allocation5 + $0x290] sm:$0xff]
        %v859 = vld [vmem:[#allocation5 + $0x298] sm:$0xff]
        %v860 = vld [vmem:[#allocation5 + $0x2a0] sm:$0xff]
        %v861 = vld [vmem:[#allocation5 + $0x2a8] sm:$0xff]
        %v862 = vld [vmem:[#allocation5 + $0x2b0] sm:$0xff]
        %v863 = vld [vmem:[#allocation5 + $0x2b8] sm:$0xff]
        %v864 = vld [vmem:[#allocation5 + $0x2c0] sm:$0xff]
        %v865 = vld [vmem:[#allocation5 + $0x2c8] sm:$0xff]
        %v866 = vld [vmem:[#allocation5 + $0x2d0] sm:$0xff]
        %v867 = vld [vmem:[#allocation5 + $0x2d8] sm:$0xff]
        %v868 = vld [vmem:[#allocation5 + $0x2e0] sm:$0xff]
        %v869 = vld [vmem:[#allocation5 + $0x2e8] sm:$0xff]
        %v870 = vld [vmem:[#allocation5 + $0x2f0] sm:$0xff]
        %v871 = vld [vmem:[#allocation5 + $0x2f8] sm:$0xff]
        %v872 = vld [vmem:[#allocation7] sm:$0x3f]
        %v874 = vperm.slane %v872, 0
        %v875 = vperm.slane %v872, 1
        %v876 = vperm.slane %v872, 2
        %v877 = vperm.slane %v872, 3
        %v878 = vperm.slane %v872, 4
        %v879 = vperm.slane %v872, 5
        %v982 = vunpack.c.l.b16 %v776
        %v983 = vunpack.c.h.b16 %v776
        %v984 = vunpack.c.l.b16 %v777
        %v985 = vunpack.c.h.b16 %v777
        %v986 = vunpack.c.l.b16 %v778
        %v987 = vunpack.c.h.b16 %v778
        %v988 = vunpack.c.l.b16 %v779
        %v989 = vunpack.c.h.b16 %v779
        %v990 = vunpack.c.l.b16 %v780
        %v991 = vunpack.c.h.b16 %v780
        %v992 = vunpack.c.l.b16 %v781
        %v993 = vunpack.c.h.b16 %v781
        %v994 = vunpack.c.l.b16 %v782
        %v995 = vunpack.c.h.b16 %v782
        %v996 = vunpack.c.l.b16 %v783
        %v997 = vunpack.c.h.b16 %v783
        %v998 = vunpack.c.l.b16 %v784
        %v999 = vunpack.c.h.b16 %v784
        %v1000 = vunpack.c.l.b16 %v785
        %v1001 = vunpack.c.h.b16 %v785
        %v1002 = vunpack.c.l.b16 %v786
        %v1003 = vunpack.c.h.b16 %v786
        %v1004 = vunpack.c.l.b16 %v787
        %v1005 = vunpack.c.h.b16 %v787
        %v1006 = vunpack.c.l.b16 %v788
        %v1007 = vunpack.c.h.b16 %v788
        %v1008 = vunpack.c.l.b16 %v789
        %v1009 = vunpack.c.h.b16 %v789
        %v1010 = vunpack.c.l.b16 %v790
        %v1011 = vunpack.c.h.b16 %v790
        %v1012 = vunpack.c.l.b16 %v791
        %v1013 = vunpack.c.h.b16 %v791
        %v1014 = vunpack.c.l.b16 %v792
        %v1015 = vunpack.c.h.b16 %v792
        %v1016 = vunpack.c.l.b16 %v793
        %v1017 = vunpack.c.h.b16 %v793
        %v1018 = vunpack.c.l.b16 %v794
        %v1019 = vunpack.c.h.b16 %v794
        %v1020 = vunpack.c.l.b16 %v795
        %v1021 = vunpack.c.h.b16 %v795
        %v1022 = vunpack.c.l.b16 %v796
        %v1023 = vunpack.c.h.b16 %v796
        %v1024 = vunpack.c.l.b16 %v797
        %v1025 = vunpack.c.h.b16 %v797
        %v1026 = vunpack.c.l.b16 %v798
        %v1027 = vunpack.c.h.b16 %v798
        %v1028 = vunpack.c.l.b16 %v799
        %v1029 = vunpack.c.h.b16 %v799
        %v1030 = vunpack.c.l.b16 %v800
        %v1031 = vunpack.c.h.b16 %v800
        %v1032 = vunpack.c.l.b16 %v801
        %v1033 = vunpack.c.h.b16 %v801
        %v1034 = vunpack.c.l.b16 %v802
        %v1035 = vunpack.c.h.b16 %v802
        %v1036 = vunpack.c.l.b16 %v803
        %v1037 = vunpack.c.h.b16 %v803
        %v1038 = vunpack.c.l.b16 %v804
        %v1039 = vunpack.c.h.b16 %v804
        %v1040 = vunpack.c.l.b16 %v805
        %v1041 = vunpack.c.h.b16 %v805
        %v1042 = vunpack.c.l.b16 %v806
        %v1043 = vunpack.c.h.b16 %v806
        %v1044 = vunpack.c.l.b16 %v807
        %v1045 = vunpack.c.h.b16 %v807
        %v1046 = vunpack.c.l.b16 %v808
        %v1047 = vunpack.c.h.b16 %v808
        %v1048 = vunpack.c.l.b16 %v809
        %v1049 = vunpack.c.h.b16 %v809
        %v1050 = vunpack.c.l.b16 %v810
        %v1051 = vunpack.c.h.b16 %v810
        %v1052 = vunpack.c.l.b16 %v811
        %v1053 = vunpack.c.h.b16 %v811
        %v1054 = vunpack.c.l.b16 %v812
        %v1055 = vunpack.c.h.b16 %v812
        %v1056 = vunpack.c.l.b16 %v813
        %v1057 = vunpack.c.h.b16 %v813
        %v1058 = vunpack.c.l.b16 %v814
        %v1059 = vunpack.c.h.b16 %v814
        %v1060 = vunpack.c.l.b16 %v815
        %v1061 = vunpack.c.h.b16 %v815
        %v1062 = vunpack.c.l.b16 %v816
        %v1063 = vunpack.c.h.b16 %v816
        %v1064 = vunpack.c.l.b16 %v817
        %v1065 = vunpack.c.h.b16 %v817
        %v1066 = vunpack.c.l.b16 %v818
        %v1067 = vunpack.c.h.b16 %v818
        %v1068 = vunpack.c.l.b16 %v819
        %v1069 = vunpack.c.h.b16 %v819
        %v1070 = vunpack.c.l.b16 %v820
        %v1071 = vunpack.c.h.b16 %v820
        %v1072 = vunpack.c.l.b16 %v821
        %v1073 = vunpack.c.h.b16 %v821
        %v1074 = vunpack.c.l.b16 %v822
        %v1075 = vunpack.c.h.b16 %v822
        %v1076 = vunpack.c.l.b16 %v823
        %v1077 = vunpack.c.h.b16 %v823
        %v1078 = vunpack.c.l.b16 %v824
        %v1079 = vunpack.c.h.b16 %v824
        %v1080 = vunpack.c.l.b16 %v825
        %v1081 = vunpack.c.h.b16 %v825
        %v1082 = vunpack.c.l.b16 %v826
        %v1083 = vunpack.c.h.b16 %v826
        %v1084 = vunpack.c.l.b16 %v827
        %v1085 = vunpack.c.h.b16 %v827
        %v1086 = vunpack.c.l.b16 %v828
        %v1087 = vunpack.c.h.b16 %v828
        %v1088 = vunpack.c.l.b16 %v829
        %v1089 = vunpack.c.h.b16 %v829
        %v1090 = vunpack.c.l.b16 %v830
        %v1091 = vunpack.c.h.b16 %v830
        %v1092 = vunpack.c.l.b16 %v831
        %v1093 = vunpack.c.h.b16 %v831
        %v1094 = vunpack.c.l.b16 %v832
        %v1095 = vunpack.c.h.b16 %v832
        %v1096 = vunpack.c.l.b16 %v833
        %v1097 = vunpack.c.h.b16 %v833
        %v1098 = vunpack.c.l.b16 %v834
        %v1099 = vunpack.c.h.b16 %v834
        %v1100 = vunpack.c.l.b16 %v835
        %v1101 = vunpack.c.h.b16 %v835
        %v1102 = vunpack.c.l.b16 %v836
        %v1103 = vunpack.c.h.b16 %v836
        %v1104 = vunpack.c.l.b16 %v837
        %v1105 = vunpack.c.h.b16 %v837
        %v1106 = vunpack.c.l.b16 %v838
        %v1107 = vunpack.c.h.b16 %v838
        %v1108 = vunpack.c.l.b16 %v839
        %v1109 = vunpack.c.h.b16 %v839
        %v1110 = vunpack.c.l.b16 %v840
        %v1111 = vunpack.c.h.b16 %v840
        %v1112 = vunpack.c.l.b16 %v841
        %v1113 = vunpack.c.h.b16 %v841
        %v1114 = vunpack.c.l.b16 %v842
        %v1115 = vunpack.c.h.b16 %v842
        %v1116 = vunpack.c.l.b16 %v843
        %v1117 = vunpack.c.h.b16 %v843
        %v1118 = vunpack.c.l.b16 %v844
        %v1119 = vunpack.c.h.b16 %v844
        %v1120 = vunpack.c.l.b16 %v845
        %v1121 = vunpack.c.h.b16 %v845
        %v1122 = vunpack.c.l.b16 %v846
        %v1123 = vunpack.c.h.b16 %v846
        %v1124 = vunpack.c.l.b16 %v847
        %v1125 = vunpack.c.h.b16 %v847
        %v1126 = vunpack.c.l.b16 %v848
        %v1127 = vunpack.c.h.b16 %v848
        %v1128 = vunpack.c.l.b16 %v849
        %v1129 = vunpack.c.h.b16 %v849
        %v1130 = vunpack.c.l.b16 %v850
        %v1131 = vunpack.c.h.b16 %v850
        %v1132 = vunpack.c.l.b16 %v851
        %v1133 = vunpack.c.h.b16 %v851
        %v1134 = vunpack.c.l.b16 %v852
        %v1135 = vunpack.c.h.b16 %v852
        %v1136 = vunpack.c.l.b16 %v853
        %v1137 = vunpack.c.h.b16 %v853
        %v1138 = vunpack.c.l.b16 %v854
        %v1139 = vunpack.c.h.b16 %v854
        %v1140 = vunpack.c.l.b16 %v855
        %v1141 = vunpack.c.h.b16 %v855
        %v1142 = vunpack.c.l.b16 %v856
        %v1143 = vunpack.c.h.b16 %v856
        %v1144 = vunpack.c.l.b16 %v857
        %v1145 = vunpack.c.h.b16 %v857
        %v1146 = vunpack.c.l.b16 %v858
        %v1147 = vunpack.c.h.b16 %v858
        %v1148 = vunpack.c.l.b16 %v859
        %v1149 = vunpack.c.h.b16 %v859
        %v1150 = vunpack.c.l.b16 %v860
        %v1151 = vunpack.c.h.b16 %v860
        %v1152 = vunpack.c.l.b16 %v861
        %v1153 = vunpack.c.h.b16 %v861
        %v1154 = vunpack.c.l.b16 %v862
        %v1155 = vunpack.c.h.b16 %v862
        %v1156 = vunpack.c.l.b16 %v863
        %v1157 = vunpack.c.h.b16 %v863
        %v1158 = vunpack.c.l.b16 %v864
        %v1159 = vunpack.c.h.b16 %v864
        %v1160 = vunpack.c.l.b16 %v865
        %v1161 = vunpack.c.h.b16 %v865
        %v1162 = vunpack.c.l.b16 %v866
        %v1163 = vunpack.c.h.b16 %v866
        %v1164 = vunpack.c.l.b16 %v867
        %v1165 = vunpack.c.h.b16 %v867
        %v1166 = vunpack.c.l.b16 %v868
        %v1167 = vunpack.c.h.b16 %v868
        %v1168 = vunpack.c.l.b16 %v869
        %v1169 = vunpack.c.h.b16 %v869
        %v1170 = vunpack.c.l.b16 %v870
        %v1171 = vunpack.c.h.b16 %v870
        %v1172 = vunpack.c.l.b16 %v871
        %v1173 = vunpack.c.h.b16 %v871
        %v1174 = vpack.c.b16 %v988, %v982
        %v1175 = vpack.c.b16 %v989, %v983
        %v1176 = vpack.c.b16 %v990, %v984
        %v1177 = vpack.c.b16 %v991, %v985
        %v1178 = vpack.c.b16 %v992, %v986
        %v1179 = vpack.c.b16 %v993, %v987
        %v1180 = vpack.c.b16 %v1000, %v994
        %v1181 = vpack.c.b16 %v1001, %v995
        %v1182 = vpack.c.b16 %v1002, %v996
        %v1183 = vpack.c.b16 %v1003, %v997
        %v1184 = vpack.c.b16 %v1004, %v998
        %v1185 = vpack.c.b16 %v1005, %v999
        %v1186 = vpack.c.b16 %v1012, %v1006
        %v1187 = vpack.c.b16 %v1013, %v1007
        %v1188 = vpack.c.b16 %v1014, %v1008
        %v1189 = vpack.c.b16 %v1015, %v1009
        %v1190 = vpack.c.b16 %v1016, %v1010
        %v1191 = vpack.c.b16 %v1017, %v1011
        %v1192 = vpack.c.b16 %v1024, %v1018
        %v1193 = vpack.c.b16 %v1025, %v1019
        %v1194 = vpack.c.b16 %v1026, %v1020
        %v1195 = vpack.c.b16 %v1027, %v1021
        %v1196 = vpack.c.b16 %v1028, %v1022
        %v1197 = vpack.c.b16 %v1029, %v1023
        %v1198 = vpack.c.b16 %v1036, %v1030
        %v1199 = vpack.c.b16 %v1037, %v1031
        %v1200 = vpack.c.b16 %v1038, %v1032
        %v1201 = vpack.c.b16 %v1039, %v1033
        %v1202 = vpack.c.b16 %v1040, %v1034
        %v1203 = vpack.c.b16 %v1041, %v1035
        %v1204 = vpack.c.b16 %v1048, %v1042
        %v1205 = vpack.c.b16 %v1049, %v1043
        %v1206 = vpack.c.b16 %v1050, %v1044
        %v1207 = vpack.c.b16 %v1051, %v1045
        %v1208 = vpack.c.b16 %v1052, %v1046
        %v1209 = vpack.c.b16 %v1053, %v1047
        %v1210 = vpack.c.b16 %v1060, %v1054
        %v1211 = vpack.c.b16 %v1061, %v1055
        %v1212 = vpack.c.b16 %v1062, %v1056
        %v1213 = vpack.c.b16 %v1063, %v1057
        %v1214 = vpack.c.b16 %v1064, %v1058
        %v1215 = vpack.c.b16 %v1065, %v1059
        %v1216 = vpack.c.b16 %v1072, %v1066
        %v1217 = vpack.c.b16 %v1073, %v1067
        %v1218 = vpack.c.b16 %v1074, %v1068
        %v1219 = vpack.c.b16 %v1075, %v1069
        %v1220 = vpack.c.b16 %v1076, %v1070
        %v1221 = vpack.c.b16 %v1077, %v1071
        %v1222 = vpack.c.b16 %v1084, %v1078
        %v1223 = vpack.c.b16 %v1085, %v1079
        %v1224 = vpack.c.b16 %v1086, %v1080
        %v1225 = vpack.c.b16 %v1087, %v1081
        %v1226 = vpack.c.b16 %v1088, %v1082
        %v1227 = vpack.c.b16 %v1089, %v1083
        %v1228 = vpack.c.b16 %v1096, %v1090
        %v1229 = vpack.c.b16 %v1097, %v1091
        %v1230 = vpack.c.b16 %v1098, %v1092
        %v1231 = vpack.c.b16 %v1099, %v1093
        %v1232 = vpack.c.b16 %v1100, %v1094
        %v1233 = vpack.c.b16 %v1101, %v1095
        %v1234 = vpack.c.b16 %v1108, %v1102
        %v1235 = vpack.c.b16 %v1109, %v1103
        %v1236 = vpack.c.b16 %v1110, %v1104
        %v1237 = vpack.c.b16 %v1111, %v1105
        %v1238 = vpack.c.b16 %v1112, %v1106
        %v1239 = vpack.c.b16 %v1113, %v1107
        %v1240 = vpack.c.b16 %v1120, %v1114
        %v1241 = vpack.c.b16 %v1121, %v1115
        %v1242 = vpack.c.b16 %v1122, %v1116
        %v1243 = vpack.c.b16 %v1123, %v1117
        %v1244 = vpack.c.b16 %v1124, %v1118
        %v1245 = vpack.c.b16 %v1125, %v1119
        %v1246 = vpack.c.b16 %v1132, %v1126
        %v1247 = vpack.c.b16 %v1133, %v1127
        %v1248 = vpack.c.b16 %v1134, %v1128
        %v1249 = vpack.c.b16 %v1135, %v1129
        %v1250 = vpack.c.b16 %v1136, %v1130
        %v1251 = vpack.c.b16 %v1137, %v1131
        %v1252 = vpack.c.b16 %v1144, %v1138
        %v1253 = vpack.c.b16 %v1145, %v1139
        %v1254 = vpack.c.b16 %v1146, %v1140
        %v1255 = vpack.c.b16 %v1147, %v1141
        %v1256 = vpack.c.b16 %v1148, %v1142
        %v1257 = vpack.c.b16 %v1149, %v1143
        %v1258 = vpack.c.b16 %v1156, %v1150
        %v1259 = vpack.c.b16 %v1157, %v1151
        %v1260 = vpack.c.b16 %v1158, %v1152
        %v1261 = vpack.c.b16 %v1159, %v1153
        %v1262 = vpack.c.b16 %v1160, %v1154
        %v1263 = vpack.c.b16 %v1161, %v1155
        %v1264 = vpack.c.b16 %v1168, %v1162
        %v1265 = vpack.c.b16 %v1169, %v1163
        %v1266 = vpack.c.b16 %v1170, %v1164
        %v1267 = vpack.c.b16 %v1171, %v1165
        %v1268 = vpack.c.b16 %v1172, %v1166
        %v1269 = vpack.c.b16 %v1173, %v1167
        %1366 = vmatpush.bf16.msra.mxu0 %v1216
        %1367 = vmatpush.bf16.msra.mxu0 %v1210
        %1368 = vmatpush.bf16.msra.mxu0 %v1204
        %1369 = vmatpush.bf16.msra.mxu0 %v1198
        %1370 = vmatpush.bf16.msra.mxu0 %v1192
        %1371 = vmatpush.bf16.msra.mxu0 %v1186
        %1372 = vmatpush.bf16.msra.mxu0 %v1180
        %1373 = vmatpush.bf16.msra.mxu0 %v1174
        %1374 = vmatmul.bf16.gmra.mxu0 %v760
        %v1375 = vpop.f32.mrf.mxu0
        %v1376 = vadd.f32 %v874, %v1375
        %v1377 = vpop.f32.mrf.mxu0
        %v1378 = vadd.f32 %v874, %v1377
        %1379 = vmatmul.bf16.gmra.mxu0 %v762
        %v1380 = vpop.f32.mrf.mxu0
        %v1381 = vadd.f32 %v874, %v1380
        %v1382 = vpop.f32.mrf.mxu0
        %v1383 = vadd.f32 %v874, %v1382
        %1384 = vmatmul.bf16.gmra.mxu0 %v764
        %v1385 = vpop.f32.mrf.mxu0
        %v1386 = vadd.f32 %v874, %v1385
        %v1387 = vpop.f32.mrf.mxu0
        %v1388 = vadd.f32 %v874, %v1387
        %1389 = vmatmul.bf16.gmra.mxu0 %v766
        %v1390 = vpop.f32.mrf.mxu0
        %v1391 = vadd.f32 %v874, %v1390
        %v1392 = vpop.f32.mrf.mxu0
        %v1393 = vadd.f32 %v874, %v1392
        %1394 = vmatmul.bf16.gmra.mxu0 %v768
        %v1395 = vpop.f32.mrf.mxu0
        %v1396 = vadd.f32 %v874, %v1395
        %v1397 = vpop.f32.mrf.mxu0
        %v1398 = vadd.f32 %v874, %v1397
        %1399 = vmatmul.bf16.gmra.mxu0 %v770
        %v1400 = vpop.f32.mrf.mxu0
        %v1401 = vadd.f32 %v874, %v1400
        %v1402 = vpop.f32.mrf.mxu0
        %v1403 = vadd.f32 %v874, %v1402
        %1404 = vmatmul.bf16.gmra.mxu0 %v772
        %v1405 = vpop.f32.mrf.mxu0
        %v1406 = vadd.f32 %v874, %v1405
        %v1407 = vpop.f32.mrf.mxu0
        %v1408 = vadd.f32 %v874, %v1407
        %1409 = vmatmul.bf16.gmra.mxu0 %v774
        %v1410 = vpop.f32.mrf.mxu0
        %v1411 = vadd.f32 %v874, %v1410
        %v1412 = vpop.f32.mrf.mxu0
        %v1413 = vadd.f32 %v874, %v1412
        %1414 = vdwg.mxu0
        %1415 = vmatpush.bf16.msra.mxu0 %v1264
        %1416 = vmatpush.bf16.msra.mxu0 %v1258
        %1417 = vmatpush.bf16.msra.mxu0 %v1252
        %1418 = vmatpush.bf16.msra.mxu0 %v1246
        %1419 = vmatpush.bf16.msra.mxu0 %v1240
        %1420 = vmatpush.bf16.msra.mxu0 %v1234
        %1421 = vmatpush.bf16.msra.mxu0 %v1228
        %1422 = vmatpush.bf16.msra.mxu0 %v1222
        %1423 = vmatmul.bf16.gmra.mxu0 %v761
        %v1424 = vpop.f32.mrf.mxu0
        %v1425 = vadd.f32 %v1376, %v1424
        %v1426 = vpop.f32.mrf.mxu0
        %v1427 = vadd.f32 %v1378, %v1426
        %1428 = vmatmul.bf16.gmra.mxu0 %v763
        %v1429 = vpop.f32.mrf.mxu0
        %v1430 = vadd.f32 %v1381, %v1429
        %v1431 = vpop.f32.mrf.mxu0
        %v1432 = vadd.f32 %v1383, %v1431
        %1433 = vmatmul.bf16.gmra.mxu0 %v765
        %v1434 = vpop.f32.mrf.mxu0
        %v1435 = vadd.f32 %v1386, %v1434
        %v1436 = vpop.f32.mrf.mxu0
        %v1437 = vadd.f32 %v1388, %v1436
        %1438 = vmatmul.bf16.gmra.mxu0 %v767
        %v1439 = vpop.f32.mrf.mxu0
        %v1440 = vadd.f32 %v1391, %v1439
        %v1441 = vpop.f32.mrf.mxu0
        %v1442 = vadd.f32 %v1393, %v1441
        %1443 = vmatmul.bf16.gmra.mxu0 %v769
        %v1444 = vpop.f32.mrf.mxu0
        %v1445 = vadd.f32 %v1396, %v1444
        %v1446 = vpop.f32.mrf.mxu0
        %v1447 = vadd.f32 %v1398, %v1446
        %1448 = vmatmul.bf16.gmra.mxu0 %v771
        %v1449 = vpop.f32.mrf.mxu0
        %v1450 = vadd.f32 %v1401, %v1449
        %v1451 = vpop.f32.mrf.mxu0
        %v1452 = vadd.f32 %v1403, %v1451
        %1453 = vmatmul.bf16.gmra.mxu0 %v773
        %v1454 = vpop.f32.mrf.mxu0
        %v1455 = vadd.f32 %v1406, %v1454
        %v1456 = vpop.f32.mrf.mxu0
        %v1457 = vadd.f32 %v1408, %v1456
        %1458 = vmatmul.bf16.gmra.mxu0 %v775
        %v1459 = vpop.f32.mrf.mxu0
        %v1460 = vadd.f32 %v1411, %v1459
        %v1461 = vpop.f32.mrf.mxu0
        %v1462 = vadd.f32 %v1413, %v1461
        %1463 = vdwg.mxu0
        %1464 = vmatpush.bf16.msra.mxu0 %v1217
        %1465 = vmatpush.bf16.msra.mxu0 %v1211
        %1466 = vmatpush.bf16.msra.mxu0 %v1205
        %1467 = vmatpush.bf16.msra.mxu0 %v1199
        %1468 = vmatpush.bf16.msra.mxu0 %v1193
        %1469 = vmatpush.bf16.msra.mxu0 %v1187
        %1470 = vmatpush.bf16.msra.mxu0 %v1181
        %1471 = vmatpush.bf16.msra.mxu0 %v1175
        %1472 = vmatmul.bf16.gmra.mxu0 %v760
        %v1473 = vpop.f32.mrf.mxu0
        %v1474 = vadd.f32 %v875, %v1473
        %v1475 = vpop.f32.mrf.mxu0
        %v1476 = vadd.f32 %v875, %v1475
        %1477 = vmatmul.bf16.gmra.mxu0 %v762
        %v1478 = vpop.f32.mrf.mxu0
        %v1479 = vadd.f32 %v875, %v1478
        %v1480 = vpop.f32.mrf.mxu0
        %v1481 = vadd.f32 %v875, %v1480
        %1482 = vmatmul.bf16.gmra.mxu0 %v764
        %v1483 = vpop.f32.mrf.mxu0
        %v1484 = vadd.f32 %v875, %v1483
        %v1485 = vpop.f32.mrf.mxu0
        %v1486 = vadd.f32 %v875, %v1485
        %1487 = vmatmul.bf16.gmra.mxu0 %v766
        %v1488 = vpop.f32.mrf.mxu0
        %v1489 = vadd.f32 %v875, %v1488
        %v1490 = vpop.f32.mrf.mxu0
        %v1491 = vadd.f32 %v875, %v1490
        %1492 = vmatmul.bf16.gmra.mxu0 %v768
        %v1493 = vpop.f32.mrf.mxu0
        %v1494 = vadd.f32 %v875, %v1493
        %v1495 = vpop.f32.mrf.mxu0
        %v1496 = vadd.f32 %v875, %v1495
        %1497 = vmatmul.bf16.gmra.mxu0 %v770
        %v1498 = vpop.f32.mrf.mxu0
        %v1499 = vadd.f32 %v875, %v1498
        %v1500 = vpop.f32.mrf.mxu0
        %v1501 = vadd.f32 %v875, %v1500
        %1502 = vmatmul.bf16.gmra.mxu0 %v772
        %v1503 = vpop.f32.mrf.mxu0
        %v1504 = vadd.f32 %v875, %v1503
        %v1505 = vpop.f32.mrf.mxu0
        %v1506 = vadd.f32 %v875, %v1505
        %1507 = vmatmul.bf16.gmra.mxu0 %v774
        %v1508 = vpop.f32.mrf.mxu0
        %v1509 = vadd.f32 %v875, %v1508
        %v1510 = vpop.f32.mrf.mxu0
        %v1511 = vadd.f32 %v875, %v1510
        %1512 = vdwg.mxu0
        %1513 = vmatpush.bf16.msra.mxu0 %v1265
        %1514 = vmatpush.bf16.msra.mxu0 %v1259
        %1515 = vmatpush.bf16.msra.mxu0 %v1253
        %1516 = vmatpush.bf16.msra.mxu0 %v1247
        %1517 = vmatpush.bf16.msra.mxu0 %v1241
        %1518 = vmatpush.bf16.msra.mxu0 %v1235
        %1519 = vmatpush.bf16.msra.mxu0 %v1229
        %1520 = vmatpush.bf16.msra.mxu0 %v1223
        %1521 = vmatmul.bf16.gmra.mxu0 %v761
        %v1522 = vpop.f32.mrf.mxu0
        %v1523 = vadd.f32 %v1474, %v1522
        %v1524 = vpop.f32.mrf.mxu0
        %v1525 = vadd.f32 %v1476, %v1524
        %1526 = vmatmul.bf16.gmra.mxu0 %v763
        %v1527 = vpop.f32.mrf.mxu0
        %v1528 = vadd.f32 %v1479, %v1527
        %v1529 = vpop.f32.mrf.mxu0
        %v1530 = vadd.f32 %v1481, %v1529
        %1531 = vmatmul.bf16.gmra.mxu0 %v765
        %v1532 = vpop.f32.mrf.mxu0
        %v1533 = vadd.f32 %v1484, %v1532
        %v1534 = vpop.f32.mrf.mxu0
        %v1535 = vadd.f32 %v1486, %v1534
        %1536 = vmatmul.bf16.gmra.mxu0 %v767
        %v1537 = vpop.f32.mrf.mxu0
        %v1538 = vadd.f32 %v1489, %v1537
        %v1539 = vpop.f32.mrf.mxu0
        %v1540 = vadd.f32 %v1491, %v1539
        %1541 = vmatmul.bf16.gmra.mxu0 %v769
        %v1542 = vpop.f32.mrf.mxu0
        %v1543 = vadd.f32 %v1494, %v1542
        %v1544 = vpop.f32.mrf.mxu0
        %v1545 = vadd.f32 %v1496, %v1544
        %1546 = vmatmul.bf16.gmra.mxu0 %v771
        %v1547 = vpop.f32.mrf.mxu0
        %v1548 = vadd.f32 %v1499, %v1547
        %v1549 = vpop.f32.mrf.mxu0
        %v1550 = vadd.f32 %v1501, %v1549
        %1551 = vmatmul.bf16.gmra.mxu0 %v773
        %v1552 = vpop.f32.mrf.mxu0
        %v1553 = vadd.f32 %v1504, %v1552
        %v1554 = vpop.f32.mrf.mxu0
        %v1555 = vadd.f32 %v1506, %v1554
        %1556 = vmatmul.bf16.gmra.mxu0 %v775
        %v1557 = vpop.f32.mrf.mxu0
        %v1558 = vadd.f32 %v1509, %v1557
        %v1559 = vpop.f32.mrf.mxu0
        %v1560 = vadd.f32 %v1511, %v1559
        %1561 = vdwg.mxu0
        %1562 = vmatpush.bf16.msra.mxu0 %v1218
        %1563 = vmatpush.bf16.msra.mxu0 %v1212
        %1564 = vmatpush.bf16.msra.mxu0 %v1206
        %1565 = vmatpush.bf16.msra.mxu0 %v1200
        %1566 = vmatpush.bf16.msra.mxu0 %v1194
        %1567 = vmatpush.bf16.msra.mxu0 %v1188
        %1568 = vmatpush.bf16.msra.mxu0 %v1182
        %1569 = vmatpush.bf16.msra.mxu0 %v1176
        %1570 = vmatmul.bf16.gmra.mxu0 %v760
        %v1571 = vpop.f32.mrf.mxu0
        %v1572 = vadd.f32 %v876, %v1571
        %v1573 = vpop.f32.mrf.mxu0
        %v1574 = vadd.f32 %v876, %v1573
        %1575 = vmatmul.bf16.gmra.mxu0 %v762
        %v1576 = vpop.f32.mrf.mxu0
        %v1577 = vadd.f32 %v876, %v1576
        %v1578 = vpop.f32.mrf.mxu0
        %v1579 = vadd.f32 %v876, %v1578
        %1580 = vmatmul.bf16.gmra.mxu0 %v764
        %v1581 = vpop.f32.mrf.mxu0
        %v1582 = vadd.f32 %v876, %v1581
        %v1583 = vpop.f32.mrf.mxu0
        %v1584 = vadd.f32 %v876, %v1583
        %1585 = vmatmul.bf16.gmra.mxu0 %v766
        %v1586 = vpop.f32.mrf.mxu0
        %v1587 = vadd.f32 %v876, %v1586
        %v1588 = vpop.f32.mrf.mxu0
        %v1589 = vadd.f32 %v876, %v1588
        %1590 = vmatmul.bf16.gmra.mxu0 %v768
        %v1591 = vpop.f32.mrf.mxu0
        %v1592 = vadd.f32 %v876, %v1591
        %v1593 = vpop.f32.mrf.mxu0
        %v1594 = vadd.f32 %v876, %v1593
        %1595 = vmatmul.bf16.gmra.mxu0 %v770
        %v1596 = vpop.f32.mrf.mxu0
        %v1597 = vadd.f32 %v876, %v1596
        %v1598 = vpop.f32.mrf.mxu0
        %v1599 = vadd.f32 %v876, %v1598
        %1600 = vmatmul.bf16.gmra.mxu0 %v772
        %v1601 = vpop.f32.mrf.mxu0
        %v1602 = vadd.f32 %v876, %v1601
        %v1603 = vpop.f32.mrf.mxu0
        %v1604 = vadd.f32 %v876, %v1603
        %1605 = vmatmul.bf16.gmra.mxu0 %v774
        %v1606 = vpop.f32.mrf.mxu0
        %v1607 = vadd.f32 %v876, %v1606
        %v1608 = vpop.f32.mrf.mxu0
        %v1609 = vadd.f32 %v876, %v1608
        %1610 = vdwg.mxu0
        %1611 = vmatpush.bf16.msra.mxu0 %v1266
        %1612 = vmatpush.bf16.msra.mxu0 %v1260
        %1613 = vmatpush.bf16.msra.mxu0 %v1254
        %1614 = vmatpush.bf16.msra.mxu0 %v1248
        %1615 = vmatpush.bf16.msra.mxu0 %v1242
        %1616 = vmatpush.bf16.msra.mxu0 %v1236
        %1617 = vmatpush.bf16.msra.mxu0 %v1230
        %1618 = vmatpush.bf16.msra.mxu0 %v1224
        %1619 = vmatmul.bf16.gmra.mxu0 %v761
        %v1620 = vpop.f32.mrf.mxu0
        %v1621 = vadd.f32 %v1572, %v1620
        %v1622 = vpop.f32.mrf.mxu0
        %v1623 = vadd.f32 %v1574, %v1622
        %1624 = vmatmul.bf16.gmra.mxu0 %v763
        %v1625 = vpop.f32.mrf.mxu0
        %v1626 = vadd.f32 %v1577, %v1625
        %v1627 = vpop.f32.mrf.mxu0
        %v1628 = vadd.f32 %v1579, %v1627
        %1629 = vmatmul.bf16.gmra.mxu0 %v765
        %v1630 = vpop.f32.mrf.mxu0
        %v1631 = vadd.f32 %v1582, %v1630
        %v1632 = vpop.f32.mrf.mxu0
        %v1633 = vadd.f32 %v1584, %v1632
        %1634 = vmatmul.bf16.gmra.mxu0 %v767
        %v1635 = vpop.f32.mrf.mxu0
        %v1636 = vadd.f32 %v1587, %v1635
        %v1637 = vpop.f32.mrf.mxu0
        %v1638 = vadd.f32 %v1589, %v1637
        %1639 = vmatmul.bf16.gmra.mxu0 %v769
        %v1640 = vpop.f32.mrf.mxu0
        %v1641 = vadd.f32 %v1592, %v1640
        %v1642 = vpop.f32.mrf.mxu0
        %v1643 = vadd.f32 %v1594, %v1642
        %1644 = vmatmul.bf16.gmra.mxu0 %v771
        %v1645 = vpop.f32.mrf.mxu0
        %v1646 = vadd.f32 %v1597, %v1645
        %v1647 = vpop.f32.mrf.mxu0
        %v1648 = vadd.f32 %v1599, %v1647
        %1649 = vmatmul.bf16.gmra.mxu0 %v773
        %v1650 = vpop.f32.mrf.mxu0
        %v1651 = vadd.f32 %v1602, %v1650
        %v1652 = vpop.f32.mrf.mxu0
        %v1653 = vadd.f32 %v1604, %v1652
        %1654 = vmatmul.bf16.gmra.mxu0 %v775
        %v1655 = vpop.f32.mrf.mxu0
        %v1656 = vadd.f32 %v1607, %v1655
        %v1657 = vpop.f32.mrf.mxu0
        %v1658 = vadd.f32 %v1609, %v1657
        %1659 = vdwg.mxu0
        %1660 = vmatpush.bf16.msra.mxu0 %v1219
        %1661 = vmatpush.bf16.msra.mxu0 %v1213
        %1662 = vmatpush.bf16.msra.mxu0 %v1207
        %1663 = vmatpush.bf16.msra.mxu0 %v1201
        %1664 = vmatpush.bf16.msra.mxu0 %v1195
        %1665 = vmatpush.bf16.msra.mxu0 %v1189
        %1666 = vmatpush.bf16.msra.mxu0 %v1183
        %1667 = vmatpush.bf16.msra.mxu0 %v1177
        %1668 = vmatmul.bf16.gmra.mxu0 %v760
        %v1669 = vpop.f32.mrf.mxu0
        %v1670 = vadd.f32 %v877, %v1669
        %v1671 = vpop.f32.mrf.mxu0
        %v1672 = vadd.f32 %v877, %v1671
        %1673 = vmatmul.bf16.gmra.mxu0 %v762
        %v1674 = vpop.f32.mrf.mxu0
        %v1675 = vadd.f32 %v877, %v1674
        %v1676 = vpop.f32.mrf.mxu0
        %v1677 = vadd.f32 %v877, %v1676
        %1678 = vmatmul.bf16.gmra.mxu0 %v764
        %v1679 = vpop.f32.mrf.mxu0
        %v1680 = vadd.f32 %v877, %v1679
        %v1681 = vpop.f32.mrf.mxu0
        %v1682 = vadd.f32 %v877, %v1681
        %1683 = vmatmul.bf16.gmra.mxu0 %v766
        %v1684 = vpop.f32.mrf.mxu0
        %v1685 = vadd.f32 %v877, %v1684
        %v1686 = vpop.f32.mrf.mxu0
        %v1687 = vadd.f32 %v877, %v1686
        %1688 = vmatmul.bf16.gmra.mxu0 %v768
        %v1689 = vpop.f32.mrf.mxu0
        %v1690 = vadd.f32 %v877, %v1689
        %v1691 = vpop.f32.mrf.mxu0
        %v1692 = vadd.f32 %v877, %v1691
        %1693 = vmatmul.bf16.gmra.mxu0 %v770
        %v1694 = vpop.f32.mrf.mxu0
        %v1695 = vadd.f32 %v877, %v1694
        %v1696 = vpop.f32.mrf.mxu0
        %v1697 = vadd.f32 %v877, %v1696
        %1698 = vmatmul.bf16.gmra.mxu0 %v772
        %v1699 = vpop.f32.mrf.mxu0
        %v1700 = vadd.f32 %v877, %v1699
        %v1701 = vpop.f32.mrf.mxu0
        %v1702 = vadd.f32 %v877, %v1701
        %1703 = vmatmul.bf16.gmra.mxu0 %v774
        %v1704 = vpop.f32.mrf.mxu0
        %v1705 = vadd.f32 %v877, %v1704
        %v1706 = vpop.f32.mrf.mxu0
        %v1707 = vadd.f32 %v877, %v1706
        %1708 = vdwg.mxu0
        %1709 = vmatpush.bf16.msra.mxu0 %v1267
        %1710 = vmatpush.bf16.msra.mxu0 %v1261
        %1711 = vmatpush.bf16.msra.mxu0 %v1255
        %1712 = vmatpush.bf16.msra.mxu0 %v1249
        %1713 = vmatpush.bf16.msra.mxu0 %v1243
        %1714 = vmatpush.bf16.msra.mxu0 %v1237
        %1715 = vmatpush.bf16.msra.mxu0 %v1231
        %1716 = vmatpush.bf16.msra.mxu0 %v1225
        %1717 = vmatmul.bf16.gmra.mxu0 %v761
        %v1718 = vpop.f32.mrf.mxu0
        %v1719 = vadd.f32 %v1670, %v1718
        %v1720 = vpop.f32.mrf.mxu0
        %v1721 = vadd.f32 %v1672, %v1720
        %1722 = vmatmul.bf16.gmra.mxu0 %v763
        %v1723 = vpop.f32.mrf.mxu0
        %v1724 = vadd.f32 %v1675, %v1723
        %v1725 = vpop.f32.mrf.mxu0
        %v1726 = vadd.f32 %v1677, %v1725
        %1727 = vmatmul.bf16.gmra.mxu0 %v765
        %v1728 = vpop.f32.mrf.mxu0
        %v1729 = vadd.f32 %v1680, %v1728
        %v1730 = vpop.f32.mrf.mxu0
        %v1731 = vadd.f32 %v1682, %v1730
        %1732 = vmatmul.bf16.gmra.mxu0 %v767
        %v1733 = vpop.f32.mrf.mxu0
        %v1734 = vadd.f32 %v1685, %v1733
        %v1735 = vpop.f32.mrf.mxu0
        %v1736 = vadd.f32 %v1687, %v1735
        %1737 = vmatmul.bf16.gmra.mxu0 %v769
        %v1738 = vpop.f32.mrf.mxu0
        %v1739 = vadd.f32 %v1690, %v1738
        %v1740 = vpop.f32.mrf.mxu0
        %v1741 = vadd.f32 %v1692, %v1740
        %1742 = vmatmul.bf16.gmra.mxu0 %v771
        %v1743 = vpop.f32.mrf.mxu0
        %v1744 = vadd.f32 %v1695, %v1743
        %v1745 = vpop.f32.mrf.mxu0
        %v1746 = vadd.f32 %v1697, %v1745
        %1747 = vmatmul.bf16.gmra.mxu0 %v773
        %v1748 = vpop.f32.mrf.mxu0
        %v1749 = vadd.f32 %v1700, %v1748
        %v1750 = vpop.f32.mrf.mxu0
        %v1751 = vadd.f32 %v1702, %v1750
        %1752 = vmatmul.bf16.gmra.mxu0 %v775
        %v1753 = vpop.f32.mrf.mxu0
        %v1754 = vadd.f32 %v1705, %v1753
        %v1755 = vpop.f32.mrf.mxu0
        %v1756 = vadd.f32 %v1707, %v1755
        %1757 = vdwg.mxu0
        %1758 = vmatpush.bf16.msra.mxu0 %v1220
        %1759 = vmatpush.bf16.msra.mxu0 %v1214
        %1760 = vmatpush.bf16.msra.mxu0 %v1208
        %1761 = vmatpush.bf16.msra.mxu0 %v1202
        %1762 = vmatpush.bf16.msra.mxu0 %v1196
        %1763 = vmatpush.bf16.msra.mxu0 %v1190
        %1764 = vmatpush.bf16.msra.mxu0 %v1184
        %1765 = vmatpush.bf16.msra.mxu0 %v1178
        %1766 = vmatmul.bf16.gmra.mxu0 %v760
        %v1767 = vpop.f32.mrf.mxu0
        %v1768 = vadd.f32 %v878, %v1767
        %v1769 = vpop.f32.mrf.mxu0
        %v1770 = vadd.f32 %v878, %v1769
        %1771 = vmatmul.bf16.gmra.mxu0 %v762
        %v1772 = vpop.f32.mrf.mxu0
        %v1773 = vadd.f32 %v878, %v1772
        %v1774 = vpop.f32.mrf.mxu0
        %v1775 = vadd.f32 %v878, %v1774
        %1776 = vmatmul.bf16.gmra.mxu0 %v764
        %v1777 = vpop.f32.mrf.mxu0
        %v1778 = vadd.f32 %v878, %v1777
        %v1779 = vpop.f32.mrf.mxu0
        %v1780 = vadd.f32 %v878, %v1779
        %1781 = vmatmul.bf16.gmra.mxu0 %v766
        %v1782 = vpop.f32.mrf.mxu0
        %v1783 = vadd.f32 %v878, %v1782
        %v1784 = vpop.f32.mrf.mxu0
        %v1785 = vadd.f32 %v878, %v1784
        %1786 = vmatmul.bf16.gmra.mxu0 %v768
        %v1787 = vpop.f32.mrf.mxu0
        %v1788 = vadd.f32 %v878, %v1787
        %v1789 = vpop.f32.mrf.mxu0
        %v1790 = vadd.f32 %v878, %v1789
        %1791 = vmatmul.bf16.gmra.mxu0 %v770
        %v1792 = vpop.f32.mrf.mxu0
        %v1793 = vadd.f32 %v878, %v1792
        %v1794 = vpop.f32.mrf.mxu0
        %v1795 = vadd.f32 %v878, %v1794
        %1796 = vmatmul.bf16.gmra.mxu0 %v772
        %v1797 = vpop.f32.mrf.mxu0
        %v1798 = vadd.f32 %v878, %v1797
        %v1799 = vpop.f32.mrf.mxu0
        %v1800 = vadd.f32 %v878, %v1799
        %1801 = vmatmul.bf16.gmra.mxu0 %v774
        %v1802 = vpop.f32.mrf.mxu0
        %v1803 = vadd.f32 %v878, %v1802
        %v1804 = vpop.f32.mrf.mxu0
        %v1805 = vadd.f32 %v878, %v1804
        %1806 = vdwg.mxu0
        %1807 = vmatpush.bf16.msra.mxu0 %v1268
        %1808 = vmatpush.bf16.msra.mxu0 %v1262
        %1809 = vmatpush.bf16.msra.mxu0 %v1256
        %1810 = vmatpush.bf16.msra.mxu0 %v1250
        %1811 = vmatpush.bf16.msra.mxu0 %v1244
        %1812 = vmatpush.bf16.msra.mxu0 %v1238
        %1813 = vmatpush.bf16.msra.mxu0 %v1232
        %1814 = vmatpush.bf16.msra.mxu0 %v1226
        %1815 = vmatmul.bf16.gmra.mxu0 %v761
        %v1816 = vpop.f32.mrf.mxu0
        %v1817 = vadd.f32 %v1768, %v1816
        %v1818 = vpop.f32.mrf.mxu0
        %v1819 = vadd.f32 %v1770, %v1818
        %1820 = vmatmul.bf16.gmra.mxu0 %v763
        %v1821 = vpop.f32.mrf.mxu0
        %v1822 = vadd.f32 %v1773, %v1821
        %v1823 = vpop.f32.mrf.mxu0
        %v1824 = vadd.f32 %v1775, %v1823
        %1825 = vmatmul.bf16.gmra.mxu0 %v765
        %v1826 = vpop.f32.mrf.mxu0
        %v1827 = vadd.f32 %v1778, %v1826
        %v1828 = vpop.f32.mrf.mxu0
        %v1829 = vadd.f32 %v1780, %v1828
        %1830 = vmatmul.bf16.gmra.mxu0 %v767
        %v1831 = vpop.f32.mrf.mxu0
        %v1832 = vadd.f32 %v1783, %v1831
        %v1833 = vpop.f32.mrf.mxu0
        %v1834 = vadd.f32 %v1785, %v1833
        %1835 = vmatmul.bf16.gmra.mxu0 %v769
        %v1836 = vpop.f32.mrf.mxu0
        %v1837 = vadd.f32 %v1788, %v1836
        %v1838 = vpop.f32.mrf.mxu0
        %v1839 = vadd.f32 %v1790, %v1838
        %1840 = vmatmul.bf16.gmra.mxu0 %v771
        %v1841 = vpop.f32.mrf.mxu0
        %v1842 = vadd.f32 %v1793, %v1841
        %v1843 = vpop.f32.mrf.mxu0
        %v1844 = vadd.f32 %v1795, %v1843
        %1845 = vmatmul.bf16.gmra.mxu0 %v773
        %v1846 = vpop.f32.mrf.mxu0
        %v1847 = vadd.f32 %v1798, %v1846
        %v1848 = vpop.f32.mrf.mxu0
        %v1849 = vadd.f32 %v1800, %v1848
        %1850 = vmatmul.bf16.gmra.mxu0 %v775
        %v1851 = vpop.f32.mrf.mxu0
        %v1852 = vadd.f32 %v1803, %v1851
        %v1853 = vpop.f32.mrf.mxu0
        %v1854 = vadd.f32 %v1805, %v1853
        %1855 = vdwg.mxu0
        %1856 = vmatpush.bf16.msra.mxu0 %v1221
        %1857 = vmatpush.bf16.msra.mxu0 %v1215
        %1858 = vmatpush.bf16.msra.mxu0 %v1209
        %1859 = vmatpush.bf16.msra.mxu0 %v1203
        %1860 = vmatpush.bf16.msra.mxu0 %v1197
        %1861 = vmatpush.bf16.msra.mxu0 %v1191
        %1862 = vmatpush.bf16.msra.mxu0 %v1185
        %1863 = vmatpush.bf16.msra.mxu0 %v1179
        %1864 = vmatmul.bf16.gmra.mxu0 %v760
        %v1865 = vpop.f32.mrf.mxu0
        %v1866 = vadd.f32 %v879, %v1865
        %v1867 = vpop.f32.mrf.mxu0
        %v1868 = vadd.f32 %v879, %v1867
        %1869 = vmatmul.bf16.gmra.mxu0 %v762
        %v1870 = vpop.f32.mrf.mxu0
        %v1871 = vadd.f32 %v879, %v1870
        %v1872 = vpop.f32.mrf.mxu0
        %v1873 = vadd.f32 %v879, %v1872
        %1874 = vmatmul.bf16.gmra.mxu0 %v764
        %v1875 = vpop.f32.mrf.mxu0
        %v1876 = vadd.f32 %v879, %v1875
        %v1877 = vpop.f32.mrf.mxu0
        %v1878 = vadd.f32 %v879, %v1877
        %1879 = vmatmul.bf16.gmra.mxu0 %v766
        %v1880 = vpop.f32.mrf.mxu0
        %v1881 = vadd.f32 %v879, %v1880
        %v1882 = vpop.f32.mrf.mxu0
        %v1883 = vadd.f32 %v879, %v1882
        %1884 = vmatmul.bf16.gmra.mxu0 %v768
        %v1885 = vpop.f32.mrf.mxu0
        %v1886 = vadd.f32 %v879, %v1885
        %v1887 = vpop.f32.mrf.mxu0
        %v1888 = vadd.f32 %v879, %v1887
        %1889 = vmatmul.bf16.gmra.mxu0 %v770
        %v1890 = vpop.f32.mrf.mxu0
        %v1891 = vadd.f32 %v879, %v1890
        %v1892 = vpop.f32.mrf.mxu0
        %v1893 = vadd.f32 %v879, %v1892
        %1894 = vmatmul.bf16.gmra.mxu0 %v772
        %v1895 = vpop.f32.mrf.mxu0
        %v1896 = vadd.f32 %v879, %v1895
        %v1897 = vpop.f32.mrf.mxu0
        %v1898 = vadd.f32 %v879, %v1897
        %1899 = vmatmul.bf16.gmra.mxu0 %v774
        %v1900 = vpop.f32.mrf.mxu0
        %v1901 = vadd.f32 %v879, %v1900
        %v1902 = vpop.f32.mrf.mxu0
        %v1903 = vadd.f32 %v879, %v1902
        %1904 = vdwg.mxu0
        %1905 = vmatpush.bf16.msra.mxu0 %v1269
        %1906 = vmatpush.bf16.msra.mxu0 %v1263
        %1907 = vmatpush.bf16.msra.mxu0 %v1257
        %1908 = vmatpush.bf16.msra.mxu0 %v1251
        %1909 = vmatpush.bf16.msra.mxu0 %v1245
        %1910 = vmatpush.bf16.msra.mxu0 %v1239
        %1911 = vmatpush.bf16.msra.mxu0 %v1233
        %1912 = vmatpush.bf16.msra.mxu0 %v1227
        %1913 = vmatmul.bf16.gmra.mxu0 %v761
        %v1914 = vpop.f32.mrf.mxu0
        %v1915 = vadd.f32 %v1866, %v1914
        %v1916 = vpop.f32.mrf.mxu0
        %v1917 = vadd.f32 %v1868, %v1916
        %1918 = vmatmul.bf16.gmra.mxu0 %v763
        %v1919 = vpop.f32.mrf.mxu0
        %v1920 = vadd.f32 %v1871, %v1919
        %v1921 = vpop.f32.mrf.mxu0
        %v1922 = vadd.f32 %v1873, %v1921
        %1923 = vmatmul.bf16.gmra.mxu0 %v765
        %v1924 = vpop.f32.mrf.mxu0
        %v1925 = vadd.f32 %v1876, %v1924
        %v1926 = vpop.f32.mrf.mxu0
        %v1927 = vadd.f32 %v1878, %v1926
        %1928 = vmatmul.bf16.gmra.mxu0 %v767
        %v1929 = vpop.f32.mrf.mxu0
        %v1930 = vadd.f32 %v1881, %v1929
        %v1931 = vpop.f32.mrf.mxu0
        %v1932 = vadd.f32 %v1883, %v1931
        %1933 = vmatmul.bf16.gmra.mxu0 %v769
        %v1934 = vpop.f32.mrf.mxu0
        %v1935 = vadd.f32 %v1886, %v1934
        %v1936 = vpop.f32.mrf.mxu0
        %v1937 = vadd.f32 %v1888, %v1936
        %1938 = vmatmul.bf16.gmra.mxu0 %v771
        %v1939 = vpop.f32.mrf.mxu0
        %v1940 = vadd.f32 %v1891, %v1939
        %v1941 = vpop.f32.mrf.mxu0
        %v1942 = vadd.f32 %v1893, %v1941
        %1943 = vmatmul.bf16.gmra.mxu0 %v773
        %v1944 = vpop.f32.mrf.mxu0
        %v1945 = vadd.f32 %v1896, %v1944
        %v1946 = vpop.f32.mrf.mxu0
        %v1947 = vadd.f32 %v1898, %v1946
        %1948 = vmatmul.bf16.gmra.mxu0 %v775
        %v1949 = vpop.f32.mrf.mxu0
        %v1950 = vadd.f32 %v1901, %v1949
        %v1951 = vpop.f32.mrf.mxu0
        %v1952 = vadd.f32 %v1903, %v1951
        %1953 = vdwg.mxu0
        %v1954 = vpack.c.bf16 %v1523, %v1425
        %v1955 = vpack.c.bf16 %v1719, %v1621
        %v1956 = vpack.c.bf16 %v1915, %v1817
        %v1957 = vpack.c.bf16 %v1525, %v1427
        %v1958 = vpack.c.bf16 %v1721, %v1623
        %v1959 = vpack.c.bf16 %v1917, %v1819
        %v1960 = vpack.c.bf16 %v1528, %v1430
        %v1961 = vpack.c.bf16 %v1724, %v1626
        %v1962 = vpack.c.bf16 %v1920, %v1822
        %v1963 = vpack.c.bf16 %v1530, %v1432
        %v1964 = vpack.c.bf16 %v1726, %v1628
        %v1965 = vpack.c.bf16 %v1922, %v1824
        %v1966 = vpack.c.bf16 %v1533, %v1435
        %v1967 = vpack.c.bf16 %v1729, %v1631
        %v1968 = vpack.c.bf16 %v1925, %v1827
        %v1969 = vpack.c.bf16 %v1535, %v1437
        %v1970 = vpack.c.bf16 %v1731, %v1633
        %v1971 = vpack.c.bf16 %v1927, %v1829
        %v1972 = vpack.c.bf16 %v1538, %v1440
        %v1973 = vpack.c.bf16 %v1734, %v1636
        %v1974 = vpack.c.bf16 %v1930, %v1832
        %v1975 = vpack.c.bf16 %v1540, %v1442
        %v1976 = vpack.c.bf16 %v1736, %v1638
        %v1977 = vpack.c.bf16 %v1932, %v1834
        %v1978 = vpack.c.bf16 %v1543, %v1445
        %v1979 = vpack.c.bf16 %v1739, %v1641
        %v1980 = vpack.c.bf16 %v1935, %v1837
        %v1981 = vpack.c.bf16 %v1545, %v1447
        %v1982 = vpack.c.bf16 %v1741, %v1643
        %v1983 = vpack.c.bf16 %v1937, %v1839
        %v1984 = vpack.c.bf16 %v1548, %v1450
        %v1985 = vpack.c.bf16 %v1744, %v1646
        %v1986 = vpack.c.bf16 %v1940, %v1842
        %v1987 = vpack.c.bf16 %v1550, %v1452
        %v1988 = vpack.c.bf16 %v1746, %v1648
        %v1989 = vpack.c.bf16 %v1942, %v1844
        %v1990 = vpack.c.bf16 %v1553, %v1455
        %v1991 = vpack.c.bf16 %v1749, %v1651
        %v1992 = vpack.c.bf16 %v1945, %v1847
        %v1993 = vpack.c.bf16 %v1555, %v1457
        %v1994 = vpack.c.bf16 %v1751, %v1653
        %v1995 = vpack.c.bf16 %v1947, %v1849
        %v1996 = vpack.c.bf16 %v1558, %v1460
        %v1997 = vpack.c.bf16 %v1754, %v1656
        %v1998 = vpack.c.bf16 %v1950, %v1852
        %v1999 = vpack.c.bf16 %v1560, %v1462
        %v2000 = vpack.c.bf16 %v1756, %v1658
        %v2001 = vpack.c.bf16 %v1952, %v1854
        %2002 = vst [vmem:[%s302] sm:$0xf] %v1954
        %2003 = vst [vmem:[%s302 + $0x4] sm:$0xf] %v1957
        %2004 = vst [vmem:[%s302 + $0x8] sm:$0xf] %v1960
        %2005 = vst [vmem:[%s302 + $0xc] sm:$0xf] %v1963
        %2006 = vst [vmem:[%s302 + $0x10] sm:$0xf] %v1966
        %2007 = vst [vmem:[%s302 + $0x14] sm:$0xf] %v1969
        %2008 = vst [vmem:[%s302 + $0x18] sm:$0xf] %v1972
        %2009 = vst [vmem:[%s302 + $0x1c] sm:$0xf] %v1975
        %2010 = vst [vmem:[%s302 + $0x20] sm:$0xf] %v1978
        %2011 = vst [vmem:[%s302 + $0x24] sm:$0xf] %v1981
        %2012 = vst [vmem:[%s302 + $0x28] sm:$0xf] %v1984
        %2013 = vst [vmem:[%s302 + $0x2c] sm:$0xf] %v1987
        %2014 = vst [vmem:[%s302 + $0x30] sm:$0xf] %v1990
        %2015 = vst [vmem:[%s302 + $0x34] sm:$0xf] %v1993
        %2016 = vst [vmem:[%s302 + $0x38] sm:$0xf] %v1996
        %2017 = vst [vmem:[%s302 + $0x3c] sm:$0xf] %v1999
        %2018 = vst [vmem:[%s309] sm:$0xf] %v1955
        %2019 = vst [vmem:[%s309 + $0x4] sm:$0xf] %v1958
        %2020 = vst [vmem:[%s309 + $0x8] sm:$0xf] %v1961
        %2021 = vst [vmem:[%s309 + $0xc] sm:$0xf] %v1964
        %2022 = vst [vmem:[%s309 + $0x10] sm:$0xf] %v1967
        %2023 = vst [vmem:[%s309 + $0x14] sm:$0xf] %v1970
        %2024 = vst [vmem:[%s309 + $0x18] sm:$0xf] %v1973
        %2025 = vst [vmem:[%s309 + $0x1c] sm:$0xf] %v1976
        %2026 = vst [vmem:[%s309 + $0x20] sm:$0xf] %v1979
        %2027 = vst [vmem:[%s309 + $0x24] sm:$0xf] %v1982
        %2028 = vst [vmem:[%s309 + $0x28] sm:$0xf] %v1985
        %2029 = vst [vmem:[%s309 + $0x2c] sm:$0xf] %v1988
        %2030 = vst [vmem:[%s309 + $0x30] sm:$0xf] %v1991
        %2031 = vst [vmem:[%s309 + $0x34] sm:$0xf] %v1994
        %2032 = vst [vmem:[%s309 + $0x38] sm:$0xf] %v1997
        %2033 = vst [vmem:[%s309 + $0x3c] sm:$0xf] %v2000
        %2034 = vst [vmem:[%s316] sm:$0xf] %v1956
        %2035 = vst [vmem:[%s316 + $0x4] sm:$0xf] %v1959
        %2036 = vst [vmem:[%s316 + $0x8] sm:$0xf] %v1962
        %2037 = vst [vmem:[%s316 + $0xc] sm:$0xf] %v1965
        %2038 = vst [vmem:[%s316 + $0x10] sm:$0xf] %v1968
        %2039 = vst [vmem:[%s316 + $0x14] sm:$0xf] %v1971
        %2040 = vst [vmem:[%s316 + $0x18] sm:$0xf] %v1974
        %2041 = vst [vmem:[%s316 + $0x1c] sm:$0xf] %v1977
        %2042 = vst [vmem:[%s316 + $0x20] sm:$0xf] %v1980
        %2043 = vst [vmem:[%s316 + $0x24] sm:$0xf] %v1983
        %2044 = vst [vmem:[%s316 + $0x28] sm:$0xf] %v1986
        %2045 = vst [vmem:[%s316 + $0x2c] sm:$0xf] %v1989
        %2046 = vst [vmem:[%s316 + $0x30] sm:$0xf] %v1992
        %2047 = vst [vmem:[%s316 + $0x34] sm:$0xf] %v1995
        %2048 = vst [vmem:[%s316 + $0x38] sm:$0xf] %v1998
        %2049 = vst [vmem:[%s316 + $0x3c] sm:$0xf] %v2001
        %v2066 = vrot.slane %v1954, 4
        %v2067 = vrot.slane %v1957, 4
        %v2068 = vrot.slane %v1960, 4
        %v2069 = vrot.slane %v1963, 4
        %v2070 = vrot.slane %v1966, 4
        %v2071 = vrot.slane %v1969, 4
        %v2072 = vrot.slane %v1972, 4
        %v2073 = vrot.slane %v1975, 4
        %v2074 = vrot.slane %v1978, 4
        %v2075 = vrot.slane %v1981, 4
        %v2076 = vrot.slane %v1984, 4
        %v2077 = vrot.slane %v1987, 4
        %v2078 = vrot.slane %v1990, 4
        %v2079 = vrot.slane %v1993, 4
        %v2080 = vrot.slane %v1996, 4
        %v2081 = vrot.slane %v1999, 4
        %s2098 = scalar_lea.vmem %s302, 64 [#allocation8]
        %2099 = vst [vmem:[%s2098] sm:$0xf] %v2066
        %2100 = vst [vmem:[%s2098 + $0x4] sm:$0xf] %v2067
        %2101 = vst [vmem:[%s2098 + $0x8] sm:$0xf] %v2068
        %2102 = vst [vmem:[%s2098 + $0xc] sm:$0xf] %v2069
        %2103 = vst [vmem:[%s2098 + $0x10] sm:$0xf] %v2070
        %2104 = vst [vmem:[%s2098 + $0x14] sm:$0xf] %v2071
        %2105 = vst [vmem:[%s2098 + $0x18] sm:$0xf] %v2072
        %2106 = vst [vmem:[%s2098 + $0x1c] sm:$0xf] %v2073
        %2107 = vst [vmem:[%s2098 + $0x20] sm:$0xf] %v2074
        %2108 = vst [vmem:[%s2098 + $0x24] sm:$0xf] %v2075
        %2109 = vst [vmem:[%s2098 + $0x28] sm:$0xf] %v2076
        %2110 = vst [vmem:[%s2098 + $0x2c] sm:$0xf] %v2077
        %2111 = vst [vmem:[%s2098 + $0x30] sm:$0xf] %v2078
        %2112 = vst [vmem:[%s2098 + $0x34] sm:$0xf] %v2079
        %2113 = vst [vmem:[%s2098 + $0x38] sm:$0xf] %v2080
        %2114 = vst [vmem:[%s2098 + $0x3c] sm:$0xf] %v2081
        %v2131 = vrot.slane %v1955, 4
        %v2132 = vrot.slane %v1958, 4
        %v2133 = vrot.slane %v1961, 4
        %v2134 = vrot.slane %v1964, 4
        %v2135 = vrot.slane %v1967, 4
        %v2136 = vrot.slane %v1970, 4
        %v2137 = vrot.slane %v1973, 4
        %v2138 = vrot.slane %v1976, 4
        %v2139 = vrot.slane %v1979, 4
        %v2140 = vrot.slane %v1982, 4
        %v2141 = vrot.slane %v1985, 4
        %v2142 = vrot.slane %v1988, 4
        %v2143 = vrot.slane %v1991, 4
        %v2144 = vrot.slane %v1994, 4
        %v2145 = vrot.slane %v1997, 4
        %v2146 = vrot.slane %v2000, 4
        %s2163 = scalar_lea.vmem %s309, 64 [#allocation9]
        %2164 = vst [vmem:[%s2163] sm:$0xf] %v2131
        %2165 = vst [vmem:[%s2163 + $0x4] sm:$0xf] %v2132
        %2166 = vst [vmem:[%s2163 + $0x8] sm:$0xf] %v2133
        %2167 = vst [vmem:[%s2163 + $0xc] sm:$0xf] %v2134
        %2168 = vst [vmem:[%s2163 + $0x10] sm:$0xf] %v2135
        %2169 = vst [vmem:[%s2163 + $0x14] sm:$0xf] %v2136
        %2170 = vst [vmem:[%s2163 + $0x18] sm:$0xf] %v2137
        %2171 = vst [vmem:[%s2163 + $0x1c] sm:$0xf] %v2138
        %2172 = vst [vmem:[%s2163 + $0x20] sm:$0xf] %v2139
        %2173 = vst [vmem:[%s2163 + $0x24] sm:$0xf] %v2140
        %2174 = vst [vmem:[%s2163 + $0x28] sm:$0xf] %v2141
        %2175 = vst [vmem:[%s2163 + $0x2c] sm:$0xf] %v2142
        %2176 = vst [vmem:[%s2163 + $0x30] sm:$0xf] %v2143
        %2177 = vst [vmem:[%s2163 + $0x34] sm:$0xf] %v2144
        %2178 = vst [vmem:[%s2163 + $0x38] sm:$0xf] %v2145
        %2179 = vst [vmem:[%s2163 + $0x3c] sm:$0xf] %v2146
        %v2196 = vrot.slane %v1956, 4
        %v2197 = vrot.slane %v1959, 4
        %v2198 = vrot.slane %v1962, 4
        %v2199 = vrot.slane %v1965, 4
        %v2200 = vrot.slane %v1968, 4
        %v2201 = vrot.slane %v1971, 4
        %v2202 = vrot.slane %v1974, 4
        %v2203 = vrot.slane %v1977, 4
        %v2204 = vrot.slane %v1980, 4
        %v2205 = vrot.slane %v1983, 4
        %v2206 = vrot.slane %v1986, 4
        %v2207 = vrot.slane %v1989, 4
        %v2208 = vrot.slane %v1992, 4
        %v2209 = vrot.slane %v1995, 4
        %v2210 = vrot.slane %v1998, 4
        %v2211 = vrot.slane %v2001, 4
        %s2228 = scalar_lea.vmem %s316, 64 [#allocation11]
        %2229 = vst [vmem:[%s2228] sm:$0xf] %v2196
        %2230 = vst [vmem:[%s2228 + $0x4] sm:$0xf] %v2197
        %2231 = vst [vmem:[%s2228 + $0x8] sm:$0xf] %v2198
        %2232 = vst [vmem:[%s2228 + $0xc] sm:$0xf] %v2199
        %2233 = vst [vmem:[%s2228 + $0x10] sm:$0xf] %v2200
        %2234 = vst [vmem:[%s2228 + $0x14] sm:$0xf] %v2201
        %2235 = vst [vmem:[%s2228 + $0x18] sm:$0xf] %v2202
        %2236 = vst [vmem:[%s2228 + $0x1c] sm:$0xf] %v2203
        %2237 = vst [vmem:[%s2228 + $0x20] sm:$0xf] %v2204
        %2238 = vst [vmem:[%s2228 + $0x24] sm:$0xf] %v2205
        %2239 = vst [vmem:[%s2228 + $0x28] sm:$0xf] %v2206
        %2240 = vst [vmem:[%s2228 + $0x2c] sm:$0xf] %v2207
        %2241 = vst [vmem:[%s2228 + $0x30] sm:$0xf] %v2208
        %2242 = vst [vmem:[%s2228 + $0x34] sm:$0xf] %v2209
        %2243 = vst [vmem:[%s2228 + $0x38] sm:$0xf] %v2210
        %2244 = vst [vmem:[%s2228 + $0x3c] sm:$0xf] %v2211
        %s2245 = sand.u32 %s119, 1
        %s2246 = scalar_lea.sflag [#allocation4], %s2245
        %s2247 = sand.u32 %s119, 1
        %s2248 = smul.addr %s2247, 128
        %s2249 = scalar_lea.vmem [#allocation8], %s2248
        %s2250 = sand.u32 %s27, 1
        %s2251 = scalar_lea.sflag [#allocation10], %s2250
        %s2252 = sand.u32 %s147, 1
        %s2253 = smul.addr %s2252, 128
        %s2254 = scalar_lea.vmem [#allocation9], %s2253
        %s2255 = sand.u32 %s27, 1
        %s2256 = scalar_lea.sflag [#allocation10], %s2255
        %s2257 = sand.u32 %s175, 1
        %s2258 = smul.addr %s2257, 128
        %s2259 = scalar_lea.vmem [#allocation11], %s2258
        // Predicated region
        $region45: #{tpu_custom_call.1} parent=31 // pred_check
          %p2260 = pneg %p129
        $region46: #{tpu_custom_call.1} parent=31 // pred_check_branch
          %2262 = sbr.rel (%p2260) target = $region48
        $region47: #{tpu_custom_call.1} parent=31 // pred_region
          #allocation13 [shape = 'u32[6]{0}', space=smem, size = 0x18, scoped, tag = 'DMA stride descriptor']
          %s2263 = smul.u32 16, %s32
          %2265 = vsyncadd %s2246, 0
          %s2266 = smul.addr %s31, 64
          %s2267 = sadd.s32 %s2263, %s2266
          %s2268 = smul.addr %s2267, 4
          %s2269 = scalar_lea.hbm %s3, %s2268
          %s2271 = sshll.u32 1, 14
          %s2272 = sxor.u32 4294967295, %s2271
          %s2275 = sshll.u32 7, 18
          %s2276 = sxor.u32 4294967295, %s2275
          %s2277 = sand.u32 0, %s2276
          %s2279 = sor.u32 %s2277, 0
          %s2280 = sshll.u32 %s2249, 4
          %s2281 = int_to_ptr.vmem [resolvable:$true] %s2280
          %s2282 = sshll.u32 %s2269, 4
          %s2283 = int_to_ptr.hbm [resolvable:$true] %s2282
          %2289 = sst [smem:[#allocation13]] 1024
          %s2290 = scalar_lea.smem [#allocation13], 1
          %2291 = sst [smem:[%s2290]] 2048
          %s2292 = scalar_lea.smem [#allocation13], 2
          %2293 = sst [smem:[%s2292]] 16
          %s2294 = scalar_lea.smem [#allocation13], 3
          %2295 = sst [smem:[%s2294]] 64
          %s2296 = scalar_lea.smem [#allocation13], 4
          %2297 = sst [smem:[%s2296]] 64
          %s2298 = scalar_lea.smem [#allocation13], 5
          %2299 = sst [smem:[%s2298]] 4
          %2301 = dma.general %s2281, 2048, %s2283, %s2246, [#allocation12], [#allocation13], %s2279, 0
        $region48: #{tpu_custom_call.1} parent=31 // pred_fallthru
          _
        // Predicated region
        $region49: #{tpu_custom_call.1} parent=31 // pred_check
          %p2302 = pneg %p157
        $region50: #{tpu_custom_call.1} parent=31 // pred_check_branch
          %2304 = sbr.rel (%p2302) target = $region52
        $region51: #{tpu_custom_call.1} parent=31 // pred_region
          #allocation15 [shape = 'u32[6]{0}', space=smem, size = 0x18, scoped, tag = 'DMA stride descriptor']
          %s2305 = smul.u32 16, %s32
          %2307 = vsyncadd %s2251, 0
          %s2308 = smul.addr %s31, 64
          %s2309 = sadd.s32 %s2305, %s2308
          %s2310 = smul.addr %s2309, 4
          %s2311 = scalar_lea.hbm %s4, %s2310
          %s2313 = sshll.u32 1, 14
          %s2314 = sxor.u32 4294967295, %s2313
          %s2317 = sshll.u32 7, 18
          %s2318 = sxor.u32 4294967295, %s2317
          %s2319 = sand.u32 0, %s2318
          %s2321 = sor.u32 %s2319, 0
          %s2322 = sshll.u32 %s2254, 4
          %s2323 = int_to_ptr.vmem [resolvable:$true] %s2322
          %s2324 = sshll.u32 %s2311, 4
          %s2325 = int_to_ptr.hbm [resolvable:$true] %s2324
          %2331 = sst [smem:[#allocation15]] 1024
          %s2332 = scalar_lea.smem [#allocation15], 1
          %2333 = sst [smem:[%s2332]] 2048
          %s2334 = scalar_lea.smem [#allocation15], 2
          %2335 = sst [smem:[%s2334]] 16
          %s2336 = scalar_lea.smem [#allocation15], 3
          %2337 = sst [smem:[%s2336]] 64
          %s2338 = scalar_lea.smem [#allocation15], 4
          %2339 = sst [smem:[%s2338]] 64
          %s2340 = scalar_lea.smem [#allocation15], 5
          %2341 = sst [smem:[%s2340]] 4
          %2343 = dma.general %s2323, 2048, %s2325, %s2251, [#allocation14], [#allocation15], %s2321, 0
        $region52: #{tpu_custom_call.1} parent=31 // pred_fallthru
          _
        // Predicated region
        $region53: #{tpu_custom_call.1} parent=31 // pred_check
          %p2344 = pneg %p185
        $region54: #{tpu_custom_call.1} parent=31 // pred_check_branch
          %2346 = sbr.rel (%p2344) target = $region56
        $region55: #{tpu_custom_call.1} parent=31 // pred_region
          #allocation17 [shape = 'u32[6]{0}', space=smem, size = 0x18, scoped, tag = 'DMA stride descriptor']
          %s2347 = smul.u32 16, %s32
          %2349 = vsyncadd %s2256, 0
          %s2350 = smul.addr %s31, 64
          %s2351 = sadd.s32 %s2347, %s2350
          %s2352 = smul.addr %s2351, 4
          %s2353 = scalar_lea.hbm %s5, %s2352
          %s2355 = sshll.u32 1, 14
          %s2356 = sxor.u32 4294967295, %s2355
          %s2359 = sshll.u32 7, 18
          %s2360 = sxor.u32 4294967295, %s2359
          %s2361 = sand.u32 0, %s2360
          %s2363 = sor.u32 %s2361, 0
          %s2364 = sshll.u32 %s2259, 4
          %s2365 = int_to_ptr.vmem [resolvable:$true] %s2364
          %s2366 = sshll.u32 %s2353, 4
          %s2367 = int_to_ptr.hbm [resolvable:$true] %s2366
          %2373 = sst [smem:[#allocation17]] 1024
          %s2374 = scalar_lea.smem [#allocation17], 1
          %2375 = sst [smem:[%s2374]] 2048
          %s2376 = scalar_lea.smem [#allocation17], 2
          %2377 = sst [smem:[%s2376]] 16
          %s2378 = scalar_lea.smem [#allocation17], 3
          %2379 = sst [smem:[%s2378]] 64
          %s2380 = scalar_lea.smem [#allocation17], 4
          %2381 = sst [smem:[%s2380]] 64
          %s2382 = scalar_lea.smem [#allocation17], 5
          %2383 = sst [smem:[%s2382]] 4
          %2385 = dma.general %s2365, 2048, %s2367, %s2256, [#allocation16], [#allocation17], %s2363, 0
        $region56: #{tpu_custom_call.1} parent=31 // pred_fallthru
          _
      $region32: #{tpu_custom_call.1} parent=5 // pred_fallthru
        _
      %p2386 = scmp.le.s32.totalorder 2, %s22
      // Predicated region
      $region57: #{tpu_custom_call.1} parent=5 // pred_check
        %p2387 = pneg %p2386
      $region58: #{tpu_custom_call.1} parent=5 // pred_check_branch
        %2389 = sbr.rel (%p2387) target = $region60
      $region59: #{tpu_custom_call.1} parent=5 // pred_region
        %s2390 = ssub.s32 %s22, 2
        // Predicated region
        $region61: #{tpu_custom_call.1} parent=59 // pred_check
          %p2391 = pneg %p135
        $region62: #{tpu_custom_call.1} parent=59 // pred_check_branch
          %2393 = sbr.rel (%p2391) target = $region64
        $region63: #{tpu_custom_call.1} parent=59 // pred_region
          %s2394 = sand.u32 %s120, 1
          %s2395 = scalar_lea.sflag [#allocation4], %s2394
          %s2396 = sand.u32 %s120, 1
          %s2397 = smul.addr %s2396, 128
          %s2398 = scalar_lea.vmem [#allocation8], %s2397
          %2400 = dma.done %s2395, 2048
        $region64: #{tpu_custom_call.1} parent=59 // pred_fallthru
          _
        // Predicated region
        $region65: #{tpu_custom_call.1} parent=59 // pred_check
          %p2401 = pneg %p163
        $region66: #{tpu_custom_call.1} parent=59 // pred_check_branch
          %2403 = sbr.rel (%p2401) target = $region68
        $region67: #{tpu_custom_call.1} parent=59 // pred_region
          %s2404 = sand.u32 %s28, 1
          %s2405 = scalar_lea.sflag [#allocation10], %s2404
          %s2406 = sand.u32 %s148, 1
          %s2407 = smul.addr %s2406, 128
          %s2408 = scalar_lea.vmem [#allocation9], %s2407
          %2410 = dma.done %s2405, 2048
        $region68: #{tpu_custom_call.1} parent=59 // pred_fallthru
          _
        // Predicated region
        $region69: #{tpu_custom_call.1} parent=59 // pred_check
          %p2411 = pneg %p191
        $region70: #{tpu_custom_call.1} parent=59 // pred_check_branch
          %2413 = sbr.rel (%p2411) target = $region72
        $region71: #{tpu_custom_call.1} parent=59 // pred_region
          %s2414 = sand.u32 %s28, 1
          %s2415 = scalar_lea.sflag [#allocation10], %s2414
          %s2416 = sand.u32 %s176, 1
          %s2417 = smul.addr %s2416, 128
          %s2418 = scalar_lea.vmem [#allocation11], %s2417
          %2420 = dma.done %s2415, 2048
        $region72: #{tpu_custom_call.1} parent=59 // pred_fallthru
          _
      $region60: #{tpu_custom_call.1} parent=5 // pred_fallthru
        _
    $region6: #{tpu_custom_call.1} parent=1 // loop_footer
      %s26 = sadd.s32 1, %s22
    $region7: #{tpu_custom_call.1} parent=1 // loop_footer_branch
      %21 = sbr.rel target = $region3
    $region8: #{tpu_custom_call.1} parent=1 // loop_exit
      _
    %2421 = vsyncpa [#allocation3], 1
    %s2422 = scalar_lea.sflag [#allocation3], 1
    %2423 = vsyncpa %s2422, 1
    %2424 = vsyncpa [#allocation6], 1
    %2425 = vsyncpa [#allocation4], 1
    %s2426 = scalar_lea.sflag [#allocation4], 1
    %2427 = vsyncpa %s2426, 1
    %2428 = vsyncpa [#allocation10], 1
    %s2429 = scalar_lea.sflag [#allocation10], 1
    %2430 = vsyncpa %s2429, 1

// kernel: tpu_custom_call.1
$region0: #{tpu_custom_call.1}
  #allocation0 [shape = 'u32[]', space=smem, size = 0x4, offset = 0x4, fixed_abs, tag = 'smem constant byte address 0x4 - core index']
  #allocation1 [shape = 'u32[72,128]{1,0:T(1,128)}', space=vmem, size = 0x9000, scoped, tag = 'internal scratch']
  #allocation12 [shape = 's32[]', space=sflag, size = 0x4, offset = 0, fixed_abs, tag = 'sflag constant byte address 0x0 - dummy sync flag']
  #allocation14 [shape = 's32[]', space=sflag, size = 0x4, offset = 0, fixed_abs, tag = 'sflag constant byte address 0x0 - dummy sync flag']
  #allocation16 [shape = 's32[]', space=sflag, size = 0x4, offset = 0, fixed_abs, tag = 'sflag constant byte address 0x0 - dummy sync flag']
  %s0 = inlined_call_operand.hbm [shape: f32[2,256,256], index: 0, kind: input, shape index: {}]
  %s1 = inlined_call_operand.hbm [shape: bf16[256,768], index: 1, kind: input, shape index: {}]
  %s2 = inlined_call_operand.hbm [shape: f32[1,768], index: 2, kind: input, shape index: {}]
  %s3 = inlined_call_operand.hbm [shape: bf16[2,2,256,128], index: 3, kind: output, shape index: {0}]
  %s4 = inlined_call_operand.hbm [shape: bf16[2,2,256,128], index: 4, kind: output, shape index: {1}]
  %s5 = inlined_call_operand.hbm [shape: bf16[2,2,256,128], index: 5, kind: output, shape index: {2}]
  %6 = xla_tuple %s3, %s4, %s5
  %s7 = sld [smem:[#allocation0]]
  $region73: #{tpu_custom_call.1} parent=0
    _
  %s9 = ssub.s32 1, %s7
  %s10 = scalar_select 0, %s9, %s7
  $region1: #{tpu_custom_call.1} parent=0
    #allocation2 [shape = 'u8[262144]{0}', space=vmem, size = 0x40000, scoped, tag = 'input window, operand 0']
    #allocation3 [shape = 's32[2]{0}', space=sflag, size = 0x8, scoped, tag = 'scoped memory for tpu_custom_call.1']
    #allocation4 [shape = 's32[2]{0}', space=sflag, size = 0x8, scoped, tag = 'scoped memory for tpu_custom_call.1']
    #allocation5 [shape = 'u8[393216]{0}', space=vmem, size = 0x60000, scoped, tag = 'input window, operand 1, single buffered']
    #allocation6 [shape = 's32[1]{0}', space=sflag, size = 0x4, scoped, tag = 'scoped memory for tpu_custom_call.1']
    #allocation7 [shape = 'u8[3072]{0}', space=vmem, size = 0xc00, scoped, tag = 'input window, operand 2, single buffered']
    #allocation8 [shape = 'u8[131072]{0}', space=vmem, size = 0x20000, scoped, tag = 'output window, operand 0']
    #allocation9 [shape = 'u8[131072]{0}', space=vmem, size = 0x20000, scoped, tag = 'output window, operand 1']
    #allocation10 [shape = 's32[2]{0}', space=sflag, size = 0x8, scoped, tag = 'scoped memory for tpu_custom_call.1']
    #allocation11 [shape = 'u8[131072]{0}', space=vmem, size = 0x20000, scoped, tag = 'output window, operand 2']
    %11 = vsyncpa [#allocation3], 0
    %s12 = scalar_lea.sflag [#allocation3], 1
    %13 = vsyncpa %s12, 0
    %14 = vsyncpa [#allocation6], 0
    %15 = vsyncpa [#allocation4], 0
    %s16 = scalar_lea.sflag [#allocation4], 1
    %17 = vsyncpa %s16, 0
    %18 = vsyncpa [#allocation10], 0
    %s19 = scalar_lea.sflag [#allocation10], 1
    %20 = vsyncpa %s19, 0
    loop: start=0, step=1, limit=6
    $region2: #{tpu_custom_call.1} parent=1 // loop_pre_header
      _
    $region3: #{tpu_custom_call.1} parent=1 // loop_header
      %s22 = sphi 0, %s26
      %p23 = scmp.ge.s32.totalorder %s22, 6
      %s29 = sphi 0, %s41
      %s30 = sphi 0, %s37
      %s31 = sphi 0, %s29
      %s32 = sphi 0, %s30
      %s33 = sphi 0, %s31
      %s34 = sphi 0, %s32
      %s46 = sphi 0, %s48
      %s49 = sphi 0, %s46
      %s50 = sphi 0, %s49
      %s66 = sphi 0, %s50
      %s70 = sphi 0, %s70
      %s72 = sphi 0, %s70
      %s73 = sphi 0, %s72
      %s87 = sphi 0, %s73
      %s91 = sphi 0, %s91
      %s93 = sphi 0, %s91
      %s94 = sphi 0, %s93
      %s108 = sphi 0, %s94
      %s116 = sphi 0, %s118
      %s119 = sphi 0, %s116
      %s120 = sphi 0, %s119
      %s136 = sphi 0, %s120
      %s144 = sphi 0, %s146
      %s147 = sphi 0, %s144
      %s148 = sphi 0, %s147
      %s164 = sphi 0, %s148
      %s172 = sphi 0, %s174
      %s175 = sphi 0, %s172
      %s176 = sphi 0, %s175
      %s192 = sphi 0, %s176
    $region4: #{tpu_custom_call.1} parent=1 // loop_header_branch
      %25 = sbr.rel (%p23) target = $region8
    $region5: #{tpu_custom_call.1} parent=1 // loop_body
      %s27 = ssub.s32 %s22, 1
      %s28 = ssub.s32 %s22, 2
      %s35 = sadd.s32 1, %s30
      %p36 = scmp.ge.s32.totalorder %s35, 2
      %s37 = scalar_select %p36, 0, %s35
      %s38 = sadd.s32 1, %s29
      %s39 = scalar_select %p36, %s38, %s29
      %p40 = scmp.ge.s32.totalorder %s39, 2
      %s41 = scalar_select %p40, 0, %s39
      %s42 = ssub.s32 %s29, %s41
      %s43 = ssub.s32 %s30, %s37
      %s44 = sor.u32 %s42, %s43
      %p45 = scmp.eq.s32.totalorder %s44, 0
      %s47 = sadd.s32 %s46, 1
      %s48 = scalar_select %p45, %s46, %s47
      %p51 = pneg %p45
      %p52 = scmp.eq.s32.totalorder %s22, 3
      %p53 = por %p51, %p52
      %p54 = scmp.ne.s32.totalorder %s46, %s49
      %p55 = scmp.eq.s32.totalorder %s22, 0
      %p56 = por %p54, %p55
      %p57 = scmp.ne.s32.totalorder %s46, %s49
      %p58 = scmp.eq.s32.totalorder %s27, 3
      %p59 = por %p57, %p58
      %p60 = scmp.ne.s32.totalorder %s49, %s50
      %p61 = scmp.eq.s32.totalorder %s27, 0
      %p62 = por %p60, %p61
      %p63 = scmp.ne.s32.totalorder %s49, %s50
      %p64 = scmp.eq.s32.totalorder %s28, 3
      %p65 = por %p63, %p64
      %p67 = scmp.ne.s32.totalorder %s50, %s66
      %p68 = scmp.eq.s32.totalorder %s28, 0
      %p69 = por %p67, %p68
      %s71 = sadd.s32 %s70, 1
      %p74 = scmp.eq.s32.totalorder %s22, 3
      %p75 = scmp.ne.s32.totalorder %s70, %s72
      %p76 = scmp.eq.s32.totalorder %s22, 0
      %p77 = por %p75, %p76
      %p78 = scmp.ne.s32.totalorder %s70, %s72
      %p79 = scmp.eq.s32.totalorder %s27, 3
      %p80 = por %p78, %p79
      %p81 = scmp.ne.s32.totalorder %s72, %s73
      %p82 = scmp.eq.s32.totalorder %s27, 0
      %p83 = por %p81, %p82
      %p84 = scmp.ne.s32.totalorder %s72, %s73
      %p85 = scmp.eq.s32.totalorder %s28, 3
      %p86 = por %p84, %p85
      %p88 = scmp.ne.s32.totalorder %s73, %s87
      %p89 = scmp.eq.s32.totalorder %s28, 0
      %p90 = por %p88, %p89
      %s92 = sadd.s32 %s91, 1
      %p95 = scmp.eq.s32.totalorder %s22, 3
      %p96 = scmp.ne.s32.totalorder %s91, %s93
      %p97 = scmp.eq.s32.totalorder %s22, 0
      %p98 = por %p96, %p97
      %p99 = scmp.ne.s32.totalorder %s91, %s93
      %p100 = scmp.eq.s32.totalorder %s27, 3
      %p101 = por %p99, %p100
      %p102 = scmp.ne.s32.totalorder %s93, %s94
      %p103 = scmp.eq.s32.totalorder %s27, 0
      %p104 = por %p102, %p103
      %p105 = scmp.ne.s32.totalorder %s93, %s94
      %p106 = scmp.eq.s32.totalorder %s28, 3
      %p107 = por %p105, %p106
      %p109 = scmp.ne.s32.totalorder %s94, %s108
      %p110 = scmp.eq.s32.totalorder %s28, 0
      %p111 = por %p109, %p110
      %s112 = ssub.s32 %s29, %s41
      %s113 = ssub.s32 %s30, %s37
      %s114 = sor.u32 %s112, %s113
      %p115 = scmp.eq.s32.totalorder %s114, 0
      %s117 = sadd.s32 %s116, 1
      %s118 = scalar_select %p115, %s116, %s117
      %p121 = pneg %p115
      %p122 = scmp.eq.s32.totalorder %s22, 3
      %p123 = por %p121, %p122
      %p124 = scmp.ne.s32.totalorder %s116, %s119
      %p125 = scmp.eq.s32.totalorder %s22, 0
      %p126 = por %p124, %p125
      %p127 = scmp.ne.s32.totalorder %s116, %s119
      %p128 = scmp.eq.s32.totalorder %s27, 3
      %p129 = por %p127, %p128
      %p130 = scmp.ne.s32.totalorder %s119, %s120
      %p131 = scmp.eq.s32.totalorder %s27, 0
      %p132 = por %p130, %p131
      %p133 = scmp.ne.s32.totalorder %s119, %s120
      %p134 = scmp.eq.s32.totalorder %s28, 3
      %p135 = por %p133, %p134
      %p137 = scmp.ne.s32.totalorder %s120, %s136
      %p138 = scmp.eq.s32.totalorder %s28, 0
      %p139 = por %p137, %p138
      %s140 = ssub.s32 %s29, %s41
      %s141 = ssub.s32 %s30, %s37
      %s142 = sor.u32 %s140, %s141
      %p143 = scmp.eq.s32.totalorder %s142, 0
      %s145 = sadd.s32 %s144, 1
      %s146 = scalar_select %p143, %s144, %s145
      %p149 = pneg %p143
      %p150 = scmp.eq.s32.totalorder %s22, 3
      %p151 = por %p149, %p150
      %p152 = scmp.ne.s32.totalorder %s144, %s147
      %p153 = scmp.eq.s32.totalorder %s22, 0
      %p154 = por %p152, %p153
      %p155 = scmp.ne.s32.totalorder %s144, %s147
      %p156 = scmp.eq.s32.totalorder %s27, 3
      %p157 = por %p155, %p156
      %p158 = scmp.ne.s32.totalorder %s147, %s148
      %p159 = scmp.eq.s32.totalorder %s27, 0
      %p160 = por %p158, %p159
      %p161 = scmp.ne.s32.totalorder %s147, %s148
      %p162 = scmp.eq.s32.totalorder %s28, 3
      %p163 = por %p161, %p162
      %p165 = scmp.ne.s32.totalorder %s148, %s164
      %p166 = scmp.eq.s32.totalorder %s28, 0
      %p167 = por %p165, %p166
      %s168 = ssub.s32 %s29, %s41
      %s169 = ssub.s32 %s30, %s37
      %s170 = sor.u32 %s168, %s169
      %p171 = scmp.eq.s32.totalorder %s170, 0
      %s173 = sadd.s32 %s172, 1
      %s174 = scalar_select %p171, %s172, %s173
      %p177 = pneg %p171
      %p178 = scmp.eq.s32.totalorder %s22, 3
      %p179 = por %p177, %p178
      %p180 = scmp.ne.s32.totalorder %s172, %s175
      %p181 = scmp.eq.s32.totalorder %s22, 0
      %p182 = por %p180, %p181
      %p183 = scmp.ne.s32.totalorder %s172, %s175
      %p184 = scmp.eq.s32.totalorder %s27, 3
      %p185 = por %p183, %p184
      %p186 = scmp.ne.s32.totalorder %s175, %s176
      %p187 = scmp.eq.s32.totalorder %s27, 0
      %p188 = por %p186, %p187
      %p189 = scmp.ne.s32.totalorder %s175, %s176
      %p190 = scmp.eq.s32.totalorder %s28, 3
      %p191 = por %p189, %p190
      %p193 = scmp.ne.s32.totalorder %s176, %s192
      %p194 = scmp.eq.s32.totalorder %s28, 0
      %p195 = por %p193, %p194
      %p196 = scmp.le.s32.totalorder 1, %s22
      %p197 = scmp.lt.s32.totalorder %s22, 5
      %p198 = pnand %p196, %p197
      %p199 = pneg %p198
      // Predicated region
      $region9: #{tpu_custom_call.1} parent=5 // pred_check
        _
      $region10: #{tpu_custom_call.1} parent=5 // pred_check_branch
        %201 = sbr.rel (%p198) target = $region12
      $region11: #{tpu_custom_call.1} parent=5 // pred_region
        %s202 = ssub.s32 %s22, 1
        // Predicated region
        $region13: #{tpu_custom_call.1} parent=11 // pred_check
          %p203 = pneg %p83
        $region14: #{tpu_custom_call.1} parent=11 // pred_check_branch
          %205 = sbr.rel (%p203) target = $region16
        $region15: #{tpu_custom_call.1} parent=11 // pred_region
          %207 = vsyncadd [#allocation6], 0
          %s208 = sshll.u32 %s1, 4
          %s209 = int_to_ptr.hbm [resolvable:$true] %s208
          %s210 = sshll.u32 [#allocation5], 4
          %s211 = int_to_ptr.vmem [resolvable:$true] %s210
          %216 = dma.hbm_to_vmem [thread:$0]  %s209, 12288, %s211, [#allocation6], 384, 384, 24
        $region16: #{tpu_custom_call.1} parent=11 // pred_fallthru
          _
        // Predicated region
        $region17: #{tpu_custom_call.1} parent=11 // pred_check
          %p217 = pneg %p104
        $region18: #{tpu_custom_call.1} parent=11 // pred_check_branch
          %219 = sbr.rel (%p217) target = $region20
        $region19: #{tpu_custom_call.1} parent=11 // pred_region
          %221 = vsyncadd [#allocation6], 0
          %s223 = sshll.u32 %s2, 4
          %s224 = int_to_ptr.hbm [resolvable:$true] %s223
          %s225 = sshll.u32 [#allocation7], 4
          %s226 = int_to_ptr.vmem [resolvable:$true] %s225
          %228 = dma.hbm_to_vmem [thread:$0]  %s224, 96, %s226, [#allocation6]
        $region20: #{tpu_custom_call.1} parent=11 // pred_fallthru
          _
      $region12: #{tpu_custom_call.1} parent=5 // pred_fallthru
        _
      %p229 = scmp.lt.s32.totalorder %s22, 4
      // Predicated region
      $region21: #{tpu_custom_call.1} parent=5 // pred_check
        %p230 = pneg %p229
      $region22: #{tpu_custom_call.1} parent=5 // pred_check_branch
        %232 = sbr.rel (%p230) target = $region24
      $region23: #{tpu_custom_call.1} parent=5 // pred_region
        // Predicated region
        $region25: #{tpu_custom_call.1} parent=23 // pred_check
          %p233 = pneg %p56
        $region26: #{tpu_custom_call.1} parent=23 // pred_check_branch
          %235 = sbr.rel (%p233) target = $region28
        $region27: #{tpu_custom_call.1} parent=23 // pred_region
          %s236 = sand.u32 %s46, 1
          %s237 = scalar_lea.sflag [#allocation3], %s236
          %s238 = sand.u32 %s46, 1
          %s239 = smul.addr %s238, 256
          %s240 = scalar_lea.vmem [#allocation2], %s239
          %s241 = smul.u32 16, %s30
          %243 = vsyncadd %s237, 0
          %s244 = smul.addr %s241, 2
          %s245 = smul.addr %s29, 64
          %s246 = sadd.s32 %s244, %s245
          %s247 = smul.addr %s246, 8
          %s248 = scalar_lea.hbm %s0, %s247
          %s249 = sshll.u32 %s248, 4
          %s250 = int_to_ptr.hbm [resolvable:$true] %s249
          %s251 = sshll.u32 %s240, 4
          %s252 = int_to_ptr.vmem [resolvable:$true] %s251
          %257 = dma.hbm_to_vmem [thread:$0]  %s250, 4096, %s252, %s237, 256, 256, 16
        $region28: #{tpu_custom_call.1} parent=23 // pred_fallthru
          _
      $region24: #{tpu_custom_call.1} parent=5 // pred_fallthru
        _
      %p258 = scmp.le.s32.totalorder 1, %s22
      %p259 = scmp.lt.s32.totalorder %s22, 5
      %p260 = pnand %p258, %p259
      %p261 = pneg %p260
      // Predicated region
      $region29: #{tpu_custom_call.1} parent=5 // pred_check
        _
      $region30: #{tpu_custom_call.1} parent=5 // pred_check_branch
        %263 = sbr.rel (%p260) target = $region32
      $region31: #{tpu_custom_call.1} parent=5 // pred_region
        %s264 = ssub.s32 %s22, 1
        %s265 = sand.u32 %s49, 1
        %s266 = scalar_lea.sflag [#allocation3], %s265
        %s267 = sand.u32 %s49, 1
        %s268 = smul.addr %s267, 256
        %s269 = scalar_lea.vmem [#allocation2], %s268
        // Predicated region
        $region33: #{tpu_custom_call.1} parent=31 // pred_check
          %p270 = pneg %p62
        $region34: #{tpu_custom_call.1} parent=31 // pred_check_branch
          %272 = sbr.rel (%p270) target = $region36
        $region35: #{tpu_custom_call.1} parent=31 // pred_region
          %274 = dma.done %s266, 4096
        $region36: #{tpu_custom_call.1} parent=31 // pred_fallthru
          _
        // Predicated region
        $region37: #{tpu_custom_call.1} parent=31 // pred_check
          %p275 = pneg %p83
        $region38: #{tpu_custom_call.1} parent=31 // pred_check_branch
          %277 = sbr.rel (%p275) target = $region40
        $region39: #{tpu_custom_call.1} parent=31 // pred_region
          %279 = dma.done [#allocation6], 12288
        $region40: #{tpu_custom_call.1} parent=31 // pred_fallthru
          _
        // Predicated region
        $region41: #{tpu_custom_call.1} parent=31 // pred_check
          %p280 = pneg %p104
        $region42: #{tpu_custom_call.1} parent=31 // pred_check_branch
          %282 = sbr.rel (%p280) target = $region44
        $region43: #{tpu_custom_call.1} parent=31 // pred_region
          %284 = dma.done [#allocation6], 96
        $region44: #{tpu_custom_call.1} parent=31 // pred_fallthru
          _
        %s285 = sand.u32 %s49, 1
        %s286 = scalar_lea.sflag [#allocation3], %s285
        %s287 = sand.u32 %s49, 1
        %s288 = smul.addr %s287, 256
        %s289 = scalar_lea.vmem [#allocation2], %s288
        %p290 = pneg %p62
        %p291 = pneg %p59
        %p292 = pneg %p83
        %p293 = pneg %p80
        %p294 = pneg %p104
        %p295 = pneg %p101
        %p296 = pneg %p132
        %p297 = pneg %p129
        %s298 = sand.u32 %s119, 1
        %s299 = scalar_lea.sflag [#allocation4], %s298
        %s300 = sand.u32 %s119, 1
        %s301 = smul.addr %s300, 128
        %s302 = scalar_lea.vmem [#allocation8], %s301
        %p303 = pneg %p160
        %p304 = pneg %p157
        %s305 = sand.u32 %s27, 1
        %s306 = scalar_lea.sflag [#allocation10], %s305
        %s307 = sand.u32 %s147, 1
        %s308 = smul.addr %s307, 128
        %s309 = scalar_lea.vmem [#allocation9], %s308
        %p310 = pneg %p188
        %p311 = pneg %p185
        %s312 = sand.u32 %s27, 1
        %s313 = scalar_lea.sflag [#allocation10], %s312
        %s314 = sand.u32 %s175, 1
        %s315 = smul.addr %s314, 128
        %s316 = scalar_lea.vmem [#allocation11], %s315
        %s317 = smul.u32 16, %s32
        %s318 = smul.u32 16, %s32
        %s319 = smul.u32 16, %s32
        %s320 = smul.u32 16, %s32
        %v321 = vld [vmem:[%s269] sm:$0xff]
        %v322 = vld [vmem:[%s269 + $0x8] sm:$0xff]
        %v323 = vld [vmem:[%s269 + $0x10] sm:$0xff]
        %v324 = vld [vmem:[%s269 + $0x18] sm:$0xff]
        %v325 = vld [vmem:[%s269 + $0x20] sm:$0xff]
        %v326 = vld [vmem:[%s269 + $0x28] sm:$0xff]
        %v327 = vld [vmem:[%s269 + $0x30] sm:$0xff]
        %v328 = vld [vmem:[%s269 + $0x38] sm:$0xff]
        %v329 = vld [vmem:[%s269 + $0x40] sm:$0xff]
        %v330 = vld [vmem:[%s269 + $0x48] sm:$0xff]
        %v331 = vld [vmem:[%s269 + $0x50] sm:$0xff]
        %v332 = vld [vmem:[%s269 + $0x58] sm:$0xff]
        %v333 = vld [vmem:[%s269 + $0x60] sm:$0xff]
        %v334 = vld [vmem:[%s269 + $0x68] sm:$0xff]
        %v335 = vld [vmem:[%s269 + $0x70] sm:$0xff]
        %v336 = vld [vmem:[%s269 + $0x78] sm:$0xff]
        %v337 = vld [vmem:[%s269 + $0x80] sm:$0xff]
        %v338 = vld [vmem:[%s269 + $0x88] sm:$0xff]
        %v339 = vld [vmem:[%s269 + $0x90] sm:$0xff]
        %v340 = vld [vmem:[%s269 + $0x98] sm:$0xff]
        %v341 = vld [vmem:[%s269 + $0xa0] sm:$0xff]
        %v342 = vld [vmem:[%s269 + $0xa8] sm:$0xff]
        %v343 = vld [vmem:[%s269 + $0xb0] sm:$0xff]
        %v344 = vld [vmem:[%s269 + $0xb8] sm:$0xff]
        %v345 = vld [vmem:[%s269 + $0xc0] sm:$0xff]
        %v346 = vld [vmem:[%s269 + $0xc8] sm:$0xff]
        %v347 = vld [vmem:[%s269 + $0xd0] sm:$0xff]
        %v348 = vld [vmem:[%s269 + $0xd8] sm:$0xff]
        %v349 = vld [vmem:[%s269 + $0xe0] sm:$0xff]
        %v350 = vld [vmem:[%s269 + $0xe8] sm:$0xff]
        %v351 = vld [vmem:[%s269 + $0xf0] sm:$0xff]
        %v352 = vld [vmem:[%s269 + $0xf8] sm:$0xff]
        %v353 = vadd.f32 %v321, %v322
        %354 = vadd.xlane.f32.xlu0 %v353
        %v355 = vpop.xlane.xlu0 %354
        %v356 = vadd.f32 %v323, %v324
        %357 = vadd.xlane.f32.xlu0 %v356
        %v358 = vpop.xlane.xlu0 %357
        %v359 = vadd.f32 %v325, %v326
        %360 = vadd.xlane.f32.xlu0 %v359
        %v361 = vpop.xlane.xlu0 %360
        %v362 = vadd.f32 %v327, %v328
        %363 = vadd.xlane.f32.xlu0 %v362
        %v364 = vpop.xlane.xlu0 %363
        %v365 = vadd.f32 %v329, %v330
        %366 = vadd.xlane.f32.xlu0 %v365
        %v367 = vpop.xlane.xlu0 %366
        %v368 = vadd.f32 %v331, %v332
        %369 = vadd.xlane.f32.xlu0 %v368
        %v370 = vpop.xlane.xlu0 %369
        %v371 = vadd.f32 %v333, %v334
        %372 = vadd.xlane.f32.xlu0 %v371
        %v373 = vpop.xlane.xlu0 %372
        %v374 = vadd.f32 %v335, %v336
        %375 = vadd.xlane.f32.xlu0 %v374
        %v376 = vpop.xlane.xlu0 %375
        %v377 = vadd.f32 %v337, %v338
        %378 = vadd.xlane.f32.xlu0 %v377
        %v379 = vpop.xlane.xlu0 %378
        %v380 = vadd.f32 %v339, %v340
        %381 = vadd.xlane.f32.xlu0 %v380
        %v382 = vpop.xlane.xlu0 %381
        %v383 = vadd.f32 %v341, %v342
        %384 = vadd.xlane.f32.xlu0 %v383
        %v385 = vpop.xlane.xlu0 %384
        %v386 = vadd.f32 %v343, %v344
        %387 = vadd.xlane.f32.xlu0 %v386
        %v388 = vpop.xlane.xlu0 %387
        %v389 = vadd.f32 %v345, %v346
        %390 = vadd.xlane.f32.xlu0 %v389
        %v391 = vpop.xlane.xlu0 %390
        %v392 = vadd.f32 %v347, %v348
        %393 = vadd.xlane.f32.xlu0 %v392
        %v394 = vpop.xlane.xlu0 %393
        %v395 = vadd.f32 %v349, %v350
        %396 = vadd.xlane.f32.xlu0 %v395
        %v397 = vpop.xlane.xlu0 %396
        %v398 = vadd.f32 %v351, %v352
        %399 = vadd.xlane.f32.xlu0 %v398
        %v400 = vpop.xlane.xlu0 %399
        %v401 = vrcp.pop 256.0
        %v402 = vmul.f32 256.0, %v401
        %v403 = vsub.f32 1.0, %v402
        %v404 = vmul.f32 %v401, %v403
        %v405 = vadd.f32 %v401, %v404
        %vm406 = vweird.f32 %v401
        %v407 = vsel %vm406, %v401, %v405
        %v408 = vmul.f32 %v355, %v407
        %v409 = vmul.f32 %v358, %v407
        %v410 = vmul.f32 %v361, %v407
        %v411 = vmul.f32 %v364, %v407
        %v412 = vmul.f32 %v367, %v407
        %v413 = vmul.f32 %v370, %v407
        %v414 = vmul.f32 %v373, %v407
        %v415 = vmul.f32 %v376, %v407
        %v416 = vmul.f32 %v379, %v407
        %v417 = vmul.f32 %v382, %v407
        %v418 = vmul.f32 %v385, %v407
        %v419 = vmul.f32 %v388, %v407
        %v420 = vmul.f32 %v391, %v407
        %v421 = vmul.f32 %v394, %v407
        %v422 = vmul.f32 %v397, %v407
        %v423 = vmul.f32 %v400, %v407
        %v424 = vsub.f32 %v321, %v408
        %v425 = vsub.f32 %v322, %v408
        %v426 = vsub.f32 %v323, %v409
        %v427 = vsub.f32 %v324, %v409
        %v428 = vsub.f32 %v325, %v410
        %v429 = vsub.f32 %v326, %v410
        %v430 = vsub.f32 %v327, %v411
        %v431 = vsub.f32 %v328, %v411
        %v432 = vsub.f32 %v329, %v412
        %v433 = vsub.f32 %v330, %v412
        %v434 = vsub.f32 %v331, %v413
        %v435 = vsub.f32 %v332, %v413
        %v436 = vsub.f32 %v333, %v414
        %v437 = vsub.f32 %v334, %v414
        %v438 = vsub.f32 %v335, %v415
        %v439 = vsub.f32 %v336, %v415
        %v440 = vsub.f32 %v337, %v416
        %v441 = vsub.f32 %v338, %v416
        %v442 = vsub.f32 %v339, %v417
        %v443 = vsub.f32 %v340, %v417
        %v444 = vsub.f32 %v341, %v418
        %v445 = vsub.f32 %v342, %v418
        %v446 = vsub.f32 %v343, %v419
        %v447 = vsub.f32 %v344, %v419
        %v448 = vsub.f32 %v345, %v420
        %v449 = vsub.f32 %v346, %v420
        %v450 = vsub.f32 %v347, %v421
        %v451 = vsub.f32 %v348, %v421
        %v452 = vsub.f32 %v349, %v422
        %v453 = vsub.f32 %v350, %v422
        %v454 = vsub.f32 %v351, %v423
        %v455 = vsub.f32 %v352, %v423
        %v456 = vmul.f32 %v424, %v424
        %v457 = vmul.f32 %v425, %v425
        %v458 = vmul.f32 %v426, %v426
        %v459 = vmul.f32 %v427, %v427
        %v460 = vmul.f32 %v428, %v428
        %v461 = vmul.f32 %v429, %v429
        %v462 = vmul.f32 %v430, %v430
        %v463 = vmul.f32 %v431, %v431
        %v464 = vmul.f32 %v432, %v432
        %v465 = vmul.f32 %v433, %v433
        %v466 = vmul.f32 %v434, %v434
        %v467 = vmul.f32 %v435, %v435
        %v468 = vmul.f32 %v436, %v436
        %v469 = vmul.f32 %v437, %v437
        %v470 = vmul.f32 %v438, %v438
        %v471 = vmul.f32 %v439, %v439
        %v472 = vmul.f32 %v440, %v440
        %v473 = vmul.f32 %v441, %v441
        %v474 = vmul.f32 %v442, %v442
        %v475 = vmul.f32 %v443, %v443
        %v476 = vmul.f32 %v444, %v444
        %v477 = vmul.f32 %v445, %v445
        %v478 = vmul.f32 %v446, %v446
        %v479 = vmul.f32 %v447, %v447
        %v480 = vmul.f32 %v448, %v448
        %v481 = vmul.f32 %v449, %v449
        %v482 = vmul.f32 %v450, %v450
        %v483 = vmul.f32 %v451, %v451
        %v484 = vmul.f32 %v452, %v452
        %v485 = vmul.f32 %v453, %v453
        %v486 = vmul.f32 %v454, %v454
        %v487 = vmul.f32 %v455, %v455
        %v488 = vadd.f32 %v456, %v457
        %489 = vadd.xlane.f32.xlu0 %v488
        %v490 = vpop.xlane.xlu0 %489
        %v491 = vadd.f32 %v458, %v459
        %492 = vadd.xlane.f32.xlu0 %v491
        %v493 = vpop.xlane.xlu0 %492
        %v494 = vadd.f32 %v460, %v461
        %495 = vadd.xlane.f32.xlu0 %v494
        %v496 = vpop.xlane.xlu0 %495
        %v497 = vadd.f32 %v462, %v463
        %498 = vadd.xlane.f32.xlu0 %v497
        %v499 = vpop.xlane.xlu0 %498
        %v500 = vadd.f32 %v464, %v465
        %501 = vadd.xlane.f32.xlu0 %v500
        %v502 = vpop.xlane.xlu0 %501
        %v503 = vadd.f32 %v466, %v467
        %504 = vadd.xlane.f32.xlu0 %v503
        %v505 = vpop.xlane.xlu0 %504
        %v506 = vadd.f32 %v468, %v469
        %507 = vadd.xlane.f32.xlu0 %v506
        %v508 = vpop.xlane.xlu0 %507
        %v509 = vadd.f32 %v470, %v471
        %510 = vadd.xlane.f32.xlu0 %v509
        %v511 = vpop.xlane.xlu0 %510
        %v512 = vadd.f32 %v472, %v473
        %513 = vadd.xlane.f32.xlu0 %v512
        %v514 = vpop.xlane.xlu0 %513
        %v515 = vadd.f32 %v474, %v475
        %516 = vadd.xlane.f32.xlu0 %v515
        %v517 = vpop.xlane.xlu0 %516
        %v518 = vadd.f32 %v476, %v477
        %519 = vadd.xlane.f32.xlu0 %v518
        %v520 = vpop.xlane.xlu0 %519
        %v521 = vadd.f32 %v478, %v479
        %522 = vadd.xlane.f32.xlu0 %v521
        %v523 = vpop.xlane.xlu0 %522
        %v524 = vadd.f32 %v480, %v481
        %525 = vadd.xlane.f32.xlu0 %v524
        %v526 = vpop.xlane.xlu0 %525
        %v527 = vadd.f32 %v482, %v483
        %528 = vadd.xlane.f32.xlu0 %v527
        %v529 = vpop.xlane.xlu0 %528
        %v530 = vadd.f32 %v484, %v485
        %531 = vadd.xlane.f32.xlu0 %v530
        %v532 = vpop.xlane.xlu0 %531
        %v533 = vadd.f32 %v486, %v487
        %534 = vadd.xlane.f32.xlu0 %v533
        %v535 = vpop.xlane.xlu0 %534
        %v536 = vmul.f32 %v490, %v407
        %v537 = vmul.f32 %v493, %v407
        %v538 = vmul.f32 %v496, %v407
        %v539 = vmul.f32 %v499, %v407
        %v540 = vmul.f32 %v502, %v407
        %v541 = vmul.f32 %v505, %v407
        %v542 = vmul.f32 %v508, %v407
        %v543 = vmul.f32 %v511, %v407
        %v544 = vmul.f32 %v514, %v407
        %v545 = vmul.f32 %v517, %v407
        %v546 = vmul.f32 %v520, %v407
        %v547 = vmul.f32 %v523, %v407
        %v548 = vmul.f32 %v526, %v407
        %v549 = vmul.f32 %v529, %v407
        %v550 = vmul.f32 %v532, %v407
        %v551 = vmul.f32 %v535, %v407
        %v552 = vadd.f32 %v536, 1e-06
        %v553 = vadd.f32 %v537, 1e-06
        %v554 = vadd.f32 %v538, 1e-06
        %v555 = vadd.f32 %v539, 1e-06
        %v556 = vadd.f32 %v540, 1e-06
        %v557 = vadd.f32 %v541, 1e-06
        %v558 = vadd.f32 %v542, 1e-06
        %v559 = vadd.f32 %v543, 1e-06
        %v560 = vadd.f32 %v544, 1e-06
        %v561 = vadd.f32 %v545, 1e-06
        %v562 = vadd.f32 %v546, 1e-06
        %v563 = vadd.f32 %v547, 1e-06
        %v564 = vadd.f32 %v548, 1e-06
        %v565 = vadd.f32 %v549, 1e-06
        %v566 = vadd.f32 %v550, 1e-06
        %v567 = vadd.f32 %v551, 1e-06
        %v568 = vrsqrt.pop %v552
        %v569 = vmul.f32 %v568, %v552
        %v570 = vmul.f32 %v569, %v568
        %v571 = vmul.f32 0.5, %v570
        %v572 = vsub.f32 1.5, %v571
        %v573 = vmul.f32 %v568, %v572
        %vm574 = vweird.f32 %v552
        %vm575 = vweird.f32 %v568
        %vm576 = vmor %vm574, %vm575
        %v577 = vsel %vm576, %v568, %v573
        %v578 = vrsqrt.pop %v553
        %v579 = vmul.f32 %v578, %v553
        %v580 = vmul.f32 %v579, %v578
        %v581 = vmul.f32 0.5, %v580
        %v582 = vsub.f32 1.5, %v581
        %v583 = vmul.f32 %v578, %v582
        %vm584 = vweird.f32 %v553
        %vm585 = vweird.f32 %v578
        %vm586 = vmor %vm584, %vm585
        %v587 = vsel %vm586, %v578, %v583
        %v588 = vrsqrt.pop %v554
        %v589 = vmul.f32 %v588, %v554
        %v590 = vmul.f32 %v589, %v588
        %v591 = vmul.f32 0.5, %v590
        %v592 = vsub.f32 1.5, %v591
        %v593 = vmul.f32 %v588, %v592
        %vm594 = vweird.f32 %v554
        %vm595 = vweird.f32 %v588
        %vm596 = vmor %vm594, %vm595
        %v597 = vsel %vm596, %v588, %v593
        %v598 = vrsqrt.pop %v555
        %v599 = vmul.f32 %v598, %v555
        %v600 = vmul.f32 %v599, %v598
        %v601 = vmul.f32 0.5, %v600
        %v602 = vsub.f32 1.5, %v601
        %v603 = vmul.f32 %v598, %v602
        %vm604 = vweird.f32 %v555
        %vm605 = vweird.f32 %v598
        %vm606 = vmor %vm604, %vm605
        %v607 = vsel %vm606, %v598, %v603
        %v608 = vrsqrt.pop %v556
        %v609 = vmul.f32 %v608, %v556
        %v610 = vmul.f32 %v609, %v608
        %v611 = vmul.f32 0.5, %v610
        %v612 = vsub.f32 1.5, %v611
        %v613 = vmul.f32 %v608, %v612
        %vm614 = vweird.f32 %v556
        %vm615 = vweird.f32 %v608
        %vm616 = vmor %vm614, %vm615
        %v617 = vsel %vm616, %v608, %v613
        %v618 = vrsqrt.pop %v557
        %v619 = vmul.f32 %v618, %v557
        %v620 = vmul.f32 %v619, %v618
        %v621 = vmul.f32 0.5, %v620
        %v622 = vsub.f32 1.5, %v621
        %v623 = vmul.f32 %v618, %v622
        %vm624 = vweird.f32 %v557
        %vm625 = vweird.f32 %v618
        %vm626 = vmor %vm624, %vm625
        %v627 = vsel %vm626, %v618, %v623
        %v628 = vrsqrt.pop %v558
        %v629 = vmul.f32 %v628, %v558
        %v630 = vmul.f32 %v629, %v628
        %v631 = vmul.f32 0.5, %v630
        %v632 = vsub.f32 1.5, %v631
        %v633 = vmul.f32 %v628, %v632
        %vm634 = vweird.f32 %v558
        %vm635 = vweird.f32 %v628
        %vm636 = vmor %vm634, %vm635
        %v637 = vsel %vm636, %v628, %v633
        %v638 = vrsqrt.pop %v559
        %v639 = vmul.f32 %v638, %v559
        %v640 = vmul.f32 %v639, %v638
        %v641 = vmul.f32 0.5, %v640
        %v642 = vsub.f32 1.5, %v641
        %v643 = vmul.f32 %v638, %v642
        %vm644 = vweird.f32 %v559
        %vm645 = vweird.f32 %v638
        %vm646 = vmor %vm644, %vm645
        %v647 = vsel %vm646, %v638, %v643
        %v648 = vrsqrt.pop %v560
        %v649 = vmul.f32 %v648, %v560
        %v650 = vmul.f32 %v649, %v648
        %v651 = vmul.f32 0.5, %v650
        %v652 = vsub.f32 1.5, %v651
        %v653 = vmul.f32 %v648, %v652
        %vm654 = vweird.f32 %v560
        %vm655 = vweird.f32 %v648
        %vm656 = vmor %vm654, %vm655
        %v657 = vsel %vm656, %v648, %v653
        %v658 = vrsqrt.pop %v561
        %v659 = vmul.f32 %v658, %v561
        %v660 = vmul.f32 %v659, %v658
        %v661 = vmul.f32 0.5, %v660
        %v662 = vsub.f32 1.5, %v661
        %v663 = vmul.f32 %v658, %v662
        %vm664 = vweird.f32 %v561
        %vm665 = vweird.f32 %v658
        %vm666 = vmor %vm664, %vm665
        %v667 = vsel %vm666, %v658, %v663
        %v668 = vrsqrt.pop %v562
        %v669 = vmul.f32 %v668, %v562
        %v670 = vmul.f32 %v669, %v668
        %v671 = vmul.f32 0.5, %v670
        %v672 = vsub.f32 1.5, %v671
        %v673 = vmul.f32 %v668, %v672
        %vm674 = vweird.f32 %v562
        %vm675 = vweird.f32 %v668
        %vm676 = vmor %vm674, %vm675
        %v677 = vsel %vm676, %v668, %v673
        %v678 = vrsqrt.pop %v563
        %v679 = vmul.f32 %v678, %v563
        %v680 = vmul.f32 %v679, %v678
        %v681 = vmul.f32 0.5, %v680
        %v682 = vsub.f32 1.5, %v681
        %v683 = vmul.f32 %v678, %v682
        %vm684 = vweird.f32 %v563
        %vm685 = vweird.f32 %v678
        %vm686 = vmor %vm684, %vm685
        %v687 = vsel %vm686, %v678, %v683
        %v688 = vrsqrt.pop %v564
        %v689 = vmul.f32 %v688, %v564
        %v690 = vmul.f32 %v689, %v688
        %v691 = vmul.f32 0.5, %v690
        %v692 = vsub.f32 1.5, %v691
        %v693 = vmul.f32 %v688, %v692
        %vm694 = vweird.f32 %v564
        %vm695 = vweird.f32 %v688
        %vm696 = vmor %vm694, %vm695
        %v697 = vsel %vm696, %v688, %v693
        %v698 = vrsqrt.pop %v565
        %v699 = vmul.f32 %v698, %v565
        %v700 = vmul.f32 %v699, %v698
        %v701 = vmul.f32 0.5, %v700
        %v702 = vsub.f32 1.5, %v701
        %v703 = vmul.f32 %v698, %v702
        %vm704 = vweird.f32 %v565
        %vm705 = vweird.f32 %v698
        %vm706 = vmor %vm704, %vm705
        %v707 = vsel %vm706, %v698, %v703
        %v708 = vrsqrt.pop %v566
        %v709 = vmul.f32 %v708, %v566
        %v710 = vmul.f32 %v709, %v708
        %v711 = vmul.f32 0.5, %v710
        %v712 = vsub.f32 1.5, %v711
        %v713 = vmul.f32 %v708, %v712
        %vm714 = vweird.f32 %v566
        %vm715 = vweird.f32 %v708
        %vm716 = vmor %vm714, %vm715
        %v717 = vsel %vm716, %v708, %v713
        %v718 = vrsqrt.pop %v567
        %v719 = vmul.f32 %v718, %v567
        %v720 = vmul.f32 %v719, %v718
        %v721 = vmul.f32 0.5, %v720
        %v722 = vsub.f32 1.5, %v721
        %v723 = vmul.f32 %v718, %v722
        %vm724 = vweird.f32 %v567
        %vm725 = vweird.f32 %v718
        %vm726 = vmor %vm724, %vm725
        %v727 = vsel %vm726, %v718, %v723
        %v728 = vmul.f32 %v424, %v577
        %v729 = vmul.f32 %v425, %v577
        %v730 = vmul.f32 %v426, %v587
        %v731 = vmul.f32 %v427, %v587
        %v732 = vmul.f32 %v428, %v597
        %v733 = vmul.f32 %v429, %v597
        %v734 = vmul.f32 %v430, %v607
        %v735 = vmul.f32 %v431, %v607
        %v736 = vmul.f32 %v432, %v617
        %v737 = vmul.f32 %v433, %v617
        %v738 = vmul.f32 %v434, %v627
        %v739 = vmul.f32 %v435, %v627
        %v740 = vmul.f32 %v436, %v637
        %v741 = vmul.f32 %v437, %v637
        %v742 = vmul.f32 %v438, %v647
        %v743 = vmul.f32 %v439, %v647
        %v744 = vmul.f32 %v440, %v657
        %v745 = vmul.f32 %v441, %v657
        %v746 = vmul.f32 %v442, %v667
        %v747 = vmul.f32 %v443, %v667
        %v748 = vmul.f32 %v444, %v677
        %v749 = vmul.f32 %v445, %v677
        %v750 = vmul.f32 %v446, %v687
        %v751 = vmul.f32 %v447, %v687
        %v752 = vmul.f32 %v448, %v697
        %v753 = vmul.f32 %v449, %v697
        %v754 = vmul.f32 %v450, %v707
        %v755 = vmul.f32 %v451, %v707
        %v756 = vmul.f32 %v452, %v717
        %v757 = vmul.f32 %v453, %v717
        %v758 = vmul.f32 %v454, %v727
        %v759 = vmul.f32 %v455, %v727
        %v760 = vpack.c.bf16 %v730, %v728
        %v761 = vpack.c.bf16 %v731, %v729
        %v762 = vpack.c.bf16 %v734, %v732
        %v763 = vpack.c.bf16 %v735, %v733
        %v764 = vpack.c.bf16 %v738, %v736
        %v765 = vpack.c.bf16 %v739, %v737
        %v766 = vpack.c.bf16 %v742, %v740
        %v767 = vpack.c.bf16 %v743, %v741
        %v768 = vpack.c.bf16 %v746, %v744
        %v769 = vpack.c.bf16 %v747, %v745
        %v770 = vpack.c.bf16 %v750, %v748
        %v771 = vpack.c.bf16 %v751, %v749
        %v772 = vpack.c.bf16 %v754, %v752
        %v773 = vpack.c.bf16 %v755, %v753
        %v774 = vpack.c.bf16 %v758, %v756
        %v775 = vpack.c.bf16 %v759, %v757
        %v776 = vld [vmem:[#allocation5] sm:$0xff]
        %v777 = vld [vmem:[#allocation5 + $0x8] sm:$0xff]
        %v778 = vld [vmem:[#allocation5 + $0x10] sm:$0xff]
        %v779 = vld [vmem:[#allocation5 + $0x18] sm:$0xff]
        %v780 = vld [vmem:[#allocation5 + $0x20] sm:$0xff]
        %v781 = vld [vmem:[#allocation5 + $0x28] sm:$0xff]
        %v782 = vld [vmem:[#allocation5 + $0x30] sm:$0xff]
        %v783 = vld [vmem:[#allocation5 + $0x38] sm:$0xff]
        %v784 = vld [vmem:[#allocation5 + $0x40] sm:$0xff]
        %v785 = vld [vmem:[#allocation5 + $0x48] sm:$0xff]
        %v786 = vld [vmem:[#allocation5 + $0x50] sm:$0xff]
        %v787 = vld [vmem:[#allocation5 + $0x58] sm:$0xff]
        %v788 = vld [vmem:[#allocation5 + $0x60] sm:$0xff]
        %v789 = vld [vmem:[#allocation5 + $0x68] sm:$0xff]
        %v790 = vld [vmem:[#allocation5 + $0x70] sm:$0xff]
        %v791 = vld [vmem:[#allocation5 + $0x78] sm:$0xff]
        %v792 = vld [vmem:[#allocation5 + $0x80] sm:$0xff]
        %v793 = vld [vmem:[#allocation5 + $0x88] sm:$0xff]
        %v794 = vld [vmem:[#allocation5 + $0x90] sm:$0xff]
        %v795 = vld [vmem:[#allocation5 + $0x98] sm:$0xff]
        %v796 = vld [vmem:[#allocation5 + $0xa0] sm:$0xff]
        %v797 = vld [vmem:[#allocation5 + $0xa8] sm:$0xff]
        %v798 = vld [vmem:[#allocation5 + $0xb0] sm:$0xff]
        %v799 = vld [vmem:[#allocation5 + $0xb8] sm:$0xff]
        %v800 = vld [vmem:[#allocation5 + $0xc0] sm:$0xff]
        %v801 = vld [vmem:[#allocation5 + $0xc8] sm:$0xff]
        %v802 = vld [vmem:[#allocation5 + $0xd0] sm:$0xff]
        %v803 = vld [vmem:[#allocation5 + $0xd8] sm:$0xff]
        %v804 = vld [vmem:[#allocation5 + $0xe0] sm:$0xff]
        %v805 = vld [vmem:[#allocation5 + $0xe8] sm:$0xff]
        %v806 = vld [vmem:[#allocation5 + $0xf0] sm:$0xff]
        %v807 = vld [vmem:[#allocation5 + $0xf8] sm:$0xff]
        %v808 = vld [vmem:[#allocation5 + $0x100] sm:$0xff]
        %v809 = vld [vmem:[#allocation5 + $0x108] sm:$0xff]
        %v810 = vld [vmem:[#allocation5 + $0x110] sm:$0xff]
        %v811 = vld [vmem:[#allocation5 + $0x118] sm:$0xff]
        %v812 = vld [vmem:[#allocation5 + $0x120] sm:$0xff]
        %v813 = vld [vmem:[#allocation5 + $0x128] sm:$0xff]
        %v814 = vld [vmem:[#allocation5 + $0x130] sm:$0xff]
        %v815 = vld [vmem:[#allocation5 + $0x138] sm:$0xff]
        %v816 = vld [vmem:[#allocation5 + $0x140] sm:$0xff]
        %v817 = vld [vmem:[#allocation5 + $0x148] sm:$0xff]
        %v818 = vld [vmem:[#allocation5 + $0x150] sm:$0xff]
        %v819 = vld [vmem:[#allocation5 + $0x158] sm:$0xff]
        %v820 = vld [vmem:[#allocation5 + $0x160] sm:$0xff]
        %v821 = vld [vmem:[#allocation5 + $0x168] sm:$0xff]
        %v822 = vld [vmem:[#allocation5 + $0x170] sm:$0xff]
        %v823 = vld [vmem:[#allocation5 + $0x178] sm:$0xff]
        %v824 = vld [vmem:[#allocation5 + $0x180] sm:$0xff]
        %v825 = vld [vmem:[#allocation5 + $0x188] sm:$0xff]
        %v826 = vld [vmem:[#allocation5 + $0x190] sm:$0xff]
        %v827 = vld [vmem:[#allocation5 + $0x198] sm:$0xff]
        %v828 = vld [vmem:[#allocation5 + $0x1a0] sm:$0xff]
        %v829 = vld [vmem:[#allocation5 + $0x1a8] sm:$0xff]
        %v830 = vld [vmem:[#allocation5 + $0x1b0] sm:$0xff]
        %v831 = vld [vmem:[#allocation5 + $0x1b8] sm:$0xff]
        %v832 = vld [vmem:[#allocation5 + $0x1c0] sm:$0xff]
        %v833 = vld [vmem:[#allocation5 + $0x1c8] sm:$0xff]
        %v834 = vld [vmem:[#allocation5 + $0x1d0] sm:$0xff]
        %v835 = vld [vmem:[#allocation5 + $0x1d8] sm:$0xff]
        %v836 = vld [vmem:[#allocation5 + $0x1e0] sm:$0xff]
        %v837 = vld [vmem:[#allocation5 + $0x1e8] sm:$0xff]
        %v838 = vld [vmem:[#allocation5 + $0x1f0] sm:$0xff]
        %v839 = vld [vmem:[#allocation5 + $0x1f8] sm:$0xff]
        %v840 = vld [vmem:[#allocation5 + $0x200] sm:$0xff]
        %v841 = vld [vmem:[#allocation5 + $0x208] sm:$0xff]
        %v842 = vld [vmem:[#allocation5 + $0x210] sm:$0xff]
        %v843 = vld [vmem:[#allocation5 + $0x218] sm:$0xff]
        %v844 = vld [vmem:[#allocation5 + $0x220] sm:$0xff]
        %v845 = vld [vmem:[#allocation5 + $0x228] sm:$0xff]
        %v846 = vld [vmem:[#allocation5 + $0x230] sm:$0xff]
        %v847 = vld [vmem:[#allocation5 + $0x238] sm:$0xff]
        %v848 = vld [vmem:[#allocation5 + $0x240] sm:$0xff]
        %v849 = vld [vmem:[#allocation5 + $0x248] sm:$0xff]
        %v850 = vld [vmem:[#allocation5 + $0x250] sm:$0xff]
        %v851 = vld [vmem:[#allocation5 + $0x258] sm:$0xff]
        %v852 = vld [vmem:[#allocation5 + $0x260] sm:$0xff]
        %v853 = vld [vmem:[#allocation5 + $0x268] sm:$0xff]
        %v854 = vld [vmem:[#allocation5 + $0x270] sm:$0xff]
        %v855 = vld [vmem:[#allocation5 + $0x278] sm:$0xff]
        %v856 = vld [vmem:[#allocation5 + $0x280] sm:$0xff]
        %v857 = vld [vmem:[#allocation5 + $0x288] sm:$0xff]
        %v858 = vld [vmem:[#allocation5 + $0x290] sm:$0xff]
        %v859 = vld [vmem:[#allocation5 + $0x298] sm:$0xff]
        %v860 = vld [vmem:[#allocation5 + $0x2a0] sm:$0xff]
        %v861 = vld [vmem:[#allocation5 + $0x2a8] sm:$0xff]
        %v862 = vld [vmem:[#allocation5 + $0x2b0] sm:$0xff]
        %v863 = vld [vmem:[#allocation5 + $0x2b8] sm:$0xff]
        %v864 = vld [vmem:[#allocation5 + $0x2c0] sm:$0xff]
        %v865 = vld [vmem:[#allocation5 + $0x2c8] sm:$0xff]
        %v866 = vld [vmem:[#allocation5 + $0x2d0] sm:$0xff]
        %v867 = vld [vmem:[#allocation5 + $0x2d8] sm:$0xff]
        %v868 = vld [vmem:[#allocation5 + $0x2e0] sm:$0xff]
        %v869 = vld [vmem:[#allocation5 + $0x2e8] sm:$0xff]
        %v870 = vld [vmem:[#allocation5 + $0x2f0] sm:$0xff]
        %v871 = vld [vmem:[#allocation5 + $0x2f8] sm:$0xff]
        %v872 = vld [vmem:[#allocation7] sm:$0x3f]
        %v874 = vperm.slane %v872, 0
        %v875 = vperm.slane %v872, 1
        %v876 = vperm.slane %v872, 2
        %v877 = vperm.slane %v872, 3
        %v878 = vperm.slane %v872, 4
        %v879 = vperm.slane %v872, 5
        %v982 = vunpack.c.l.b16 %v776
        %v983 = vunpack.c.h.b16 %v776
        %v984 = vunpack.c.l.b16 %v777
        %v985 = vunpack.c.h.b16 %v777
        %v986 = vunpack.c.l.b16 %v778
        %v987 = vunpack.c.h.b16 %v778
        %v988 = vunpack.c.l.b16 %v779
        %v989 = vunpack.c.h.b16 %v779
        %v990 = vunpack.c.l.b16 %v780
        %v991 = vunpack.c.h.b16 %v780
        %v992 = vunpack.c.l.b16 %v781
        %v993 = vunpack.c.h.b16 %v781
        %v994 = vunpack.c.l.b16 %v782
        %v995 = vunpack.c.h.b16 %v782
        %v996 = vunpack.c.l.b16 %v783
        %v997 = vunpack.c.h.b16 %v783
        %v998 = vunpack.c.l.b16 %v784
        %v999 = vunpack.c.h.b16 %v784
        %v1000 = vunpack.c.l.b16 %v785
        %v1001 = vunpack.c.h.b16 %v785
        %v1002 = vunpack.c.l.b16 %v786
        %v1003 = vunpack.c.h.b16 %v786
        %v1004 = vunpack.c.l.b16 %v787
        %v1005 = vunpack.c.h.b16 %v787
        %v1006 = vunpack.c.l.b16 %v788
        %v1007 = vunpack.c.h.b16 %v788
        %v1008 = vunpack.c.l.b16 %v789
        %v1009 = vunpack.c.h.b16 %v789
        %v1010 = vunpack.c.l.b16 %v790
        %v1011 = vunpack.c.h.b16 %v790
        %v1012 = vunpack.c.l.b16 %v791
        %v1013 = vunpack.c.h.b16 %v791
        %v1014 = vunpack.c.l.b16 %v792
        %v1015 = vunpack.c.h.b16 %v792
        %v1016 = vunpack.c.l.b16 %v793
        %v1017 = vunpack.c.h.b16 %v793
        %v1018 = vunpack.c.l.b16 %v794
        %v1019 = vunpack.c.h.b16 %v794
        %v1020 = vunpack.c.l.b16 %v795
        %v1021 = vunpack.c.h.b16 %v795
        %v1022 = vunpack.c.l.b16 %v796
        %v1023 = vunpack.c.h.b16 %v796
        %v1024 = vunpack.c.l.b16 %v797
        %v1025 = vunpack.c.h.b16 %v797
        %v1026 = vunpack.c.l.b16 %v798
        %v1027 = vunpack.c.h.b16 %v798
        %v1028 = vunpack.c.l.b16 %v799
        %v1029 = vunpack.c.h.b16 %v799
        %v1030 = vunpack.c.l.b16 %v800
        %v1031 = vunpack.c.h.b16 %v800
        %v1032 = vunpack.c.l.b16 %v801
        %v1033 = vunpack.c.h.b16 %v801
        %v1034 = vunpack.c.l.b16 %v802
        %v1035 = vunpack.c.h.b16 %v802
        %v1036 = vunpack.c.l.b16 %v803
        %v1037 = vunpack.c.h.b16 %v803
        %v1038 = vunpack.c.l.b16 %v804
        %v1039 = vunpack.c.h.b16 %v804
        %v1040 = vunpack.c.l.b16 %v805
        %v1041 = vunpack.c.h.b16 %v805
        %v1042 = vunpack.c.l.b16 %v806
        %v1043 = vunpack.c.h.b16 %v806
        %v1044 = vunpack.c.l.b16 %v807
        %v1045 = vunpack.c.h.b16 %v807
        %v1046 = vunpack.c.l.b16 %v808
        %v1047 = vunpack.c.h.b16 %v808
        %v1048 = vunpack.c.l.b16 %v809
        %v1049 = vunpack.c.h.b16 %v809
        %v1050 = vunpack.c.l.b16 %v810
        %v1051 = vunpack.c.h.b16 %v810
        %v1052 = vunpack.c.l.b16 %v811
        %v1053 = vunpack.c.h.b16 %v811
        %v1054 = vunpack.c.l.b16 %v812
        %v1055 = vunpack.c.h.b16 %v812
        %v1056 = vunpack.c.l.b16 %v813
        %v1057 = vunpack.c.h.b16 %v813
        %v1058 = vunpack.c.l.b16 %v814
        %v1059 = vunpack.c.h.b16 %v814
        %v1060 = vunpack.c.l.b16 %v815
        %v1061 = vunpack.c.h.b16 %v815
        %v1062 = vunpack.c.l.b16 %v816
        %v1063 = vunpack.c.h.b16 %v816
        %v1064 = vunpack.c.l.b16 %v817
        %v1065 = vunpack.c.h.b16 %v817
        %v1066 = vunpack.c.l.b16 %v818
        %v1067 = vunpack.c.h.b16 %v818
        %v1068 = vunpack.c.l.b16 %v819
        %v1069 = vunpack.c.h.b16 %v819
        %v1070 = vunpack.c.l.b16 %v820
        %v1071 = vunpack.c.h.b16 %v820
        %v1072 = vunpack.c.l.b16 %v821
        %v1073 = vunpack.c.h.b16 %v821
        %v1074 = vunpack.c.l.b16 %v822
        %v1075 = vunpack.c.h.b16 %v822
        %v1076 = vunpack.c.l.b16 %v823
        %v1077 = vunpack.c.h.b16 %v823
        %v1078 = vunpack.c.l.b16 %v824
        %v1079 = vunpack.c.h.b16 %v824
        %v1080 = vunpack.c.l.b16 %v825
        %v1081 = vunpack.c.h.b16 %v825
        %v1082 = vunpack.c.l.b16 %v826
        %v1083 = vunpack.c.h.b16 %v826
        %v1084 = vunpack.c.l.b16 %v827
        %v1085 = vunpack.c.h.b16 %v827
        %v1086 = vunpack.c.l.b16 %v828
        %v1087 = vunpack.c.h.b16 %v828
        %v1088 = vunpack.c.l.b16 %v829
        %v1089 = vunpack.c.h.b16 %v829
        %v1090 = vunpack.c.l.b16 %v830
        %v1091 = vunpack.c.h.b16 %v830
        %v1092 = vunpack.c.l.b16 %v831
        %v1093 = vunpack.c.h.b16 %v831
        %v1094 = vunpack.c.l.b16 %v832
        %v1095 = vunpack.c.h.b16 %v832
        %v1096 = vunpack.c.l.b16 %v833
        %v1097 = vunpack.c.h.b16 %v833
        %v1098 = vunpack.c.l.b16 %v834
        %v1099 = vunpack.c.h.b16 %v834
        %v1100 = vunpack.c.l.b16 %v835
        %v1101 = vunpack.c.h.b16 %v835
        %v1102 = vunpack.c.l.b16 %v836
        %v1103 = vunpack.c.h.b16 %v836
        %v1104 = vunpack.c.l.b16 %v837
        %v1105 = vunpack.c.h.b16 %v837
        %v1106 = vunpack.c.l.b16 %v838
        %v1107 = vunpack.c.h.b16 %v838
        %v1108 = vunpack.c.l.b16 %v839
        %v1109 = vunpack.c.h.b16 %v839
        %v1110 = vunpack.c.l.b16 %v840
        %v1111 = vunpack.c.h.b16 %v840
        %v1112 = vunpack.c.l.b16 %v841
        %v1113 = vunpack.c.h.b16 %v841
        %v1114 = vunpack.c.l.b16 %v842
        %v1115 = vunpack.c.h.b16 %v842
        %v1116 = vunpack.c.l.b16 %v843
        %v1117 = vunpack.c.h.b16 %v843
        %v1118 = vunpack.c.l.b16 %v844
        %v1119 = vunpack.c.h.b16 %v844
        %v1120 = vunpack.c.l.b16 %v845
        %v1121 = vunpack.c.h.b16 %v845
        %v1122 = vunpack.c.l.b16 %v846
        %v1123 = vunpack.c.h.b16 %v846
        %v1124 = vunpack.c.l.b16 %v847
        %v1125 = vunpack.c.h.b16 %v847
        %v1126 = vunpack.c.l.b16 %v848
        %v1127 = vunpack.c.h.b16 %v848
        %v1128 = vunpack.c.l.b16 %v849
        %v1129 = vunpack.c.h.b16 %v849
        %v1130 = vunpack.c.l.b16 %v850
        %v1131 = vunpack.c.h.b16 %v850
        %v1132 = vunpack.c.l.b16 %v851
        %v1133 = vunpack.c.h.b16 %v851
        %v1134 = vunpack.c.l.b16 %v852
        %v1135 = vunpack.c.h.b16 %v852
        %v1136 = vunpack.c.l.b16 %v853
        %v1137 = vunpack.c.h.b16 %v853
        %v1138 = vunpack.c.l.b16 %v854
        %v1139 = vunpack.c.h.b16 %v854
        %v1140 = vunpack.c.l.b16 %v855
        %v1141 = vunpack.c.h.b16 %v855
        %v1142 = vunpack.c.l.b16 %v856
        %v1143 = vunpack.c.h.b16 %v856
        %v1144 = vunpack.c.l.b16 %v857
        %v1145 = vunpack.c.h.b16 %v857
        %v1146 = vunpack.c.l.b16 %v858
        %v1147 = vunpack.c.h.b16 %v858
        %v1148 = vunpack.c.l.b16 %v859
        %v1149 = vunpack.c.h.b16 %v859
        %v1150 = vunpack.c.l.b16 %v860
        %v1151 = vunpack.c.h.b16 %v860
        %v1152 = vunpack.c.l.b16 %v861
        %v1153 = vunpack.c.h.b16 %v861
        %v1154 = vunpack.c.l.b16 %v862
        %v1155 = vunpack.c.h.b16 %v862
        %v1156 = vunpack.c.l.b16 %v863
        %v1157 = vunpack.c.h.b16 %v863
        %v1158 = vunpack.c.l.b16 %v864
        %v1159 = vunpack.c.h.b16 %v864
        %v1160 = vunpack.c.l.b16 %v865
        %v1161 = vunpack.c.h.b16 %v865
        %v1162 = vunpack.c.l.b16 %v866
        %v1163 = vunpack.c.h.b16 %v866
        %v1164 = vunpack.c.l.b16 %v867
        %v1165 = vunpack.c.h.b16 %v867
        %v1166 = vunpack.c.l.b16 %v868
        %v1167 = vunpack.c.h.b16 %v868
        %v1168 = vunpack.c.l.b16 %v869
        %v1169 = vunpack.c.h.b16 %v869
        %v1170 = vunpack.c.l.b16 %v870
        %v1171 = vunpack.c.h.b16 %v870
        %v1172 = vunpack.c.l.b16 %v871
        %v1173 = vunpack.c.h.b16 %v871
        %v1174 = vpack.c.b16 %v988, %v982
        %v1175 = vpack.c.b16 %v989, %v983
        %v1176 = vpack.c.b16 %v990, %v984
        %v1177 = vpack.c.b16 %v991, %v985
        %v1178 = vpack.c.b16 %v992, %v986
        %v1179 = vpack.c.b16 %v993, %v987
        %v1180 = vpack.c.b16 %v1000, %v994
        %v1181 = vpack.c.b16 %v1001, %v995
        %v1182 = vpack.c.b16 %v1002, %v996
        %v1183 = vpack.c.b16 %v1003, %v997
        %v1184 = vpack.c.b16 %v1004, %v998
        %v1185 = vpack.c.b16 %v1005, %v999
        %v1186 = vpack.c.b16 %v1012, %v1006
        %v1187 = vpack.c.b16 %v1013, %v1007
        %v1188 = vpack.c.b16 %v1014, %v1008
        %v1189 = vpack.c.b16 %v1015, %v1009
        %v1190 = vpack.c.b16 %v1016, %v1010
        %v1191 = vpack.c.b16 %v1017, %v1011
        %v1192 = vpack.c.b16 %v1024, %v1018
        %v1193 = vpack.c.b16 %v1025, %v1019
        %v1194 = vpack.c.b16 %v1026, %v1020
        %v1195 = vpack.c.b16 %v1027, %v1021
        %v1196 = vpack.c.b16 %v1028, %v1022
        %v1197 = vpack.c.b16 %v1029, %v1023
        %v1198 = vpack.c.b16 %v1036, %v1030
        %v1199 = vpack.c.b16 %v1037, %v1031
        %v1200 = vpack.c.b16 %v1038, %v1032
        %v1201 = vpack.c.b16 %v1039, %v1033
        %v1202 = vpack.c.b16 %v1040, %v1034
        %v1203 = vpack.c.b16 %v1041, %v1035
        %v1204 = vpack.c.b16 %v1048, %v1042
        %v1205 = vpack.c.b16 %v1049, %v1043
        %v1206 = vpack.c.b16 %v1050, %v1044
        %v1207 = vpack.c.b16 %v1051, %v1045
        %v1208 = vpack.c.b16 %v1052, %v1046
        %v1209 = vpack.c.b16 %v1053, %v1047
        %v1210 = vpack.c.b16 %v1060, %v1054
        %v1211 = vpack.c.b16 %v1061, %v1055
        %v1212 = vpack.c.b16 %v1062, %v1056
        %v1213 = vpack.c.b16 %v1063, %v1057
        %v1214 = vpack.c.b16 %v1064, %v1058
        %v1215 = vpack.c.b16 %v1065, %v1059
        %v1216 = vpack.c.b16 %v1072, %v1066
        %v1217 = vpack.c.b16 %v1073, %v1067
        %v1218 = vpack.c.b16 %v1074, %v1068
        %v1219 = vpack.c.b16 %v1075, %v1069
        %v1220 = vpack.c.b16 %v1076, %v1070
        %v1221 = vpack.c.b16 %v1077, %v1071
        %v1222 = vpack.c.b16 %v1084, %v1078
        %v1223 = vpack.c.b16 %v1085, %v1079
        %v1224 = vpack.c.b16 %v1086, %v1080
        %v1225 = vpack.c.b16 %v1087, %v1081
        %v1226 = vpack.c.b16 %v1088, %v1082
        %v1227 = vpack.c.b16 %v1089, %v1083
        %v1228 = vpack.c.b16 %v1096, %v1090
        %v1229 = vpack.c.b16 %v1097, %v1091
        %v1230 = vpack.c.b16 %v1098, %v1092
        %v1231 = vpack.c.b16 %v1099, %v1093
        %v1232 = vpack.c.b16 %v1100, %v1094
        %v1233 = vpack.c.b16 %v1101, %v1095
        %v1234 = vpack.c.b16 %v1108, %v1102
        %v1235 = vpack.c.b16 %v1109, %v1103
        %v1236 = vpack.c.b16 %v1110, %v1104
        %v1237 = vpack.c.b16 %v1111, %v1105
        %v1238 = vpack.c.b16 %v1112, %v1106
        %v1239 = vpack.c.b16 %v1113, %v1107
        %v1240 = vpack.c.b16 %v1120, %v1114
        %v1241 = vpack.c.b16 %v1121, %v1115
        %v1242 = vpack.c.b16 %v1122, %v1116
        %v1243 = vpack.c.b16 %v1123, %v1117
        %v1244 = vpack.c.b16 %v1124, %v1118
        %v1245 = vpack.c.b16 %v1125, %v1119
        %v1246 = vpack.c.b16 %v1132, %v1126
        %v1247 = vpack.c.b16 %v1133, %v1127
        %v1248 = vpack.c.b16 %v1134, %v1128
        %v1249 = vpack.c.b16 %v1135, %v1129
        %v1250 = vpack.c.b16 %v1136, %v1130
        %v1251 = vpack.c.b16 %v1137, %v1131
        %v1252 = vpack.c.b16 %v1144, %v1138
        %v1253 = vpack.c.b16 %v1145, %v1139
        %v1254 = vpack.c.b16 %v1146, %v1140
        %v1255 = vpack.c.b16 %v1147, %v1141
        %v1256 = vpack.c.b16 %v1148, %v1142
        %v1257 = vpack.c.b16 %v1149, %v1143
        %v1258 = vpack.c.b16 %v1156, %v1150
        %v1259 = vpack.c.b16 %v1157, %v1151
        %v1260 = vpack.c.b16 %v1158, %v1152
        %v1261 = vpack.c.b16 %v1159, %v1153
        %v1262 = vpack.c.b16 %v1160, %v1154
        %v1263 = vpack.c.b16 %v1161, %v1155
        %v1264 = vpack.c.b16 %v1168, %v1162
        %v1265 = vpack.c.b16 %v1169, %v1163
        %v1266 = vpack.c.b16 %v1170, %v1164
        %v1267 = vpack.c.b16 %v1171, %v1165
        %v1268 = vpack.c.b16 %v1172, %v1166
        %v1269 = vpack.c.b16 %v1173, %v1167
        %1366 = vmatpush.bf16.msra.mxu0 %v1216
        %1367 = vmatpush.bf16.msra.mxu0 %v1210
        %1368 = vmatpush.bf16.msra.mxu0 %v1204
        %1369 = vmatpush.bf16.msra.mxu0 %v1198
        %1370 = vmatpush.bf16.msra.mxu0 %v1192
        %1371 = vmatpush.bf16.msra.mxu0 %v1186
        %1372 = vmatpush.bf16.msra.mxu0 %v1180
        %1373 = vmatpush.bf16.msra.mxu0 %v1174
        %1374 = vmatmul.bf16.gmra.mxu0 %v760
        %v1375 = vpop.f32.mrf.mxu0
        %v1376 = vadd.f32 %v874, %v1375
        %v1377 = vpop.f32.mrf.mxu0
        %v1378 = vadd.f32 %v874, %v1377
        %1379 = vmatmul.bf16.gmra.mxu0 %v762
        %v1380 = vpop.f32.mrf.mxu0
        %v1381 = vadd.f32 %v874, %v1380
        %v1382 = vpop.f32.mrf.mxu0
        %v1383 = vadd.f32 %v874, %v1382
        %1384 = vmatmul.bf16.gmra.mxu0 %v764
        %v1385 = vpop.f32.mrf.mxu0
        %v1386 = vadd.f32 %v874, %v1385
        %v1387 = vpop.f32.mrf.mxu0
        %v1388 = vadd.f32 %v874, %v1387
        %1389 = vmatmul.bf16.gmra.mxu0 %v766
        %v1390 = vpop.f32.mrf.mxu0
        %v1391 = vadd.f32 %v874, %v1390
        %v1392 = vpop.f32.mrf.mxu0
        %v1393 = vadd.f32 %v874, %v1392
        %1394 = vmatmul.bf16.gmra.mxu0 %v768
        %v1395 = vpop.f32.mrf.mxu0
        %v1396 = vadd.f32 %v874, %v1395
        %v1397 = vpop.f32.mrf.mxu0
        %v1398 = vadd.f32 %v874, %v1397
        %1399 = vmatmul.bf16.gmra.mxu0 %v770
        %v1400 = vpop.f32.mrf.mxu0
        %v1401 = vadd.f32 %v874, %v1400
        %v1402 = vpop.f32.mrf.mxu0
        %v1403 = vadd.f32 %v874, %v1402
        %1404 = vmatmul.bf16.gmra.mxu0 %v772
        %v1405 = vpop.f32.mrf.mxu0
        %v1406 = vadd.f32 %v874, %v1405
        %v1407 = vpop.f32.mrf.mxu0
        %v1408 = vadd.f32 %v874, %v1407
        %1409 = vmatmul.bf16.gmra.mxu0 %v774
        %v1410 = vpop.f32.mrf.mxu0
        %v1411 = vadd.f32 %v874, %v1410
        %v1412 = vpop.f32.mrf.mxu0
        %v1413 = vadd.f32 %v874, %v1412
        %1414 = vdwg.mxu0
        %1415 = vmatpush.bf16.msra.mxu0 %v1264
        %1416 = vmatpush.bf16.msra.mxu0 %v1258
        %1417 = vmatpush.bf16.msra.mxu0 %v1252
        %1418 = vmatpush.bf16.msra.mxu0 %v1246
        %1419 = vmatpush.bf16.msra.mxu0 %v1240
        %1420 = vmatpush.bf16.msra.mxu0 %v1234
        %1421 = vmatpush.bf16.msra.mxu0 %v1228
        %1422 = vmatpush.bf16.msra.mxu0 %v1222
        %1423 = vmatmul.bf16.gmra.mxu0 %v761
        %v1424 = vpop.f32.mrf.mxu0
        %v1425 = vadd.f32 %v1376, %v1424
        %v1426 = vpop.f32.mrf.mxu0
        %v1427 = vadd.f32 %v1378, %v1426
        %1428 = vmatmul.bf16.gmra.mxu0 %v763
        %v1429 = vpop.f32.mrf.mxu0
        %v1430 = vadd.f32 %v1381, %v1429
        %v1431 = vpop.f32.mrf.mxu0
        %v1432 = vadd.f32 %v1383, %v1431
        %1433 = vmatmul.bf16.gmra.mxu0 %v765
        %v1434 = vpop.f32.mrf.mxu0
        %v1435 = vadd.f32 %v1386, %v1434
        %v1436 = vpop.f32.mrf.mxu0
        %v1437 = vadd.f32 %v1388, %v1436
        %1438 = vmatmul.bf16.gmra.mxu0 %v767
        %v1439 = vpop.f32.mrf.mxu0
        %v1440 = vadd.f32 %v1391, %v1439
        %v1441 = vpop.f32.mrf.mxu0
        %v1442 = vadd.f32 %v1393, %v1441
        %1443 = vmatmul.bf16.gmra.mxu0 %v769
        %v1444 = vpop.f32.mrf.mxu0
        %v1445 = vadd.f32 %v1396, %v1444
        %v1446 = vpop.f32.mrf.mxu0
        %v1447 = vadd.f32 %v1398, %v1446
        %1448 = vmatmul.bf16.gmra.mxu0 %v771
        %v1449 = vpop.f32.mrf.mxu0
        %v1450 = vadd.f32 %v1401, %v1449
        %v1451 = vpop.f32.mrf.mxu0
        %v1452 = vadd.f32 %v1403, %v1451
        %1453 = vmatmul.bf16.gmra.mxu0 %v773
        %v1454 = vpop.f32.mrf.mxu0
        %v1455 = vadd.f32 %v1406, %v1454
        %v1456 = vpop.f32.mrf.mxu0
        %v1457 = vadd.f32 %v1408, %v1456
        %1458 = vmatmul.bf16.gmra.mxu0 %v775
        %v1459 = vpop.f32.mrf.mxu0
        %v1460 = vadd.f32 %v1411, %v1459
        %v1461 = vpop.f32.mrf.mxu0
        %v1462 = vadd.f32 %v1413, %v1461
        %1463 = vdwg.mxu0
        %1464 = vmatpush.bf16.msra.mxu0 %v1217
        %1465 = vmatpush.bf16.msra.mxu0 %v1211
        %1466 = vmatpush.bf16.msra.mxu0 %v1205
        %1467 = vmatpush.bf16.msra.mxu0 %v1199
        %1468 = vmatpush.bf16.msra.mxu0 %v1193
        %1469 = vmatpush.bf16.msra.mxu0 %v1187
        %1470 = vmatpush.bf16.msra.mxu0 %v1181
        %1471 = vmatpush.bf16.msra.mxu0 %v1175
        %1472 = vmatmul.bf16.gmra.mxu0 %v760
        %v1473 = vpop.f32.mrf.mxu0
        %v1474 = vadd.f32 %v875, %v1473
        %v1475 = vpop.f32.mrf.mxu0
        %v1476 = vadd.f32 %v875, %v1475
        %1477 = vmatmul.bf16.gmra.mxu0 %v762
        %v1478 = vpop.f32.mrf.mxu0
        %v1479 = vadd.f32 %v875, %v1478
        %v1480 = vpop.f32.mrf.mxu0
        %v1481 = vadd.f32 %v875, %v1480
        %1482 = vmatmul.bf16.gmra.mxu0 %v764
        %v1483 = vpop.f32.mrf.mxu0
        %v1484 = vadd.f32 %v875, %v1483
        %v1485 = vpop.f32.mrf.mxu0
        %v1486 = vadd.f32 %v875, %v1485
        %1487 = vmatmul.bf16.gmra.mxu0 %v766
        %v1488 = vpop.f32.mrf.mxu0
        %v1489 = vadd.f32 %v875, %v1488
        %v1490 = vpop.f32.mrf.mxu0
        %v1491 = vadd.f32 %v875, %v1490
        %1492 = vmatmul.bf16.gmra.mxu0 %v768
        %v1493 = vpop.f32.mrf.mxu0
        %v1494 = vadd.f32 %v875, %v1493
        %v1495 = vpop.f32.mrf.mxu0
        %v1496 = vadd.f32 %v875, %v1495
        %1497 = vmatmul.bf16.gmra.mxu0 %v770
        %v1498 = vpop.f32.mrf.mxu0
        %v1499 = vadd.f32 %v875, %v1498
        %v1500 = vpop.f32.mrf.mxu0
        %v1501 = vadd.f32 %v875, %v1500
        %1502 = vmatmul.bf16.gmra.mxu0 %v772
        %v1503 = vpop.f32.mrf.mxu0
        %v1504 = vadd.f32 %v875, %v1503
        %v1505 = vpop.f32.mrf.mxu0
        %v1506 = vadd.f32 %v875, %v1505
        %1507 = vmatmul.bf16.gmra.mxu0 %v774
        %v1508 = vpop.f32.mrf.mxu0
        %v1509 = vadd.f32 %v875, %v1508
        %v1510 = vpop.f32.mrf.mxu0
        %v1511 = vadd.f32 %v875, %v1510
        %1512 = vdwg.mxu0
        %1513 = vmatpush.bf16.msra.mxu0 %v1265
        %1514 = vmatpush.bf16.msra.mxu0 %v1259
        %1515 = vmatpush.bf16.msra.mxu0 %v1253
        %1516 = vmatpush.bf16.msra.mxu0 %v1247
        %1517 = vmatpush.bf16.msra.mxu0 %v1241
        %1518 = vmatpush.bf16.msra.mxu0 %v1235
        %1519 = vmatpush.bf16.msra.mxu0 %v1229
        %1520 = vmatpush.bf16.msra.mxu0 %v1223
        %1521 = vmatmul.bf16.gmra.mxu0 %v761
        %v1522 = vpop.f32.mrf.mxu0
        %v1523 = vadd.f32 %v1474, %v1522
        %v1524 = vpop.f32.mrf.mxu0
        %v1525 = vadd.f32 %v1476, %v1524
        %1526 = vmatmul.bf16.gmra.mxu0 %v763
        %v1527 = vpop.f32.mrf.mxu0
        %v1528 = vadd.f32 %v1479, %v1527
        %v1529 = vpop.f32.mrf.mxu0
        %v1530 = vadd.f32 %v1481, %v1529
        %1531 = vmatmul.bf16.gmra.mxu0 %v765
        %v1532 = vpop.f32.mrf.mxu0
        %v1533 = vadd.f32 %v1484, %v1532
        %v1534 = vpop.f32.mrf.mxu0
        %v1535 = vadd.f32 %v1486, %v1534
        %1536 = vmatmul.bf16.gmra.mxu0 %v767
        %v1537 = vpop.f32.mrf.mxu0
        %v1538 = vadd.f32 %v1489, %v1537
        %v1539 = vpop.f32.mrf.mxu0
        %v1540 = vadd.f32 %v1491, %v1539
        %1541 = vmatmul.bf16.gmra.mxu0 %v769
        %v1542 = vpop.f32.mrf.mxu0
        %v1543 = vadd.f32 %v1494, %v1542
        %v1544 = vpop.f32.mrf.mxu0
        %v1545 = vadd.f32 %v1496, %v1544
        %1546 = vmatmul.bf16.gmra.mxu0 %v771
        %v1547 = vpop.f32.mrf.mxu0
        %v1548 = vadd.f32 %v1499, %v1547
        %v1549 = vpop.f32.mrf.mxu0
        %v1550 = vadd.f32 %v1501, %v1549
        %1551 = vmatmul.bf16.gmra.mxu0 %v773
        %v1552 = vpop.f32.mrf.mxu0
        %v1553 = vadd.f32 %v1504, %v1552
        %v1554 = vpop.f32.mrf.mxu0
        %v1555 = vadd.f32 %v1506, %v1554
        %1556 = vmatmul.bf16.gmra.mxu0 %v775
        %v1557 = vpop.f32.mrf.mxu0
        %v1558 = vadd.f32 %v1509, %v1557
        %v1559 = vpop.f32.mrf.mxu0
        %v1560 = vadd.f32 %v1511, %v1559
        %1561 = vdwg.mxu0
        %1562 = vmatpush.bf16.msra.mxu0 %v1218
        %1563 = vmatpush.bf16.msra.mxu0 %v1212
        %1564 = vmatpush.bf16.msra.mxu0 %v1206
        %1565 = vmatpush.bf16.msra.mxu0 %v1200
        %1566 = vmatpush.bf16.msra.mxu0 %v1194
        %1567 = vmatpush.bf16.msra.mxu0 %v1188
        %1568 = vmatpush.bf16.msra.mxu0 %v1182
        %1569 = vmatpush.bf16.msra.mxu0 %v1176
        %1570 = vmatmul.bf16.gmra.mxu0 %v760
        %v1571 = vpop.f32.mrf.mxu0
        %v1572 = vadd.f32 %v876, %v1571
        %v1573 = vpop.f32.mrf.mxu0
        %v1574 = vadd.f32 %v876, %v1573
        %1575 = vmatmul.bf16.gmra.mxu0 %v762
        %v1576 = vpop.f32.mrf.mxu0
        %v1577 = vadd.f32 %v876, %v1576
        %v1578 = vpop.f32.mrf.mxu0
        %v1579 = vadd.f32 %v876, %v1578
        %1580 = vmatmul.bf16.gmra.mxu0 %v764
        %v1581 = vpop.f32.mrf.mxu0
        %v1582 = vadd.f32 %v876, %v1581
        %v1583 = vpop.f32.mrf.mxu0
        %v1584 = vadd.f32 %v876, %v1583
        %1585 = vmatmul.bf16.gmra.mxu0 %v766
        %v1586 = vpop.f32.mrf.mxu0
        %v1587 = vadd.f32 %v876, %v1586
        %v1588 = vpop.f32.mrf.mxu0
        %v1589 = vadd.f32 %v876, %v1588
        %1590 = vmatmul.bf16.gmra.mxu0 %v768
        %v1591 = vpop.f32.mrf.mxu0
        %v1592 = vadd.f32 %v876, %v1591
        %v1593 = vpop.f32.mrf.mxu0
        %v1594 = vadd.f32 %v876, %v1593
        %1595 = vmatmul.bf16.gmra.mxu0 %v770
        %v1596 = vpop.f32.mrf.mxu0
        %v1597 = vadd.f32 %v876, %v1596
        %v1598 = vpop.f32.mrf.mxu0
        %v1599 = vadd.f32 %v876, %v1598
        %1600 = vmatmul.bf16.gmra.mxu0 %v772
        %v1601 = vpop.f32.mrf.mxu0
        %v1602 = vadd.f32 %v876, %v1601
        %v1603 = vpop.f32.mrf.mxu0
        %v1604 = vadd.f32 %v876, %v1603
        %1605 = vmatmul.bf16.gmra.mxu0 %v774
        %v1606 = vpop.f32.mrf.mxu0
        %v1607 = vadd.f32 %v876, %v1606
        %v1608 = vpop.f32.mrf.mxu0
        %v1609 = vadd.f32 %v876, %v1608
        %1610 = vdwg.mxu0
        %1611 = vmatpush.bf16.msra.mxu0 %v1266
        %1612 = vmatpush.bf16.msra.mxu0 %v1260
        %1613 = vmatpush.bf16.msra.mxu0 %v1254
        %1614 = vmatpush.bf16.msra.mxu0 %v1248
        %1615 = vmatpush.bf16.msra.mxu0 %v1242
        %1616 = vmatpush.bf16.msra.mxu0 %v1236
        %1617 = vmatpush.bf16.msra.mxu0 %v1230
        %1618 = vmatpush.bf16.msra.mxu0 %v1224
        %1619 = vmatmul.bf16.gmra.mxu0 %v761
        %v1620 = vpop.f32.mrf.mxu0
        %v1621 = vadd.f32 %v1572, %v1620
        %v1622 = vpop.f32.mrf.mxu0
        %v1623 = vadd.f32 %v1574, %v1622
        %1624 = vmatmul.bf16.gmra.mxu0 %v763
        %v1625 = vpop.f32.mrf.mxu0
        %v1626 = vadd.f32 %v1577, %v1625
        %v1627 = vpop.f32.mrf.mxu0
        %v1628 = vadd.f32 %v1579, %v1627
        %1629 = vmatmul.bf16.gmra.mxu0 %v765
        %v1630 = vpop.f32.mrf.mxu0
        %v1631 = vadd.f32 %v1582, %v1630
        %v1632 = vpop.f32.mrf.mxu0
        %v1633 = vadd.f32 %v1584, %v1632
        %1634 = vmatmul.bf16.gmra.mxu0 %v767
        %v1635 = vpop.f32.mrf.mxu0
        %v1636 = vadd.f32 %v1587, %v1635
        %v1637 = vpop.f32.mrf.mxu0
        %v1638 = vadd.f32 %v1589, %v1637
        %1639 = vmatmul.bf16.gmra.mxu0 %v769
        %v1640 = vpop.f32.mrf.mxu0
        %v1641 = vadd.f32 %v1592, %v1640
        %v1642 = vpop.f32.mrf.mxu0
        %v1643 = vadd.f32 %v1594, %v1642
        %1644 = vmatmul.bf16.gmra.mxu0 %v771
        %v1645 = vpop.f32.mrf.mxu0
        %v1646 = vadd.f32 %v1597, %v1645
        %v1647 = vpop.f32.mrf.mxu0
        %v1648 = vadd.f32 %v1599, %v1647
        %1649 = vmatmul.bf16.gmra.mxu0 %v773
        %v1650 = vpop.f32.mrf.mxu0
        %v1651 = vadd.f32 %v1602, %v1650
        %v1652 = vpop.f32.mrf.mxu0
        %v1653 = vadd.f32 %v1604, %v1652
        %1654 = vmatmul.bf16.gmra.mxu0 %v775
        %v1655 = vpop.f32.mrf.mxu0
        %v1656 = vadd.f32 %v1607, %v1655
        %v1657 = vpop.f32.mrf.mxu0
        %v1658 = vadd.f32 %v1609, %v1657
        %1659 = vdwg.mxu0
        %1660 = vmatpush.bf16.msra.mxu0 %v1219
        %1661 = vmatpush.bf16.msra.mxu0 %v1213
        %1662 = vmatpush.bf16.msra.mxu0 %v1207
        %1663 = vmatpush.bf16.msra.mxu0 %v1201
        %1664 = vmatpush.bf16.msra.mxu0 %v1195
        %1665 = vmatpush.bf16.msra.mxu0 %v1189
        %1666 = vmatpush.bf16.msra.mxu0 %v1183
        %1667 = vmatpush.bf16.msra.mxu0 %v1177
        %1668 = vmatmul.bf16.gmra.mxu0 %v760
        %v1669 = vpop.f32.mrf.mxu0
        %v1670 = vadd.f32 %v877, %v1669
        %v1671 = vpop.f32.mrf.mxu0
        %v1672 = vadd.f32 %v877, %v1671
        %1673 = vmatmul.bf16.gmra.mxu0 %v762
        %v1674 = vpop.f32.mrf.mxu0
        %v1675 = vadd.f32 %v877, %v1674
        %v1676 = vpop.f32.mrf.mxu0
        %v1677 = vadd.f32 %v877, %v1676
        %1678 = vmatmul.bf16.gmra.mxu0 %v764
        %v1679 = vpop.f32.mrf.mxu0
        %v1680 = vadd.f32 %v877, %v1679
        %v1681 = vpop.f32.mrf.mxu0
        %v1682 = vadd.f32 %v877, %v1681
        %1683 = vmatmul.bf16.gmra.mxu0 %v766
        %v1684 = vpop.f32.mrf.mxu0
        %v1685 = vadd.f32 %v877, %v1684
        %v1686 = vpop.f32.mrf.mxu0
        %v1687 = vadd.f32 %v877, %v1686
        %1688 = vmatmul.bf16.gmra.mxu0 %v768
        %v1689 = vpop.f32.mrf.mxu0
        %v1690 = vadd.f32 %v877, %v1689
        %v1691 = vpop.f32.mrf.mxu0
        %v1692 = vadd.f32 %v877, %v1691
        %1693 = vmatmul.bf16.gmra.mxu0 %v770
        %v1694 = vpop.f32.mrf.mxu0
        %v1695 = vadd.f32 %v877, %v1694
        %v1696 = vpop.f32.mrf.mxu0
        %v1697 = vadd.f32 %v877, %v1696
        %1698 = vmatmul.bf16.gmra.mxu0 %v772
        %v1699 = vpop.f32.mrf.mxu0
        %v1700 = vadd.f32 %v877, %v1699
        %v1701 = vpop.f32.mrf.mxu0
        %v1702 = vadd.f32 %v877, %v1701
        %1703 = vmatmul.bf16.gmra.mxu0 %v774
        %v1704 = vpop.f32.mrf.mxu0
        %v1705 = vadd.f32 %v877, %v1704
        %v1706 = vpop.f32.mrf.mxu0
        %v1707 = vadd.f32 %v877, %v1706
        %1708 = vdwg.mxu0
        %1709 = vmatpush.bf16.msra.mxu0 %v1267
        %1710 = vmatpush.bf16.msra.mxu0 %v1261
        %1711 = vmatpush.bf16.msra.mxu0 %v1255
        %1712 = vmatpush.bf16.msra.mxu0 %v1249
        %1713 = vmatpush.bf16.msra.mxu0 %v1243
        %1714 = vmatpush.bf16.msra.mxu0 %v1237
        %1715 = vmatpush.bf16.msra.mxu0 %v1231
        %1716 = vmatpush.bf16.msra.mxu0 %v1225
        %1717 = vmatmul.bf16.gmra.mxu0 %v761
        %v1718 = vpop.f32.mrf.mxu0
        %v1719 = vadd.f32 %v1670, %v1718
        %v1720 = vpop.f32.mrf.mxu0
        %v1721 = vadd.f32 %v1672, %v1720
        %1722 = vmatmul.bf16.gmra.mxu0 %v763
        %v1723 = vpop.f32.mrf.mxu0
        %v1724 = vadd.f32 %v1675, %v1723
        %v1725 = vpop.f32.mrf.mxu0
        %v1726 = vadd.f32 %v1677, %v1725
        %1727 = vmatmul.bf16.gmra.mxu0 %v765
        %v1728 = vpop.f32.mrf.mxu0
        %v1729 = vadd.f32 %v1680, %v1728
        %v1730 = vpop.f32.mrf.mxu0
        %v1731 = vadd.f32 %v1682, %v1730
        %1732 = vmatmul.bf16.gmra.mxu0 %v767
        %v1733 = vpop.f32.mrf.mxu0
        %v1734 = vadd.f32 %v1685, %v1733
        %v1735 = vpop.f32.mrf.mxu0
        %v1736 = vadd.f32 %v1687, %v1735
        %1737 = vmatmul.bf16.gmra.mxu0 %v769
        %v1738 = vpop.f32.mrf.mxu0
        %v1739 = vadd.f32 %v1690, %v1738
        %v1740 = vpop.f32.mrf.mxu0
        %v1741 = vadd.f32 %v1692, %v1740
        %1742 = vmatmul.bf16.gmra.mxu0 %v771
        %v1743 = vpop.f32.mrf.mxu0
        %v1744 = vadd.f32 %v1695, %v1743
        %v1745 = vpop.f32.mrf.mxu0
        %v1746 = vadd.f32 %v1697, %v1745
        %1747 = vmatmul.bf16.gmra.mxu0 %v773
        %v1748 = vpop.f32.mrf.mxu0
        %v1749 = vadd.f32 %v1700, %v1748
        %v1750 = vpop.f32.mrf.mxu0
        %v1751 = vadd.f32 %v1702, %v1750
        %1752 = vmatmul.bf16.gmra.mxu0 %v775
        %v1753 = vpop.f32.mrf.mxu0
        %v1754 = vadd.f32 %v1705, %v1753
        %v1755 = vpop.f32.mrf.mxu0
        %v1756 = vadd.f32 %v1707, %v1755
        %1757 = vdwg.mxu0
        %1758 = vmatpush.bf16.msra.mxu0 %v1220
        %1759 = vmatpush.bf16.msra.mxu0 %v1214
        %1760 = vmatpush.bf16.msra.mxu0 %v1208
        %1761 = vmatpush.bf16.msra.mxu0 %v1202
        %1762 = vmatpush.bf16.msra.mxu0 %v1196
        %1763 = vmatpush.bf16.msra.mxu0 %v1190
        %1764 = vmatpush.bf16.msra.mxu0 %v1184
        %1765 = vmatpush.bf16.msra.mxu0 %v1178
        %1766 = vmatmul.bf16.gmra.mxu0 %v760
        %v1767 = vpop.f32.mrf.mxu0
        %v1768 = vadd.f32 %v878, %v1767
        %v1769 = vpop.f32.mrf.mxu0
        %v1770 = vadd.f32 %v878, %v1769
        %1771 = vmatmul.bf16.gmra.mxu0 %v762
        %v1772 = vpop.f32.mrf.mxu0
        %v1773 = vadd.f32 %v878, %v1772
        %v1774 = vpop.f32.mrf.mxu0
        %v1775 = vadd.f32 %v878, %v1774
        %1776 = vmatmul.bf16.gmra.mxu0 %v764
        %v1777 = vpop.f32.mrf.mxu0
        %v1778 = vadd.f32 %v878, %v1777
        %v1779 = vpop.f32.mrf.mxu0
        %v1780 = vadd.f32 %v878, %v1779
        %1781 = vmatmul.bf16.gmra.mxu0 %v766
        %v1782 = vpop.f32.mrf.mxu0
        %v1783 = vadd.f32 %v878, %v1782
        %v1784 = vpop.f32.mrf.mxu0
        %v1785 = vadd.f32 %v878, %v1784
        %1786 = vmatmul.bf16.gmra.mxu0 %v768
        %v1787 = vpop.f32.mrf.mxu0
        %v1788 = vadd.f32 %v878, %v1787
        %v1789 = vpop.f32.mrf.mxu0
        %v1790 = vadd.f32 %v878, %v1789
        %1791 = vmatmul.bf16.gmra.mxu0 %v770
        %v1792 = vpop.f32.mrf.mxu0
        %v1793 = vadd.f32 %v878, %v1792
        %v1794 = vpop.f32.mrf.mxu0
        %v1795 = vadd.f32 %v878, %v1794
        %1796 = vmatmul.bf16.gmra.mxu0 %v772
        %v1797 = vpop.f32.mrf.mxu0
        %v1798 = vadd.f32 %v878, %v1797
        %v1799 = vpop.f32.mrf.mxu0
        %v1800 = vadd.f32 %v878, %v1799
        %1801 = vmatmul.bf16.gmra.mxu0 %v774
        %v1802 = vpop.f32.mrf.mxu0
        %v1803 = vadd.f32 %v878, %v1802
        %v1804 = vpop.f32.mrf.mxu0
        %v1805 = vadd.f32 %v878, %v1804
        %1806 = vdwg.mxu0
        %1807 = vmatpush.bf16.msra.mxu0 %v1268
        %1808 = vmatpush.bf16.msra.mxu0 %v1262
        %1809 = vmatpush.bf16.msra.mxu0 %v1256
        %1810 = vmatpush.bf16.msra.mxu0 %v1250
        %1811 = vmatpush.bf16.msra.mxu0 %v1244
        %1812 = vmatpush.bf16.msra.mxu0 %v1238
        %1813 = vmatpush.bf16.msra.mxu0 %v1232
        %1814 = vmatpush.bf16.msra.mxu0 %v1226
        %1815 = vmatmul.bf16.gmra.mxu0 %v761
        %v1816 = vpop.f32.mrf.mxu0
        %v1817 = vadd.f32 %v1768, %v1816
        %v1818 = vpop.f32.mrf.mxu0
        %v1819 = vadd.f32 %v1770, %v1818
        %1820 = vmatmul.bf16.gmra.mxu0 %v763
        %v1821 = vpop.f32.mrf.mxu0
        %v1822 = vadd.f32 %v1773, %v1821
        %v1823 = vpop.f32.mrf.mxu0
        %v1824 = vadd.f32 %v1775, %v1823
        %1825 = vmatmul.bf16.gmra.mxu0 %v765
        %v1826 = vpop.f32.mrf.mxu0
        %v1827 = vadd.f32 %v1778, %v1826
        %v1828 = vpop.f32.mrf.mxu0
        %v1829 = vadd.f32 %v1780, %v1828
        %1830 = vmatmul.bf16.gmra.mxu0 %v767
        %v1831 = vpop.f32.mrf.mxu0
        %v1832 = vadd.f32 %v1783, %v1831
        %v1833 = vpop.f32.mrf.mxu0
        %v1834 = vadd.f32 %v1785, %v1833
        %1835 = vmatmul.bf16.gmra.mxu0 %v769
        %v1836 = vpop.f32.mrf.mxu0
        %v1837 = vadd.f32 %v1788, %v1836
        %v1838 = vpop.f32.mrf.mxu0
        %v1839 = vadd.f32 %v1790, %v1838
        %1840 = vmatmul.bf16.gmra.mxu0 %v771
        %v1841 = vpop.f32.mrf.mxu0
        %v1842 = vadd.f32 %v1793, %v1841
        %v1843 = vpop.f32.mrf.mxu0
        %v1844 = vadd.f32 %v1795, %v1843
        %1845 = vmatmul.bf16.gmra.mxu0 %v773
        %v1846 = vpop.f32.mrf.mxu0
        %v1847 = vadd.f32 %v1798, %v1846
        %v1848 = vpop.f32.mrf.mxu0
        %v1849 = vadd.f32 %v1800, %v1848
        %1850 = vmatmul.bf16.gmra.mxu0 %v775
        %v1851 = vpop.f32.mrf.mxu0
        %v1852 = vadd.f32 %v1803, %v1851
        %v1853 = vpop.f32.mrf.mxu0
        %v1854 = vadd.f32 %v1805, %v1853
        %1855 = vdwg.mxu0
        %1856 = vmatpush.bf16.msra.mxu0 %v1221
        %1857 = vmatpush.bf16.msra.mxu0 %v1215
        %1858 = vmatpush.bf16.msra.mxu0 %v1209
        %1859 = vmatpush.bf16.msra.mxu0 %v1203
        %1860 = vmatpush.bf16.msra.mxu0 %v1197
        %1861 = vmatpush.bf16.msra.mxu0 %v1191
        %1862 = vmatpush.bf16.msra.mxu0 %v1185
        %1863 = vmatpush.bf16.msra.mxu0 %v1179
        %1864 = vmatmul.bf16.gmra.mxu0 %v760
        %v1865 = vpop.f32.mrf.mxu0
        %v1866 = vadd.f32 %v879, %v1865
        %v1867 = vpop.f32.mrf.mxu0
        %v1868 = vadd.f32 %v879, %v1867
        %1869 = vmatmul.bf16.gmra.mxu0 %v762
        %v1870 = vpop.f32.mrf.mxu0
        %v1871 = vadd.f32 %v879, %v1870
        %v1872 = vpop.f32.mrf.mxu0
        %v1873 = vadd.f32 %v879, %v1872
        %1874 = vmatmul.bf16.gmra.mxu0 %v764
        %v1875 = vpop.f32.mrf.mxu0
        %v1876 = vadd.f32 %v879, %v1875
        %v1877 = vpop.f32.mrf.mxu0
        %v1878 = vadd.f32 %v879, %v1877
        %1879 = vmatmul.bf16.gmra.mxu0 %v766
        %v1880 = vpop.f32.mrf.mxu0
        %v1881 = vadd.f32 %v879, %v1880
        %v1882 = vpop.f32.mrf.mxu0
        %v1883 = vadd.f32 %v879, %v1882
        %1884 = vmatmul.bf16.gmra.mxu0 %v768
        %v1885 = vpop.f32.mrf.mxu0
        %v1886 = vadd.f32 %v879, %v1885
        %v1887 = vpop.f32.mrf.mxu0
        %v1888 = vadd.f32 %v879, %v1887
        %1889 = vmatmul.bf16.gmra.mxu0 %v770
        %v1890 = vpop.f32.mrf.mxu0
        %v1891 = vadd.f32 %v879, %v1890
        %v1892 = vpop.f32.mrf.mxu0
        %v1893 = vadd.f32 %v879, %v1892
        %1894 = vmatmul.bf16.gmra.mxu0 %v772
        %v1895 = vpop.f32.mrf.mxu0
        %v1896 = vadd.f32 %v879, %v1895
        %v1897 = vpop.f32.mrf.mxu0
        %v1898 = vadd.f32 %v879, %v1897
        %1899 = vmatmul.bf16.gmra.mxu0 %v774
        %v1900 = vpop.f32.mrf.mxu0
        %v1901 = vadd.f32 %v879, %v1900
        %v1902 = vpop.f32.mrf.mxu0
        %v1903 = vadd.f32 %v879, %v1902
        %1904 = vdwg.mxu0
        %1905 = vmatpush.bf16.msra.mxu0 %v1269
        %1906 = vmatpush.bf16.msra.mxu0 %v1263
        %1907 = vmatpush.bf16.msra.mxu0 %v1257
        %1908 = vmatpush.bf16.msra.mxu0 %v1251
        %1909 = vmatpush.bf16.msra.mxu0 %v1245
        %1910 = vmatpush.bf16.msra.mxu0 %v1239
        %1911 = vmatpush.bf16.msra.mxu0 %v1233
        %1912 = vmatpush.bf16.msra.mxu0 %v1227
        %1913 = vmatmul.bf16.gmra.mxu0 %v761
        %v1914 = vpop.f32.mrf.mxu0
        %v1915 = vadd.f32 %v1866, %v1914
        %v1916 = vpop.f32.mrf.mxu0
        %v1917 = vadd.f32 %v1868, %v1916
        %1918 = vmatmul.bf16.gmra.mxu0 %v763
        %v1919 = vpop.f32.mrf.mxu0
        %v1920 = vadd.f32 %v1871, %v1919
        %v1921 = vpop.f32.mrf.mxu0
        %v1922 = vadd.f32 %v1873, %v1921
        %1923 = vmatmul.bf16.gmra.mxu0 %v765
        %v1924 = vpop.f32.mrf.mxu0
        %v1925 = vadd.f32 %v1876, %v1924
        %v1926 = vpop.f32.mrf.mxu0
        %v1927 = vadd.f32 %v1878, %v1926
        %1928 = vmatmul.bf16.gmra.mxu0 %v767
        %v1929 = vpop.f32.mrf.mxu0
        %v1930 = vadd.f32 %v1881, %v1929
        %v1931 = vpop.f32.mrf.mxu0
        %v1932 = vadd.f32 %v1883, %v1931
        %1933 = vmatmul.bf16.gmra.mxu0 %v769
        %v1934 = vpop.f32.mrf.mxu0
        %v1935 = vadd.f32 %v1886, %v1934
        %v1936 = vpop.f32.mrf.mxu0
        %v1937 = vadd.f32 %v1888, %v1936
        %1938 = vmatmul.bf16.gmra.mxu0 %v771
        %v1939 = vpop.f32.mrf.mxu0
        %v1940 = vadd.f32 %v1891, %v1939
        %v1941 = vpop.f32.mrf.mxu0
        %v1942 = vadd.f32 %v1893, %v1941
        %1943 = vmatmul.bf16.gmra.mxu0 %v773
        %v1944 = vpop.f32.mrf.mxu0
        %v1945 = vadd.f32 %v1896, %v1944
        %v1946 = vpop.f32.mrf.mxu0
        %v1947 = vadd.f32 %v1898, %v1946
        %1948 = vmatmul.bf16.gmra.mxu0 %v775
        %v1949 = vpop.f32.mrf.mxu0
        %v1950 = vadd.f32 %v1901, %v1949
        %v1951 = vpop.f32.mrf.mxu0
        %v1952 = vadd.f32 %v1903, %v1951
        %1953 = vdwg.mxu0
        %v1954 = vpack.c.bf16 %v1523, %v1425
        %v1955 = vpack.c.bf16 %v1719, %v1621
        %v1956 = vpack.c.bf16 %v1915, %v1817
        %v1957 = vpack.c.bf16 %v1525, %v1427
        %v1958 = vpack.c.bf16 %v1721, %v1623
        %v1959 = vpack.c.bf16 %v1917, %v1819
        %v1960 = vpack.c.bf16 %v1528, %v1430
        %v1961 = vpack.c.bf16 %v1724, %v1626
        %v1962 = vpack.c.bf16 %v1920, %v1822
        %v1963 = vpack.c.bf16 %v1530, %v1432
        %v1964 = vpack.c.bf16 %v1726, %v1628
        %v1965 = vpack.c.bf16 %v1922, %v1824
        %v1966 = vpack.c.bf16 %v1533, %v1435
        %v1967 = vpack.c.bf16 %v1729, %v1631
        %v1968 = vpack.c.bf16 %v1925, %v1827
        %v1969 = vpack.c.bf16 %v1535, %v1437
        %v1970 = vpack.c.bf16 %v1731, %v1633
        %v1971 = vpack.c.bf16 %v1927, %v1829
        %v1972 = vpack.c.bf16 %v1538, %v1440
        %v1973 = vpack.c.bf16 %v1734, %v1636
        %v1974 = vpack.c.bf16 %v1930, %v1832
        %v1975 = vpack.c.bf16 %v1540, %v1442
        %v1976 = vpack.c.bf16 %v1736, %v1638
        %v1977 = vpack.c.bf16 %v1932, %v1834
        %v1978 = vpack.c.bf16 %v1543, %v1445
        %v1979 = vpack.c.bf16 %v1739, %v1641
        %v1980 = vpack.c.bf16 %v1935, %v1837
        %v1981 = vpack.c.bf16 %v1545, %v1447
        %v1982 = vpack.c.bf16 %v1741, %v1643
        %v1983 = vpack.c.bf16 %v1937, %v1839
        %v1984 = vpack.c.bf16 %v1548, %v1450
        %v1985 = vpack.c.bf16 %v1744, %v1646
        %v1986 = vpack.c.bf16 %v1940, %v1842
        %v1987 = vpack.c.bf16 %v1550, %v1452
        %v1988 = vpack.c.bf16 %v1746, %v1648
        %v1989 = vpack.c.bf16 %v1942, %v1844
        %v1990 = vpack.c.bf16 %v1553, %v1455
        %v1991 = vpack.c.bf16 %v1749, %v1651
        %v1992 = vpack.c.bf16 %v1945, %v1847
        %v1993 = vpack.c.bf16 %v1555, %v1457
        %v1994 = vpack.c.bf16 %v1751, %v1653
        %v1995 = vpack.c.bf16 %v1947, %v1849
        %v1996 = vpack.c.bf16 %v1558, %v1460
        %v1997 = vpack.c.bf16 %v1754, %v1656
        %v1998 = vpack.c.bf16 %v1950, %v1852
        %v1999 = vpack.c.bf16 %v1560, %v1462
        %v2000 = vpack.c.bf16 %v1756, %v1658
        %v2001 = vpack.c.bf16 %v1952, %v1854
        %2002 = vst [vmem:[%s302] sm:$0xf] %v1954
        %2003 = vst [vmem:[%s302 + $0x4] sm:$0xf] %v1957
        %2004 = vst [vmem:[%s302 + $0x8] sm:$0xf] %v1960
        %2005 = vst [vmem:[%s302 + $0xc] sm:$0xf] %v1963
        %2006 = vst [vmem:[%s302 + $0x10] sm:$0xf] %v1966
        %2007 = vst [vmem:[%s302 + $0x14] sm:$0xf] %v1969
        %2008 = vst [vmem:[%s302 + $0x18] sm:$0xf] %v1972
        %2009 = vst [vmem:[%s302 + $0x1c] sm:$0xf] %v1975
        %2010 = vst [vmem:[%s302 + $0x20] sm:$0xf] %v1978
        %2011 = vst [vmem:[%s302 + $0x24] sm:$0xf] %v1981
        %2012 = vst [vmem:[%s302 + $0x28] sm:$0xf] %v1984
        %2013 = vst [vmem:[%s302 + $0x2c] sm:$0xf] %v1987
        %2014 = vst [vmem:[%s302 + $0x30] sm:$0xf] %v1990
        %2015 = vst [vmem:[%s302 + $0x34] sm:$0xf] %v1993
        %2016 = vst [vmem:[%s302 + $0x38] sm:$0xf] %v1996
        %2017 = vst [vmem:[%s302 + $0x3c] sm:$0xf] %v1999
        %2018 = vst [vmem:[%s309] sm:$0xf] %v1955
        %2019 = vst [vmem:[%s309 + $0x4] sm:$0xf] %v1958
        %2020 = vst [vmem:[%s309 + $0x8] sm:$0xf] %v1961
        %2021 = vst [vmem:[%s309 + $0xc] sm:$0xf] %v1964
        %2022 = vst [vmem:[%s309 + $0x10] sm:$0xf] %v1967
        %2023 = vst [vmem:[%s309 + $0x14] sm:$0xf] %v1970
        %2024 = vst [vmem:[%s309 + $0x18] sm:$0xf] %v1973
        %2025 = vst [vmem:[%s309 + $0x1c] sm:$0xf] %v1976
        %2026 = vst [vmem:[%s309 + $0x20] sm:$0xf] %v1979
        %2027 = vst [vmem:[%s309 + $0x24] sm:$0xf] %v1982
        %2028 = vst [vmem:[%s309 + $0x28] sm:$0xf] %v1985
        %2029 = vst [vmem:[%s309 + $0x2c] sm:$0xf] %v1988
        %2030 = vst [vmem:[%s309 + $0x30] sm:$0xf] %v1991
        %2031 = vst [vmem:[%s309 + $0x34] sm:$0xf] %v1994
        %2032 = vst [vmem:[%s309 + $0x38] sm:$0xf] %v1997
        %2033 = vst [vmem:[%s309 + $0x3c] sm:$0xf] %v2000
        %2034 = vst [vmem:[%s316] sm:$0xf] %v1956
        %2035 = vst [vmem:[%s316 + $0x4] sm:$0xf] %v1959
        %2036 = vst [vmem:[%s316 + $0x8] sm:$0xf] %v1962
        %2037 = vst [vmem:[%s316 + $0xc] sm:$0xf] %v1965
        %2038 = vst [vmem:[%s316 + $0x10] sm:$0xf] %v1968
        %2039 = vst [vmem:[%s316 + $0x14] sm:$0xf] %v1971
        %2040 = vst [vmem:[%s316 + $0x18] sm:$0xf] %v1974
        %2041 = vst [vmem:[%s316 + $0x1c] sm:$0xf] %v1977
        %2042 = vst [vmem:[%s316 + $0x20] sm:$0xf] %v1980
        %2043 = vst [vmem:[%s316 + $0x24] sm:$0xf] %v1983
        %2044 = vst [vmem:[%s316 + $0x28] sm:$0xf] %v1986
        %2045 = vst [vmem:[%s316 + $0x2c] sm:$0xf] %v1989
        %2046 = vst [vmem:[%s316 + $0x30] sm:$0xf] %v1992
        %2047 = vst [vmem:[%s316 + $0x34] sm:$0xf] %v1995
        %2048 = vst [vmem:[%s316 + $0x38] sm:$0xf] %v1998
        %2049 = vst [vmem:[%s316 + $0x3c] sm:$0xf] %v2001
        %v2066 = vrot.slane %v1954, 4
        %v2067 = vrot.slane %v1957, 4
        %v2068 = vrot.slane %v1960, 4
        %v2069 = vrot.slane %v1963, 4
        %v2070 = vrot.slane %v1966, 4
        %v2071 = vrot.slane %v1969, 4
        %v2072 = vrot.slane %v1972, 4
        %v2073 = vrot.slane %v1975, 4
        %v2074 = vrot.slane %v1978, 4
        %v2075 = vrot.slane %v1981, 4
        %v2076 = vrot.slane %v1984, 4
        %v2077 = vrot.slane %v1987, 4
        %v2078 = vrot.slane %v1990, 4
        %v2079 = vrot.slane %v1993, 4
        %v2080 = vrot.slane %v1996, 4
        %v2081 = vrot.slane %v1999, 4
        %s2098 = scalar_lea.vmem %s302, 64 [#allocation8]
        %2099 = vst [vmem:[%s2098] sm:$0xf] %v2066
        %2100 = vst [vmem:[%s2098 + $0x4] sm:$0xf] %v2067
        %2101 = vst [vmem:[%s2098 + $0x8] sm:$0xf] %v2068
        %2102 = vst [vmem:[%s2098 + $0xc] sm:$0xf] %v2069
        %2103 = vst [vmem:[%s2098 + $0x10] sm:$0xf] %v2070
        %2104 = vst [vmem:[%s2098 + $0x14] sm:$0xf] %v2071
        %2105 = vst [vmem:[%s2098 + $0x18] sm:$0xf] %v2072
        %2106 = vst [vmem:[%s2098 + $0x1c] sm:$0xf] %v2073
        %2107 = vst [vmem:[%s2098 + $0x20] sm:$0xf] %v2074
        %2108 = vst [vmem:[%s2098 + $0x24] sm:$0xf] %v2075
        %2109 = vst [vmem:[%s2098 + $0x28] sm:$0xf] %v2076
        %2110 = vst [vmem:[%s2098 + $0x2c] sm:$0xf] %v2077
        %2111 = vst [vmem:[%s2098 + $0x30] sm:$0xf] %v2078
        %2112 = vst [vmem:[%s2098 + $0x34] sm:$0xf] %v2079
        %2113 = vst [vmem:[%s2098 + $0x38] sm:$0xf] %v2080
        %2114 = vst [vmem:[%s2098 + $0x3c] sm:$0xf] %v2081
        %v2131 = vrot.slane %v1955, 4
        %v2132 = vrot.slane %v1958, 4
        %v2133 = vrot.slane %v1961, 4
        %v2134 = vrot.slane %v1964, 4
        %v2135 = vrot.slane %v1967, 4
        %v2136 = vrot.slane %v1970, 4
        %v2137 = vrot.slane %v1973, 4
        %v2138 = vrot.slane %v1976, 4
        %v2139 = vrot.slane %v1979, 4
        %v2140 = vrot.slane %v1982, 4
        %v2141 = vrot.slane %v1985, 4
        %v2142 = vrot.slane %v1988, 4
        %v2143 = vrot.slane %v1991, 4
        %v2144 = vrot.slane %v1994, 4
        %v2145 = vrot.slane %v1997, 4
        %v2146 = vrot.slane %v2000, 4
        %s2163 = scalar_lea.vmem %s309, 64 [#allocation9]
        %2164 = vst [vmem:[%s2163] sm:$0xf] %v2131
        %2165 = vst [vmem:[%s2163 + $0x4] sm:$0xf] %v2132
        %2166 = vst [vmem:[%s2163 + $0x8] sm:$0xf] %v2133
        %2167 = vst [vmem:[%s2163 + $0xc] sm:$0xf] %v2134
        %2168 = vst [vmem:[%s2163 + $0x10] sm:$0xf] %v2135
        %2169 = vst [vmem:[%s2163 + $0x14] sm:$0xf] %v2136
        %2170 = vst [vmem:[%s2163 + $0x18] sm:$0xf] %v2137
        %2171 = vst [vmem:[%s2163 + $0x1c] sm:$0xf] %v2138
        %2172 = vst [vmem:[%s2163 + $0x20] sm:$0xf] %v2139
        %2173 = vst [vmem:[%s2163 + $0x24] sm:$0xf] %v2140
        %2174 = vst [vmem:[%s2163 + $0x28] sm:$0xf] %v2141
        %2175 = vst [vmem:[%s2163 + $0x2c] sm:$0xf] %v2142
        %2176 = vst [vmem:[%s2163 + $0x30] sm:$0xf] %v2143
        %2177 = vst [vmem:[%s2163 + $0x34] sm:$0xf] %v2144
        %2178 = vst [vmem:[%s2163 + $0x38] sm:$0xf] %v2145
        %2179 = vst [vmem:[%s2163 + $0x3c] sm:$0xf] %v2146
        %v2196 = vrot.slane %v1956, 4
        %v2197 = vrot.slane %v1959, 4
        %v2198 = vrot.slane %v1962, 4
        %v2199 = vrot.slane %v1965, 4
        %v2200 = vrot.slane %v1968, 4
        %v2201 = vrot.slane %v1971, 4
        %v2202 = vrot.slane %v1974, 4
        %v2203 = vrot.slane %v1977, 4
        %v2204 = vrot.slane %v1980, 4
        %v2205 = vrot.slane %v1983, 4
        %v2206 = vrot.slane %v1986, 4
        %v2207 = vrot.slane %v1989, 4
        %v2208 = vrot.slane %v1992, 4
        %v2209 = vrot.slane %v1995, 4
        %v2210 = vrot.slane %v1998, 4
        %v2211 = vrot.slane %v2001, 4
        %s2228 = scalar_lea.vmem %s316, 64 [#allocation11]
        %2229 = vst [vmem:[%s2228] sm:$0xf] %v2196
        %2230 = vst [vmem:[%s2228 + $0x4] sm:$0xf] %v2197
        %2231 = vst [vmem:[%s2228 + $0x8] sm:$0xf] %v2198
        %2232 = vst [vmem:[%s2228 + $0xc] sm:$0xf] %v2199
        %2233 = vst [vmem:[%s2228 + $0x10] sm:$0xf] %v2200
        %2234 = vst [vmem:[%s2228 + $0x14] sm:$0xf] %v2201
        %2235 = vst [vmem:[%s2228 + $0x18] sm:$0xf] %v2202
        %2236 = vst [vmem:[%s2228 + $0x1c] sm:$0xf] %v2203
        %2237 = vst [vmem:[%s2228 + $0x20] sm:$0xf] %v2204
        %2238 = vst [vmem:[%s2228 + $0x24] sm:$0xf] %v2205
        %2239 = vst [vmem:[%s2228 + $0x28] sm:$0xf] %v2206
        %2240 = vst [vmem:[%s2228 + $0x2c] sm:$0xf] %v2207
        %2241 = vst [vmem:[%s2228 + $0x30] sm:$0xf] %v2208
        %2242 = vst [vmem:[%s2228 + $0x34] sm:$0xf] %v2209
        %2243 = vst [vmem:[%s2228 + $0x38] sm:$0xf] %v2210
        %2244 = vst [vmem:[%s2228 + $0x3c] sm:$0xf] %v2211
        %s2245 = sand.u32 %s119, 1
        %s2246 = scalar_lea.sflag [#allocation4], %s2245
        %s2247 = sand.u32 %s119, 1
        %s2248 = smul.addr %s2247, 128
        %s2249 = scalar_lea.vmem [#allocation8], %s2248
        %s2250 = sand.u32 %s27, 1
        %s2251 = scalar_lea.sflag [#allocation10], %s2250
        %s2252 = sand.u32 %s147, 1
        %s2253 = smul.addr %s2252, 128
        %s2254 = scalar_lea.vmem [#allocation9], %s2253
        %s2255 = sand.u32 %s27, 1
        %s2256 = scalar_lea.sflag [#allocation10], %s2255
        %s2257 = sand.u32 %s175, 1
        %s2258 = smul.addr %s2257, 128
        %s2259 = scalar_lea.vmem [#allocation11], %s2258
        // Predicated region
        $region45: #{tpu_custom_call.1} parent=31 // pred_check
          %p2260 = pneg %p129
        $region46: #{tpu_custom_call.1} parent=31 // pred_check_branch
          %2262 = sbr.rel (%p2260) target = $region48
        $region47: #{tpu_custom_call.1} parent=31 // pred_region
          #allocation13 [shape = 'u32[6]{0}', space=smem, size = 0x18, scoped, tag = 'DMA stride descriptor']
          %s2263 = smul.u32 16, %s32
          %2265 = vsyncadd %s2246, 0
          %s2266 = smul.addr %s31, 64
          %s2267 = sadd.s32 %s2263, %s2266
          %s2268 = smul.addr %s2267, 4
          %s2269 = scalar_lea.hbm %s3, %s2268
          %s2271 = sshll.u32 1, 14
          %s2272 = sxor.u32 4294967295, %s2271
          %s2275 = sshll.u32 7, 18
          %s2276 = sxor.u32 4294967295, %s2275
          %s2277 = sand.u32 0, %s2276
          %s2279 = sor.u32 %s2277, 0
          %s2280 = sshll.u32 %s2249, 4
          %s2281 = int_to_ptr.vmem [resolvable:$true] %s2280
          %s2282 = sshll.u32 %s2269, 4
          %s2283 = int_to_ptr.hbm [resolvable:$true] %s2282
          %2289 = sst [smem:[#allocation13]] 1024
          %s2290 = scalar_lea.smem [#allocation13], 1
          %2291 = sst [smem:[%s2290]] 2048
          %s2292 = scalar_lea.smem [#allocation13], 2
          %2293 = sst [smem:[%s2292]] 16
          %s2294 = scalar_lea.smem [#allocation13], 3
          %2295 = sst [smem:[%s2294]] 64
          %s2296 = scalar_lea.smem [#allocation13], 4
          %2297 = sst [smem:[%s2296]] 64
          %s2298 = scalar_lea.smem [#allocation13], 5
          %2299 = sst [smem:[%s2298]] 4
          %2301 = dma.general %s2281, 2048, %s2283, %s2246, [#allocation12], [#allocation13], %s2279, 0
        $region48: #{tpu_custom_call.1} parent=31 // pred_fallthru
          _
        // Predicated region
        $region49: #{tpu_custom_call.1} parent=31 // pred_check
          %p2302 = pneg %p157
        $region50: #{tpu_custom_call.1} parent=31 // pred_check_branch
          %2304 = sbr.rel (%p2302) target = $region52
        $region51: #{tpu_custom_call.1} parent=31 // pred_region
          #allocation15 [shape = 'u32[6]{0}', space=smem, size = 0x18, scoped, tag = 'DMA stride descriptor']
          %s2305 = smul.u32 16, %s32
          %2307 = vsyncadd %s2251, 0
          %s2308 = smul.addr %s31, 64
          %s2309 = sadd.s32 %s2305, %s2308
          %s2310 = smul.addr %s2309, 4
          %s2311 = scalar_lea.hbm %s4, %s2310
          %s2313 = sshll.u32 1, 14
          %s2314 = sxor.u32 4294967295, %s2313
          %s2317 = sshll.u32 7, 18
          %s2318 = sxor.u32 4294967295, %s2317
          %s2319 = sand.u32 0, %s2318
          %s2321 = sor.u32 %s2319, 0
          %s2322 = sshll.u32 %s2254, 4
          %s2323 = int_to_ptr.vmem [resolvable:$true] %s2322
          %s2324 = sshll.u32 %s2311, 4
          %s2325 = int_to_ptr.hbm [resolvable:$true] %s2324
          %2331 = sst [smem:[#allocation15]] 1024
          %s2332 = scalar_lea.smem [#allocation15], 1
          %2333 = sst [smem:[%s2332]] 2048
          %s2334 = scalar_lea.smem [#allocation15], 2
          %2335 = sst [smem:[%s2334]] 16
          %s2336 = scalar_lea.smem [#allocation15], 3
          %2337 = sst [smem:[%s2336]] 64
          %s2338 = scalar_lea.smem [#allocation15], 4
          %2339 = sst [smem:[%s2338]] 64
          %s2340 = scalar_lea.smem [#allocation15], 5
          %2341 = sst [smem:[%s2340]] 4
          %2343 = dma.general %s2323, 2048, %s2325, %s2251, [#allocation14], [#allocation15], %s2321, 0
        $region52: #{tpu_custom_call.1} parent=31 // pred_fallthru
          _
        // Predicated region
        $region53: #{tpu_custom_call.1} parent=31 // pred_check
          %p2344 = pneg %p185
        $region54: #{tpu_custom_call.1} parent=31 // pred_check_branch
          %2346 = sbr.rel (%p2344) target = $region56
        $region55: #{tpu_custom_call.1} parent=31 // pred_region
          #allocation17 [shape = 'u32[6]{0}', space=smem, size = 0x18, scoped, tag = 'DMA stride descriptor']
          %s2347 = smul.u32 16, %s32
          %2349 = vsyncadd %s2256, 0
          %s2350 = smul.addr %s31, 64
          %s2351 = sadd.s32 %s2347, %s2350
          %s2352 = smul.addr %s2351, 4
          %s2353 = scalar_lea.hbm %s5, %s2352
          %s2355 = sshll.u32 1, 14
          %s2356 = sxor.u32 4294967295, %s2355
          %s2359 = sshll.u32 7, 18
          %s2360 = sxor.u32 4294967295, %s2359
          %s2361 = sand.u32 0, %s2360
          %s2363 = sor.u32 %s2361, 0
          %s2364 = sshll.u32 %s2259, 4
          %s2365 = int_to_ptr.vmem [resolvable:$true] %s2364
          %s2366 = sshll.u32 %s2353, 4
          %s2367 = int_to_ptr.hbm [resolvable:$true] %s2366
          %2373 = sst [smem:[#allocation17]] 1024
          %s2374 = scalar_lea.smem [#allocation17], 1
          %2375 = sst [smem:[%s2374]] 2048
          %s2376 = scalar_lea.smem [#allocation17], 2
          %2377 = sst [smem:[%s2376]] 16
          %s2378 = scalar_lea.smem [#allocation17], 3
          %2379 = sst [smem:[%s2378]] 64
          %s2380 = scalar_lea.smem [#allocation17], 4
          %2381 = sst [smem:[%s2380]] 64
          %s2382 = scalar_lea.smem [#allocation17], 5
          %2383 = sst [smem:[%s2382]] 4
          %2385 = dma.general %s2365, 2048, %s2367, %s2256, [#allocation16], [#allocation17], %s2363, 0
        $region56: #{tpu_custom_call.1} parent=31 // pred_fallthru
          _
      $region32: #{tpu_custom_call.1} parent=5 // pred_fallthru
        _
      %p2386 = scmp.le.s32.totalorder 2, %s22
      // Predicated region
      $region57: #{tpu_custom_call.1} parent=5 // pred_check
        %p2387 = pneg %p2386
      $region58: #{tpu_custom_call.1} parent=5 // pred_check_branch
        %2389 = sbr.rel (%p2387) target = $region60
      $region59: #{tpu_custom_call.1} parent=5 // pred_region
        %s2390 = ssub.s32 %s22, 2
        // Predicated region
        $region61: #{tpu_custom_call.1} parent=59 // pred_check
          %p2391 = pneg %p135
        $region62: #{tpu_custom_call.1} parent=59 // pred_check_branch
          %2393 = sbr.rel (%p2391) target = $region64
        $region63: #{tpu_custom_call.1} parent=59 // pred_region
          %s2394 = sand.u32 %s120, 1
          %s2395 = scalar_lea.sflag [#allocation4], %s2394
          %s2396 = sand.u32 %s120, 1
          %s2397 = smul.addr %s2396, 128
          %s2398 = scalar_lea.vmem [#allocation8], %s2397
          %2400 = dma.done %s2395, 2048
        $region64: #{tpu_custom_call.1} parent=59 // pred_fallthru
          _
        // Predicated region
        $region65: #{tpu_custom_call.1} parent=59 // pred_check
          %p2401 = pneg %p163
        $region66: #{tpu_custom_call.1} parent=59 // pred_check_branch
          %2403 = sbr.rel (%p2401) target = $region68
        $region67: #{tpu_custom_call.1} parent=59 // pred_region
          %s2404 = sand.u32 %s28, 1
          %s2405 = scalar_lea.sflag [#allocation10], %s2404
          %s2406 = sand.u32 %s148, 1
          %s2407 = smul.addr %s2406, 128
          %s2408 = scalar_lea.vmem [#allocation9], %s2407
          %2410 = dma.done %s2405, 2048
        $region68: #{tpu_custom_call.1} parent=59 // pred_fallthru
          _
        // Predicated region
        $region69: #{tpu_custom_call.1} parent=59 // pred_check
          %p2411 = pneg %p191
        $region70: #{tpu_custom_call.1} parent=59 // pred_check_branch
          %2413 = sbr.rel (%p2411) target = $region72
        $region71: #{tpu_custom_call.1} parent=59 // pred_region
          %s2414 = sand.u32 %s28, 1
          %s2415 = scalar_lea.sflag [#allocation10], %s2414
          %s2416 = sand.u32 %s176, 1
          %s2417 = smul.addr %s2416, 128
          %s2418 = scalar_lea.vmem [#allocation11], %s2417
          %2420 = dma.done %s2415, 2048
        $region72: #{tpu_custom_call.1} parent=59 // pred_fallthru
          _
      $region60: #{tpu_custom_call.1} parent=5 // pred_fallthru
        _
    $region6: #{tpu_custom_call.1} parent=1 // loop_footer
      %s26 = sadd.s32 1, %s22
    $region7: #{tpu_custom_call.1} parent=1 // loop_footer_branch
      %21 = sbr.rel target = $region3
    $region8: #{tpu_custom_call.1} parent=1 // loop_exit
      _
    %2421 = vsyncpa [#allocation3], 1
    %s2422 = scalar_lea.sflag [#allocation3], 1
    %2423 = vsyncpa %s2422, 1
    %2424 = vsyncpa [#allocation6], 1
    %2425 = vsyncpa [#allocation4], 1
    %s2426 = scalar_lea.sflag [#allocation4], 1
    %2427 = vsyncpa %s2426, 1
    %2428 = vsyncpa [#allocation10], 1
    %s2429 = scalar_lea.sflag [#allocation10], 1
    %2430 = vsyncpa %s2429, 1

</llo_original>
